<compile_context>
chip_gen: v7x
topology: tpu7x:2x2x1
jax: 0.10.0
libtpu: 0.0.40
codegen_flags: <defaults>
</compile_context>

<pallas_src>
import functools

import jax
import jax.numpy as jnp
from jax import lax
from jax.experimental import pallas as pl
from jax.experimental.pallas import tpu as pltpu

COMPUTE_DTYPE = jnp.bfloat16          # MXU input dtype (f32 accumulation, f32 h/c state)
VMEM_LIMIT_BYTES = 48 * 1024 * 1024   # > 16/32 MiB scoped defaults, < 64 MiB v7x physical
CHUNK_VMEM_BUDGET = 8 * 1024 * 1024   # budget for double-buffered gx/y chunk blocks


# ----------------------------------------------------------------------------
# Tile-size selection helpers (pure Python, trace-time).
# ----------------------------------------------------------------------------
def _largest_divisor_leq(n, cap):
    cap = max(1, min(n, cap))
    for d in range(cap, 0, -1):
        if n % d == 0:
            return d
    return 1


def _pick_batch_tile(B, cap=256):
    """Batch tile: full batch if small, else a multiple-of-8 divisor <= cap."""
    if B <= cap:
        return B
    for d in range(cap - cap % 8, 7, -8):
        if B % d == 0:
            return d
    return B  # no clean divisor: fall back to a single full-batch tile


# ----------------------------------------------------------------------------
# Pallas kernel: one LSTMP layer, grid = (direction, batch tile, time chunk).
# h/c state is carried across time chunks in VMEM scratch.
# ----------------------------------------------------------------------------
def _lstmp_chunk_kernel(gx_ref, len_ref, whh_ref, whr_ref, y_ref,
                        h_ref, c_ref, *, unroll):
    """gx_ref : (tT, tB, 4H) bf16  precomputed x@W_ih + b, gate order i|f|o|g
       len_ref: (tB, 1)      int32 sequence lengths for this batch tile
       whh_ref: (R, 4H)      bf16  recurrent weights (i|f|o|g)
       whr_ref: (H, R)       bf16  projection weights
       y_ref  : (tT, tB, R)  out   projected hidden states (zero at padded steps)
       h_ref  : (tB, R) f32  scratch, carried across time chunks
       c_ref  : (tB, H) f32  scratch, carried across time chunks
    """
    tT = gx_ref.shape[0]
    H = c_ref.shape[1]
    t_chunk = pl.program_id(2)

    @pl.when(t_chunk == 0)
    def _():
        h_ref[...] = jnp.zeros_like(h_ref)
        c_ref[...] = jnp.zeros_like(c_ref)

    whh = whh_ref[...]
    whr = whr_ref[...]
    lens = len_ref[...]                 # (tB, 1) int32
    t_base = t_chunk * tT

    def step(t, carry):
        h, c = carry                    # (tB, R) f32, (tB, H) f32
        # Serial part only: h_{t-1} @ W_hh ; x-projection + bias precomputed (bf16).
        gates = gx_ref[t].astype(jnp.float32) + jnp.dot(
            h.astype(whh.dtype), whh, preferred_element_type=jnp.float32)
        # Gate order i|f|o|g: one sigmoid over the first 3H, one tanh over the last H.
        # TODO(synk): for real model sizes pad H to a multiple of 128 so these
        # slices fall on lane-tile boundaries (no masked lane selects in the loop).
        sig = jax.nn.sigmoid(gates[:, :3 * H])
        g_g = jnp.tanh(gates[:, 3 * H:])
        i_g = sig[:, :H]
        f_g = sig[:, H:2 * H]
        o_g = sig[:, 2 * H:]
        c_new = f_g * c + i_g * g_g                                   # (tB, H)
        h_new = jnp.dot((o_g * jnp.tanh(c_new)).astype(whr.dtype), whr,
                        preferred_element_type=jnp.float32)           # (tB, R)
        mask = (t_base + t) < lens                                    # (tB, 1) bool
        # Store into the VMEM out block; the pipeline flushes it to HBM once per chunk.
        y_ref[t] = jnp.where(mask, h_new, 0.0).astype(y_ref.dtype)
        # Carry state through padded steps (NaN-safe select).
        return jnp.where(mask, h_new, h), jnp.where(mask, c_new, c)

    h, c = lax.fori_loop(0, tT, step, (h_ref[...], c_ref[...]), unroll=unroll)
    h_ref[...] = h
    c_ref[...] = c


def lstmp_layer_fused(gx, lengths_col, w_hh_st, w_hr_st, out_dtype):
    """Run one LSTMP layer for all directions / batch tiles / time chunks.

    gx:          (D, T, B, 4H) bf16  precomputed input projection + bias
    lengths_col: (B, 1)        int32
    w_hh_st:     (D, R, 4H)    bf16
    w_hr_st:     (D, H, R)     bf16
    returns      (D, T, B, R)  out_dtype  (direction 1 is in reversed time order)
    """
    D, T, B, H4 = gx.shape
    H = H4 // 4
    R = w_hr_st.shape[-1]

    tB = _pick_batch_tile(B)
    gx_bytes = jnp.dtype(gx.dtype).itemsize
    out_bytes = jnp.dtype(out_dtype).itemsize
    per_t = 2 * tB * (gx_bytes * H4 + out_bytes * R)    # double-buffered gx + y per step
    tT = _largest_divisor_leq(T, max(1, CHUNK_VMEM_BUDGET // max(per_t, 1)))

    # Keep the unrolled gate tiles' live set within a sane slice of the 64x4KiB vreg file.
    gate_vregs = max(1, (tB * H4 * 4) // 4096)
    unroll = int(max(1, min(tT, 8, 16 // gate_vregs)))

    kernel = functools.partial(_lstmp_chunk_kernel, unroll=unroll)

    grid_spec = pltpu.PrefetchScalarGridSpec(
        num_scalar_prefetch=0,
        grid=(D, B // tB, T // tT),
        in_specs=[
            pl.BlockSpec((None, tT, tB, H4), lambda d, b, t: (d, t, b, 0)),
            pl.BlockSpec((tB, 1), lambda d, b, t: (b, 0)),
            # Weight index_maps depend only on d -> blocks stay resident across b/t.
            pl.BlockSpec((None, R, H4), lambda d, b, t: (d, 0, 0)),
            pl.BlockSpec((None, H, R), lambda d, b, t: (d, 0, 0)),
        ],
        out_specs=pl.BlockSpec((None, tT, tB, R), lambda d, b, t: (d, t, b, 0)),
        scratch_shapes=[
            pltpu.VMEM((tB, R), jnp.float32),   # carried h
            pltpu.VMEM((tB, H), jnp.float32),   # carried c
        ],
    )

    return pl.pallas_call(
        kernel,
        out_shape=jax.ShapeDtypeStruct((D, T, B, R), out_dtype),
        grid_spec=grid_spec,
        compiler_params=pltpu.CompilerParams(
            # TODO(synk): on v7x use pltpu.CORE_PARALLEL (or pl.core_map over a
            # tensorcore mesh) on the direction axis for a guaranteed 2-TC split;
            # plain "parallel" is kept here for portability to 1-TC chips.
            dimension_semantics=("parallel", "parallel", "arbitrary"),
            vmem_limit_bytes=VMEM_LIMIT_BYTES),
    )(gx, lengths_col, w_hh_st, w_hr_st)


# ----------------------------------------------------------------------------
# Glue (plain JAX): per-example reversal, weight prep, layer stacking.
# ----------------------------------------------------------------------------
def _reverse_padded(x_tm, lengths):
    """Reverse each sequence within its own length; zero padded steps.  x_tm: (T,B,D)."""
    T = x_tm.shape[0]
    t_idx = jnp.arange(T)[:, None]                  # (T, 1)
    rev_idx = lengths[None, :] - 1 - t_idx          # (T, B)
    valid = rev_idx >= 0
    rev_idx = jnp.clip(rev_idx, 0, T - 1)
    gathered = jnp.take_along_axis(x_tm, rev_idx[:, :, None], axis=0)
    return jnp.where(valid[:, :, None], gathered, 0.0)


def _reorder_ifgo_to_ifog(w):
    """Reorder gate columns from PyTorch order [i|f|g|o] to [i|f|o|g]."""
    i, f, g, o = jnp.split(w, 4, axis=-1)
    return jnp.concatenate([i, f, o, g], axis=-1)


def _prepare_layer(layer_params, compute_dtype=COMPUTE_DTYPE):
    """Stack per-direction params, reorder gate columns, cast for the MXU."""
    w_ih = jnp.stack([_reorder_ifgo_to_ifog(p[0]) for p in layer_params]
                     ).astype(compute_dtype)                     # (D, d_in, 4H)
    w_hh = jnp.stack([_reorder_ifgo_to_ifog(p[1]) for p in layer_params]
                     ).astype(compute_dtype)                     # (D, R, 4H)
    # Single bias vector == (b_ih + b_hh) combined, matching the reference math.
    b = jnp.stack([_reorder_ifgo_to_ifog(p[2]) for p in layer_params]
                  ).astype(jnp.float32)                          # (D, 4H)
    w_hr = jnp.stack([p[3] for p in layer_params]).astype(compute_dtype)  # (D, H, R)
    return w_ih, w_hh, b, w_hr


def init_lstmp_params(key, input_size, hidden_size, recurrent_size,
                      num_layers, num_directions):
    """Deterministic init (uniform +-1/sqrt(hidden_size)), PyTorch gate order [i|f|g|o]."""
    scale = 1.0 / jnp.sqrt(jnp.float32(hidden_size))
    params = []
    for layer in range(num_layers):
        d_in = input_size if layer == 0 else num_directions * recurrent_size
        layer_params = []
        for _ in range(num_directions):
            key, k1, k2, k3, k4 = jax.random.split(key, 5)
            w_ih = jax.random.uniform(k1, (d_in, 4 * hidden_size),
                                      jnp.float32, -scale, scale)
            w_hh = jax.random.uniform(k2, (recurrent_size, 4 * hidden_size),
                                      jnp.float32, -scale, scale)
            b = jax.random.uniform(k3, (4 * hidden_size,),
                                   jnp.float32, -scale, scale)
            w_hr = jax.random.uniform(k4, (hidden_size, recurrent_size),
                                      jnp.float32, -scale, scale)
            layer_params.append((w_ih, w_hh, b, w_hr))
        params.append(layer_params)
    return params


@functools.partial(jax.jit, static_argnames=("num_layers", "num_directions"))
def rnn_model_p_forward(x, lengths, params, *, num_layers, num_directions):
    """x: (B, T, input_size) batch-first; lengths: (B,) int32.
    Returns (B, T, num_directions * recurrent_size) float32."""
    x_tm = jnp.transpose(x, (1, 0, 2)).astype(COMPUTE_DTYPE)     # (T, B, D) bf16
    T, B, _ = x_tm.shape
    lengths = lengths.astype(jnp.int32)
    lengths_col = lengths.reshape(B, 1)

    layer_fwd = x_tm
    layer_bwd = _reverse_padded(x_tm, lengths) if num_directions == 2 else None

    for layer in range(num_layers):
        w_ih, w_hh, b, w_hr = _prepare_layer(params[layer])
        if num_directions == 2:
            inputs = jnp.stack([layer_fwd, layer_bwd], axis=0)   # (D, T, B, in) bf16
        else:
            inputs = layer_fwd[None]
        # Hoisted input projection: one large matmul per layer covering the whole
        # sequence and all directions; bias folded in before the bf16 downcast so
        # the kernel only adds the serial h @ W_hh term.
        gx = jnp.einsum("dtbi,dio->dtbo", inputs.astype(w_ih.dtype), w_ih,
                        preferred_element_type=jnp.float32)
        gx = (gx + b[:, None, None, :]).astype(COMPUTE_DTYPE)    # (D, T, B, 4H) bf16

        last = (layer + 1 == num_layers)
        out_dtype = jnp.float32 if last else COMPUTE_DTYPE       # bf16 inter-layer glue
        y = lstmp_layer_fused(gx, lengths_col, w_hh, w_hr, out_dtype)  # (D, T, B, R)

        if num_directions == 2:
            y_f, y_b = y[0], y[1]          # y_b is in reversed time order
            layer_fwd = jnp.concatenate(
                [y_f, _reverse_padded(y_b, lengths)], axis=-1)
            if not last:
                # Reversed-order input for the next layer's backward direction;
                # reverse(reverse(y_b)) cancels, so only y_f is re-reversed.
                layer_bwd = jnp.concatenate(
                    [_reverse_padded(y_f, lengths), y_b], axis=-1)
        else:
            layer_fwd = y[0]

    return jnp.transpose(layer_fwd, (1, 0, 2)).astype(jnp.float32)  # (B, T, D*R)


# ----------------------------------------------------------------------------
if __name__ == "__main__":
    B = 8               # batch
    T = 8               # sequence length
    input_size = 16
    hidden_size = 32
    recurrent_size = 16
    num_layers = 2
    num_directions = 2  # bidirectional=True
    # num_classes is unused by the module's forward (it returns the rnn output).

    key = jax.random.PRNGKey(0)
    k_x, k_p = jax.random.split(key)

    x = jax.random.normal(k_x, (B, T, input_size), jnp.float32)
    lengths = jnp.array([8, 7, 6, 5, 8, 3, 2, 8], dtype=jnp.int32)

    params = init_lstmp_params(k_p, input_size, hidden_size, recurrent_size,
                               num_layers, num_directions)

    out = rnn_model_p_forward(x, lengths, params,
                              num_layers=num_layers,
                              num_directions=num_directions)
    out = jax.block_until_ready(out)

    assert out.shape == (B, T, num_directions * recurrent_size), out.shape
    assert jnp.all(jnp.isfinite(out))
    # Packed-sequence semantics: padded timesteps must be exactly zero.
    pad = (jnp.arange(T)[None, :, None] >= lengths[:, None, None])
    assert float(jnp.max(jnp.where(pad, jnp.abs(out), 0.0))) == 0.0
    print("KERNEL_OK")
</pallas_src>

<mosaic_0001>
module attributes {stable_mosaic.version = 11 : i64} {
  func.func @_lstmp_chunk_kernel(%arg0: i32, %arg1: i32, %arg2: i32, %arg3: memref<1x8x8x128xbf16, #tpu.memory_space<vmem>>, %arg4: memref<8x1xi32, #tpu.memory_space<vmem>>, %arg5: memref<1x16x128xbf16, #tpu.memory_space<vmem>>, %arg6: memref<1x32x16xbf16, #tpu.memory_space<vmem>>, %arg7: memref<1x8x8x16xbf16, #tpu.memory_space<vmem>>, %arg8: memref<8x16xf32, #tpu.memory_space<vmem>>, %arg9: memref<8x32xf32, #tpu.memory_space<vmem>>) attributes {dimension_semantics = [#tpu.dimension_semantics<parallel>, #tpu.dimension_semantics<parallel>, #tpu.dimension_semantics<arbitrary>], iteration_bounds = array<i64: 2, 1, 1>, scalar_prefetch = 0 : i64, scratch_operands = 2 : i64, tpu.core_type = #tpu.core_type<tc>, window_params = [{transform_indices = @transform_0, window_bounds = array<i64: 1, 8, 8, 128>}, {transform_indices = @transform_1, window_bounds = array<i64: 8, 1>}, {transform_indices = @transform_2, window_bounds = array<i64: 1, 16, 128>}, {transform_indices = @transform_3, window_bounds = array<i64: 1, 32, 16>}, {transform_indices = @transform_4, window_bounds = array<i64: 1, 8, 8, 16>}]} {
    %c0_i32 = arith.constant 0 : i32
    %0 = arith.cmpi eq, %arg2, %c0_i32 : i32
    %1 = arith.extui %0 : i1 to i32
    %c0_i32_0 = arith.constant 0 : i32
    %2 = arith.cmpi ne, %1, %c0_i32_0 : i32
    scf.if %2 {
      %cst_97 = arith.constant 0.000000e+00 : f32
      %357 = vector.broadcast %cst_97 : f32 to vector<8x16xf32>
      %c0_98 = arith.constant 0 : index
      %c0_99 = arith.constant 0 : index
      %358 = vector.load %arg8[%c0_98, %c0_99] : memref<8x16xf32, #tpu.memory_space<vmem>>, vector<8x16xf32>
      tpu.vector_store %arg8[%c0_98, %c0_99], %357 {strides = array<i32>} : memref<8x16xf32, #tpu.memory_space<vmem>>, vector<8x16xf32>,
      %cst_100 = arith.constant 0.000000e+00 : f32
      %359 = vector.broadcast %cst_100 : f32 to vector<8x32xf32>
      %c0_101 = arith.constant 0 : index
      %c0_102 = arith.constant 0 : index
      %360 = vector.load %arg9[%c0_101, %c0_102] : memref<8x32xf32, #tpu.memory_space<vmem>>, vector<8x32xf32>
      tpu.vector_store %arg9[%c0_101, %c0_102], %359 {strides = array<i32>} : memref<8x32xf32, #tpu.memory_space<vmem>>, vector<8x32xf32>,
    } else {
    }
    %c0 = arith.constant 0 : index
    %c0_1 = arith.constant 0 : index
    %c0_2 = arith.constant 0 : index
    %3 = vector.load %arg5[%c0, %c0_1, %c0_2] : memref<1x16x128xbf16, #tpu.memory_space<vmem>>, vector<1x16x128xbf16>
    %4 = vector.shape_cast %3 : vector<1x16x128xbf16> to vector<16x128xbf16>
    %c0_3 = arith.constant 0 : index
    %c0_4 = arith.constant 0 : index
    %c0_5 = arith.constant 0 : index
    %5 = vector.load %arg6[%c0_3, %c0_4, %c0_5] : memref<1x32x16xbf16, #tpu.memory_space<vmem>>, vector<1x32x16xbf16>
    %6 = vector.shape_cast %5 : vector<1x32x16xbf16> to vector<32x16xbf16>
    %c0_6 = arith.constant 0 : index
    %c0_7 = arith.constant 0 : index
    %7 = vector.load %arg4[%c0_6, %c0_7] : memref<8x1xi32, #tpu.memory_space<vmem>>, vector<8x1xi32>
    %c8_i32 = arith.constant 8 : i32
    %8 = arith.muli %arg2, %c8_i32 : i32
    %c0_8 = arith.constant 0 : index
    %c0_9 = arith.constant 0 : index
    %9 = vector.load %arg8[%c0_8, %c0_9] : memref<8x16xf32, #tpu.memory_space<vmem>>, vector<8x16xf32>
    %c0_10 = arith.constant 0 : index
    %c0_11 = arith.constant 0 : index
    %10 = vector.load %arg9[%c0_10, %c0_11] : memref<8x32xf32, #tpu.memory_space<vmem>>, vector<8x32xf32>
    %c0_i32_12 = arith.constant 0 : i32
    %c0_13 = arith.constant 0 : index
    %11 = arith.index_cast %c0_i32_12 : i32 to index
    %c0_14 = arith.constant 0 : index
    %c0_15 = arith.constant 0 : index
    %12 = vector.load %arg3[%c0_13, %11, %c0_14, %c0_15] : memref<1x8x8x128xbf16, #tpu.memory_space<vmem>>, vector<1x1x8x128xbf16>
    %13 = vector.shape_cast %12 : vector<1x1x8x128xbf16> to vector<8x128xbf16>
    %14 = arith.extf %13 : vector<8x128xbf16> to vector<8x128xf32>
    %15 = arith.truncf %9 : vector<8x16xf32> to vector<8x16xbf16>
    %cst = arith.constant dense<0.000000e+00> : vector<8x128xf32>
    %16 = tpu.matmul %15, %4, %cst {dimension_numbers = #tpu.dot_dimension_numbers<[1], [0], [0], [1], [0, 0, 1, 1], [], []>} : vector<8x16xbf16>, vector<16x128xbf16>, vector<8x128xf32> -> vector<8x128xf32>
    %17 = arith.addf %14, %16 : vector<8x128xf32>
    %18 = vector.extract_strided_slice %17 {offsets = [0, 0], sizes = [8, 96], strides = [1, 1]} : vector<8x128xf32> to vector<8x96xf32>
    %19 = arith.negf %18 : vector<8x96xf32>
    %20 = math.exp %19 : vector<8x96xf32>
    %cst_16 = arith.constant 1.000000e+00 : f32
    %21 = vector.broadcast %cst_16 : f32 to vector<8x96xf32>
    %22 = arith.addf %21, %20 : vector<8x96xf32>
    %23 = arith.divf %21, %22 : vector<8x96xf32>
    %24 = vector.extract_strided_slice %17 {offsets = [0, 96], sizes = [8, 32], strides = [1, 1]} : vector<8x128xf32> to vector<8x32xf32>
    %25 = math.tanh %24 : vector<8x32xf32>
    %26 = vector.extract_strided_slice %23 {offsets = [0, 0], sizes = [8, 32], strides = [1, 1]} : vector<8x96xf32> to vector<8x32xf32>
    %27 = vector.extract_strided_slice %23 {offsets = [0, 32], sizes = [8, 32], strides = [1, 1]} : vector<8x96xf32> to vector<8x32xf32>
    %28 = vector.extract_strided_slice %23 {offsets = [0, 64], sizes = [8, 32], strides = [1, 1]} : vector<8x96xf32> to vector<8x32xf32>
    %29 = arith.mulf %27, %10 : vector<8x32xf32>
    %30 = arith.mulf %26, %25 : vector<8x32xf32>
    %31 = arith.addf %29, %30 : vector<8x32xf32>
    %32 = math.tanh %31 : vector<8x32xf32>
    %33 = arith.mulf %28, %32 : vector<8x32xf32>
    %34 = arith.truncf %33 : vector<8x32xf32> to vector<8x32xbf16>
    %cst_17 = arith.constant dense<0.000000e+00> : vector<8x16xf32>
    %35 = tpu.matmul %34, %6, %cst_17 {dimension_numbers = #tpu.dot_dimension_numbers<[1], [0], [0], [1], [0, 0, 1, 1], [], []>} : vector<8x32xbf16>, vector<32x16xbf16>, vector<8x16xf32> -> vector<8x16xf32>
    %36 = arith.addi %8, %c0_i32_12 : i32
    %37 = vector.broadcast %36 : i32 to vector<8x1xi32>
    %38 = arith.cmpi slt, %37, %7 : vector<8x1xi32>
    %cst_18 = arith.constant 0.000000e+00 : f32
    %39 = vector.shape_cast %38 : vector<8x1xi1> to vector<8x1xi1>
    %40 = vector.broadcast %39 : vector<8x1xi1> to vector<8x16xi1>
    %41 = vector.broadcast %cst_18 : f32 to vector<8x16xf32>
    %42 = arith.select %40, %35, %41 : vector<8x16xi1>, vector<8x16xf32>
    %43 = arith.truncf %42 : vector<8x16xf32> to vector<8x16xbf16>
    %c0_19 = arith.constant 0 : index
    %44 = arith.index_cast %c0_i32_12 : i32 to index
    %c0_20 = arith.constant 0 : index
    %c0_21 = arith.constant 0 : index
    %45 = vector.load %arg7[%c0_19, %44, %c0_20, %c0_21] : memref<1x8x8x16xbf16, #tpu.memory_space<vmem>>, vector<1x1x8x16xbf16>
    %46 = vector.shape_cast %45 : vector<1x1x8x16xbf16> to vector<8x16xbf16>
    %47 = vector.shape_cast %43 : vector<8x16xbf16> to vector<1x1x8x16xbf16>
    tpu.vector_store %arg7[%c0_19, %44, %c0_20, %c0_21], %47 {strides = array<i32>} : memref<1x8x8x16xbf16, #tpu.memory_space<vmem>>, vector<1x1x8x16xbf16>,
    %48 = vector.shape_cast %38 : vector<8x1xi1> to vector<8x1xi1>
    %49 = vector.broadcast %48 : vector<8x1xi1> to vector<8x16xi1>
    %50 = arith.select %49, %35, %9 : vector<8x16xi1>, vector<8x16xf32>
    %51 = vector.shape_cast %38 : vector<8x1xi1> to vector<8x1xi1>
    %52 = vector.broadcast %51 : vector<8x1xi1> to vector<8x32xi1>
    %53 = arith.select %52, %31, %10 : vector<8x32xi1>, vector<8x32xf32>
    %c1_i32 = arith.constant 1 : i32
    %c0_22 = arith.constant 0 : index
    %54 = arith.index_cast %c1_i32 : i32 to index
    %c0_23 = arith.constant 0 : index
    %c0_24 = arith.constant 0 : index
    %55 = vector.load %arg3[%c0_22, %54, %c0_23, %c0_24] : memref<1x8x8x128xbf16, #tpu.memory_space<vmem>>, vector<1x1x8x128xbf16>
    %56 = vector.shape_cast %55 : vector<1x1x8x128xbf16> to vector<8x128xbf16>
    %57 = arith.extf %56 : vector<8x128xbf16> to vector<8x128xf32>
    %58 = arith.truncf %50 : vector<8x16xf32> to vector<8x16xbf16>
    %cst_25 = arith.constant dense<0.000000e+00> : vector<8x128xf32>
    %59 = tpu.matmul %58, %4, %cst_25 {dimension_numbers = #tpu.dot_dimension_numbers<[1], [0], [0], [1], [0, 0, 1, 1], [], []>} : vector<8x16xbf16>, vector<16x128xbf16>, vector<8x128xf32> -> vector<8x128xf32>
    %60 = arith.addf %57, %59 : vector<8x128xf32>
    %61 = vector.extract_strided_slice %60 {offsets = [0, 0], sizes = [8, 96], strides = [1, 1]} : vector<8x128xf32> to vector<8x96xf32>
    %62 = arith.negf %61 : vector<8x96xf32>
    %63 = math.exp %62 : vector<8x96xf32>
    %cst_26 = arith.constant 1.000000e+00 : f32
    %64 = vector.broadcast %cst_26 : f32 to vector<8x96xf32>
    %65 = arith.addf %64, %63 : vector<8x96xf32>
    %66 = arith.divf %64, %65 : vector<8x96xf32>
    %67 = vector.extract_strided_slice %60 {offsets = [0, 96], sizes = [8, 32], strides = [1, 1]} : vector<8x128xf32> to vector<8x32xf32>
    %68 = math.tanh %67 : vector<8x32xf32>
    %69 = vector.extract_strided_slice %66 {offsets = [0, 0], sizes = [8, 32], strides = [1, 1]} : vector<8x96xf32> to vector<8x32xf32>
    %70 = vector.extract_strided_slice %66 {offsets = [0, 32], sizes = [8, 32], strides = [1, 1]} : vector<8x96xf32> to vector<8x32xf32>
    %71 = vector.extract_strided_slice %66 {offsets = [0, 64], sizes = [8, 32], strides = [1, 1]} : vector<8x96xf32> to vector<8x32xf32>
    %72 = arith.mulf %70, %53 : vector<8x32xf32>
    %73 = arith.mulf %69, %68 : vector<8x32xf32>
    %74 = arith.addf %72, %73 : vector<8x32xf32>
    %75 = math.tanh %74 : vector<8x32xf32>
    %76 = arith.mulf %71, %75 : vector<8x32xf32>
    %77 = arith.truncf %76 : vector<8x32xf32> to vector<8x32xbf16>
    %cst_27 = arith.constant dense<0.000000e+00> : vector<8x16xf32>
    %78 = tpu.matmul %77, %6, %cst_27 {dimension_numbers = #tpu.dot_dimension_numbers<[1], [0], [0], [1], [0, 0, 1, 1], [], []>} : vector<8x32xbf16>, vector<32x16xbf16>, vector<8x16xf32> -> vector<8x16xf32>
    %79 = arith.addi %8, %c1_i32 : i32
    %80 = vector.broadcast %79 : i32 to vector<8x1xi32>
    %81 = arith.cmpi slt, %80, %7 : vector<8x1xi32>
    %cst_28 = arith.constant 0.000000e+00 : f32
    %82 = vector.shape_cast %81 : vector<8x1xi1> to vector<8x1xi1>
    %83 = vector.broadcast %82 : vector<8x1xi1> to vector<8x16xi1>
    %84 = vector.broadcast %cst_28 : f32 to vector<8x16xf32>
    %85 = arith.select %83, %78, %84 : vector<8x16xi1>, vector<8x16xf32>
    %86 = arith.truncf %85 : vector<8x16xf32> to vector<8x16xbf16>
    %c0_29 = arith.constant 0 : index
    %87 = arith.index_cast %c1_i32 : i32 to index
    %c0_30 = arith.constant 0 : index
    %c0_31 = arith.constant 0 : index
    %88 = vector.load %arg7[%c0_29, %87, %c0_30, %c0_31] : memref<1x8x8x16xbf16, #tpu.memory_space<vmem>>, vector<1x1x8x16xbf16>
    %89 = vector.shape_cast %88 : vector<1x1x8x16xbf16> to vector<8x16xbf16>
    %90 = vector.shape_cast %86 : vector<8x16xbf16> to vector<1x1x8x16xbf16>
    tpu.vector_store %arg7[%c0_29, %87, %c0_30, %c0_31], %90 {strides = array<i32>} : memref<1x8x8x16xbf16, #tpu.memory_space<vmem>>, vector<1x1x8x16xbf16>,
    %91 = vector.shape_cast %81 : vector<8x1xi1> to vector<8x1xi1>
    %92 = vector.broadcast %91 : vector<8x1xi1> to vector<8x16xi1>
    %93 = arith.select %92, %78, %50 : vector<8x16xi1>, vector<8x16xf32>
    %94 = vector.shape_cast %81 : vector<8x1xi1> to vector<8x1xi1>
    %95 = vector.broadcast %94 : vector<8x1xi1> to vector<8x32xi1>
    %96 = arith.select %95, %74, %53 : vector<8x32xi1>, vector<8x32xf32>
    %c2_i32 = arith.constant 2 : i32
    %c0_32 = arith.constant 0 : index
    %97 = arith.index_cast %c2_i32 : i32 to index
    %c0_33 = arith.constant 0 : index
    %c0_34 = arith.constant 0 : index
    %98 = vector.load %arg3[%c0_32, %97, %c0_33, %c0_34] : memref<1x8x8x128xbf16, #tpu.memory_space<vmem>>, vector<1x1x8x128xbf16>
    %99 = vector.shape_cast %98 : vector<1x1x8x128xbf16> to vector<8x128xbf16>
    %100 = arith.extf %99 : vector<8x128xbf16> to vector<8x128xf32>
    %101 = arith.truncf %93 : vector<8x16xf32> to vector<8x16xbf16>
    %cst_35 = arith.constant dense<0.000000e+00> : vector<8x128xf32>
    %102 = tpu.matmul %101, %4, %cst_35 {dimension_numbers = #tpu.dot_dimension_numbers<[1], [0], [0], [1], [0, 0, 1, 1], [], []>} : vector<8x16xbf16>, vector<16x128xbf16>, vector<8x128xf32> -> vector<8x128xf32>
    %103 = arith.addf %100, %102 : vector<8x128xf32>
    %104 = vector.extract_strided_slice %103 {offsets = [0, 0], sizes = [8, 96], strides = [1, 1]} : vector<8x128xf32> to vector<8x96xf32>
    %105 = arith.negf %104 : vector<8x96xf32>
    %106 = math.exp %105 : vector<8x96xf32>
    %cst_36 = arith.constant 1.000000e+00 : f32
    %107 = vector.broadcast %cst_36 : f32 to vector<8x96xf32>
    %108 = arith.addf %107, %106 : vector<8x96xf32>
    %109 = arith.divf %107, %108 : vector<8x96xf32>
    %110 = vector.extract_strided_slice %103 {offsets = [0, 96], sizes = [8, 32], strides = [1, 1]} : vector<8x128xf32> to vector<8x32xf32>
    %111 = math.tanh %110 : vector<8x32xf32>
    %112 = vector.extract_strided_slice %109 {offsets = [0, 0], sizes = [8, 32], strides = [1, 1]} : vector<8x96xf32> to vector<8x32xf32>
    %113 = vector.extract_strided_slice %109 {offsets = [0, 32], sizes = [8, 32], strides = [1, 1]} : vector<8x96xf32> to vector<8x32xf32>
    %114 = vector.extract_strided_slice %109 {offsets = [0, 64], sizes = [8, 32], strides = [1, 1]} : vector<8x96xf32> to vector<8x32xf32>
    %115 = arith.mulf %113, %96 : vector<8x32xf32>
    %116 = arith.mulf %112, %111 : vector<8x32xf32>
    %117 = arith.addf %115, %116 : vector<8x32xf32>
    %118 = math.tanh %117 : vector<8x32xf32>
    %119 = arith.mulf %114, %118 : vector<8x32xf32>
    %120 = arith.truncf %119 : vector<8x32xf32> to vector<8x32xbf16>
    %cst_37 = arith.constant dense<0.000000e+00> : vector<8x16xf32>
    %121 = tpu.matmul %120, %6, %cst_37 {dimension_numbers = #tpu.dot_dimension_numbers<[1], [0], [0], [1], [0, 0, 1, 1], [], []>} : vector<8x32xbf16>, vector<32x16xbf16>, vector<8x16xf32> -> vector<8x16xf32>
    %122 = arith.addi %8, %c2_i32 : i32
    %123 = vector.broadcast %122 : i32 to vector<8x1xi32>
    %124 = arith.cmpi slt, %123, %7 : vector<8x1xi32>
    %cst_38 = arith.constant 0.000000e+00 : f32
    %125 = vector.shape_cast %124 : vector<8x1xi1> to vector<8x1xi1>
    %126 = vector.broadcast %125 : vector<8x1xi1> to vector<8x16xi1>
    %127 = vector.broadcast %cst_38 : f32 to vector<8x16xf32>
    %128 = arith.select %126, %121, %127 : vector<8x16xi1>, vector<8x16xf32>
    %129 = arith.truncf %128 : vector<8x16xf32> to vector<8x16xbf16>
    %c0_39 = arith.constant 0 : index
    %130 = arith.index_cast %c2_i32 : i32 to index
    %c0_40 = arith.constant 0 : index
    %c0_41 = arith.constant 0 : index
    %131 = vector.load %arg7[%c0_39, %130, %c0_40, %c0_41] : memref<1x8x8x16xbf16, #tpu.memory_space<vmem>>, vector<1x1x8x16xbf16>
    %132 = vector.shape_cast %131 : vector<1x1x8x16xbf16> to vector<8x16xbf16>
    %133 = vector.shape_cast %129 : vector<8x16xbf16> to vector<1x1x8x16xbf16>
    tpu.vector_store %arg7[%c0_39, %130, %c0_40, %c0_41], %133 {strides = array<i32>} : memref<1x8x8x16xbf16, #tpu.memory_space<vmem>>, vector<1x1x8x16xbf16>,
    %134 = vector.shape_cast %124 : vector<8x1xi1> to vector<8x1xi1>
    %135 = vector.broadcast %134 : vector<8x1xi1> to vector<8x16xi1>
    %136 = arith.select %135, %121, %93 : vector<8x16xi1>, vector<8x16xf32>
    %137 = vector.shape_cast %124 : vector<8x1xi1> to vector<8x1xi1>
    %138 = vector.broadcast %137 : vector<8x1xi1> to vector<8x32xi1>
    %139 = arith.select %138, %117, %96 : vector<8x32xi1>, vector<8x32xf32>
    %c3_i32 = arith.constant 3 : i32
    %c0_42 = arith.constant 0 : index
    %140 = arith.index_cast %c3_i32 : i32 to index
    %c0_43 = arith.constant 0 : index
    %c0_44 = arith.constant 0 : index
    %141 = vector.load %arg3[%c0_42, %140, %c0_43, %c0_44] : memref<1x8x8x128xbf16, #tpu.memory_space<vmem>>, vector<1x1x8x128xbf16>
    %142 = vector.shape_cast %141 : vector<1x1x8x128xbf16> to vector<8x128xbf16>
    %143 = arith.extf %142 : vector<8x128xbf16> to vector<8x128xf32>
    %144 = arith.truncf %136 : vector<8x16xf32> to vector<8x16xbf16>
    %cst_45 = arith.constant dense<0.000000e+00> : vector<8x128xf32>
    %145 = tpu.matmul %144, %4, %cst_45 {dimension_numbers = #tpu.dot_dimension_numbers<[1], [0], [0], [1], [0, 0, 1, 1], [], []>} : vector<8x16xbf16>, vector<16x128xbf16>, vector<8x128xf32> -> vector<8x128xf32>
    %146 = arith.addf %143, %145 : vector<8x128xf32>
    %147 = vector.extract_strided_slice %146 {offsets = [0, 0], sizes = [8, 96], strides = [1, 1]} : vector<8x128xf32> to vector<8x96xf32>
    %148 = arith.negf %147 : vector<8x96xf32>
    %149 = math.exp %148 : vector<8x96xf32>
    %cst_46 = arith.constant 1.000000e+00 : f32
    %150 = vector.broadcast %cst_46 : f32 to vector<8x96xf32>
    %151 = arith.addf %150, %149 : vector<8x96xf32>
    %152 = arith.divf %150, %151 : vector<8x96xf32>
    %153 = vector.extract_strided_slice %146 {offsets = [0, 96], sizes = [8, 32], strides = [1, 1]} : vector<8x128xf32> to vector<8x32xf32>
    %154 = math.tanh %153 : vector<8x32xf32>
    %155 = vector.extract_strided_slice %152 {offsets = [0, 0], sizes = [8, 32], strides = [1, 1]} : vector<8x96xf32> to vector<8x32xf32>
    %156 = vector.extract_strided_slice %152 {offsets = [0, 32], sizes = [8, 32], strides = [1, 1]} : vector<8x96xf32> to vector<8x32xf32>
    %157 = vector.extract_strided_slice %152 {offsets = [0, 64], sizes = [8, 32], strides = [1, 1]} : vector<8x96xf32> to vector<8x32xf32>
    %158 = arith.mulf %156, %139 : vector<8x32xf32>
    %159 = arith.mulf %155, %154 : vector<8x32xf32>
    %160 = arith.addf %158, %159 : vector<8x32xf32>
    %161 = math.tanh %160 : vector<8x32xf32>
    %162 = arith.mulf %157, %161 : vector<8x32xf32>
    %163 = arith.truncf %162 : vector<8x32xf32> to vector<8x32xbf16>
    %cst_47 = arith.constant dense<0.000000e+00> : vector<8x16xf32>
    %164 = tpu.matmul %163, %6, %cst_47 {dimension_numbers = #tpu.dot_dimension_numbers<[1], [0], [0], [1], [0, 0, 1, 1], [], []>} : vector<8x32xbf16>, vector<32x16xbf16>, vector<8x16xf32> -> vector<8x16xf32>
    %165 = arith.addi %8, %c3_i32 : i32
    %166 = vector.broadcast %165 : i32 to vector<8x1xi32>
    %167 = arith.cmpi slt, %166, %7 : vector<8x1xi32>
    %cst_48 = arith.constant 0.000000e+00 : f32
    %168 = vector.shape_cast %167 : vector<8x1xi1> to vector<8x1xi1>
    %169 = vector.broadcast %168 : vector<8x1xi1> to vector<8x16xi1>
    %170 = vector.broadcast %cst_48 : f32 to vector<8x16xf32>
    %171 = arith.select %169, %164, %170 : vector<8x16xi1>, vector<8x16xf32>
    %172 = arith.truncf %171 : vector<8x16xf32> to vector<8x16xbf16>
    %c0_49 = arith.constant 0 : index
    %173 = arith.index_cast %c3_i32 : i32 to index
    %c0_50 = arith.constant 0 : index
    %c0_51 = arith.constant 0 : index
    %174 = vector.load %arg7[%c0_49, %173, %c0_50, %c0_51] : memref<1x8x8x16xbf16, #tpu.memory_space<vmem>>, vector<1x1x8x16xbf16>
    %175 = vector.shape_cast %174 : vector<1x1x8x16xbf16> to vector<8x16xbf16>
    %176 = vector.shape_cast %172 : vector<8x16xbf16> to vector<1x1x8x16xbf16>
    tpu.vector_store %arg7[%c0_49, %173, %c0_50, %c0_51], %176 {strides = array<i32>} : memref<1x8x8x16xbf16, #tpu.memory_space<vmem>>, vector<1x1x8x16xbf16>,
    %177 = vector.shape_cast %167 : vector<8x1xi1> to vector<8x1xi1>
    %178 = vector.broadcast %177 : vector<8x1xi1> to vector<8x16xi1>
    %179 = arith.select %178, %164, %136 : vector<8x16xi1>, vector<8x16xf32>
    %180 = vector.shape_cast %167 : vector<8x1xi1> to vector<8x1xi1>
    %181 = vector.broadcast %180 : vector<8x1xi1> to vector<8x32xi1>
    %182 = arith.select %181, %160, %139 : vector<8x32xi1>, vector<8x32xf32>
    %c4_i32 = arith.constant 4 : i32
    %c0_52 = arith.constant 0 : index
    %183 = arith.index_cast %c4_i32 : i32 to index
    %c0_53 = arith.constant 0 : index
    %c0_54 = arith.constant 0 : index
    %184 = vector.load %arg3[%c0_52, %183, %c0_53, %c0_54] : memref<1x8x8x128xbf16, #tpu.memory_space<vmem>>, vector<1x1x8x128xbf16>
    %185 = vector.shape_cast %184 : vector<1x1x8x128xbf16> to vector<8x128xbf16>
    %186 = arith.extf %185 : vector<8x128xbf16> to vector<8x128xf32>
    %187 = arith.truncf %179 : vector<8x16xf32> to vector<8x16xbf16>
    %cst_55 = arith.constant dense<0.000000e+00> : vector<8x128xf32>
    %188 = tpu.matmul %187, %4, %cst_55 {dimension_numbers = #tpu.dot_dimension_numbers<[1], [0], [0], [1], [0, 0, 1, 1], [], []>} : vector<8x16xbf16>, vector<16x128xbf16>, vector<8x128xf32> -> vector<8x128xf32>
    %189 = arith.addf %186, %188 : vector<8x128xf32>
    %190 = vector.extract_strided_slice %189 {offsets = [0, 0], sizes = [8, 96], strides = [1, 1]} : vector<8x128xf32> to vector<8x96xf32>
    %191 = arith.negf %190 : vector<8x96xf32>
    %192 = math.exp %191 : vector<8x96xf32>
    %cst_56 = arith.constant 1.000000e+00 : f32
    %193 = vector.broadcast %cst_56 : f32 to vector<8x96xf32>
    %194 = arith.addf %193, %192 : vector<8x96xf32>
    %195 = arith.divf %193, %194 : vector<8x96xf32>
    %196 = vector.extract_strided_slice %189 {offsets = [0, 96], sizes = [8, 32], strides = [1, 1]} : vector<8x128xf32> to vector<8x32xf32>
    %197 = math.tanh %196 : vector<8x32xf32>
    %198 = vector.extract_strided_slice %195 {offsets = [0, 0], sizes = [8, 32], strides = [1, 1]} : vector<8x96xf32> to vector<8x32xf32>
    %199 = vector.extract_strided_slice %195 {offsets = [0, 32], sizes = [8, 32], strides = [1, 1]} : vector<8x96xf32> to vector<8x32xf32>
    %200 = vector.extract_strided_slice %195 {offsets = [0, 64], sizes = [8, 32], strides = [1, 1]} : vector<8x96xf32> to vector<8x32xf32>
    %201 = arith.mulf %199, %182 : vector<8x32xf32>
    %202 = arith.mulf %198, %197 : vector<8x32xf32>
    %203 = arith.addf %201, %202 : vector<8x32xf32>
    %204 = math.tanh %203 : vector<8x32xf32>
    %205 = arith.mulf %200, %204 : vector<8x32xf32>
    %206 = arith.truncf %205 : vector<8x32xf32> to vector<8x32xbf16>
    %cst_57 = arith.constant dense<0.000000e+00> : vector<8x16xf32>
    %207 = tpu.matmul %206, %6, %cst_57 {dimension_numbers = #tpu.dot_dimension_numbers<[1], [0], [0], [1], [0, 0, 1, 1], [], []>} : vector<8x32xbf16>, vector<32x16xbf16>, vector<8x16xf32> -> vector<8x16xf32>
    %208 = arith.addi %8, %c4_i32 : i32
    %209 = vector.broadcast %208 : i32 to vector<8x1xi32>
    %210 = arith.cmpi slt, %209, %7 : vector<8x1xi32>
    %cst_58 = arith.constant 0.000000e+00 : f32
    %211 = vector.shape_cast %210 : vector<8x1xi1> to vector<8x1xi1>
    %212 = vector.broadcast %211 : vector<8x1xi1> to vector<8x16xi1>
    %213 = vector.broadcast %cst_58 : f32 to vector<8x16xf32>
    %214 = arith.select %212, %207, %213 : vector<8x16xi1>, vector<8x16xf32>
    %215 = arith.truncf %214 : vector<8x16xf32> to vector<8x16xbf16>
    %c0_59 = arith.constant 0 : index
    %216 = arith.index_cast %c4_i32 : i32 to index
    %c0_60 = arith.constant 0 : index
    %c0_61 = arith.constant 0 : index
    %217 = vector.load %arg7[%c0_59, %216, %c0_60, %c0_61] : memref<1x8x8x16xbf16, #tpu.memory_space<vmem>>, vector<1x1x8x16xbf16>
    %218 = vector.shape_cast %217 : vector<1x1x8x16xbf16> to vector<8x16xbf16>
    %219 = vector.shape_cast %215 : vector<8x16xbf16> to vector<1x1x8x16xbf16>
    tpu.vector_store %arg7[%c0_59, %216, %c0_60, %c0_61], %219 {strides = array<i32>} : memref<1x8x8x16xbf16, #tpu.memory_space<vmem>>, vector<1x1x8x16xbf16>,
    %220 = vector.shape_cast %210 : vector<8x1xi1> to vector<8x1xi1>
    %221 = vector.broadcast %220 : vector<8x1xi1> to vector<8x16xi1>
    %222 = arith.select %221, %207, %179 : vector<8x16xi1>, vector<8x16xf32>
    %223 = vector.shape_cast %210 : vector<8x1xi1> to vector<8x1xi1>
    %224 = vector.broadcast %223 : vector<8x1xi1> to vector<8x32xi1>
    %225 = arith.select %224, %203, %182 : vector<8x32xi1>, vector<8x32xf32>
    %c5_i32 = arith.constant 5 : i32
    %c0_62 = arith.constant 0 : index
    %226 = arith.index_cast %c5_i32 : i32 to index
    %c0_63 = arith.constant 0 : index
    %c0_64 = arith.constant 0 : index
    %227 = vector.load %arg3[%c0_62, %226, %c0_63, %c0_64] : memref<1x8x8x128xbf16, #tpu.memory_space<vmem>>, vector<1x1x8x128xbf16>
    %228 = vector.shape_cast %227 : vector<1x1x8x128xbf16> to vector<8x128xbf16>
    %229 = arith.extf %228 : vector<8x128xbf16> to vector<8x128xf32>
    %230 = arith.truncf %222 : vector<8x16xf32> to vector<8x16xbf16>
    %cst_65 = arith.constant dense<0.000000e+00> : vector<8x128xf32>
    %231 = tpu.matmul %230, %4, %cst_65 {dimension_numbers = #tpu.dot_dimension_numbers<[1], [0], [0], [1], [0, 0, 1, 1], [], []>} : vector<8x16xbf16>, vector<16x128xbf16>, vector<8x128xf32> -> vector<8x128xf32>
    %232 = arith.addf %229, %231 : vector<8x128xf32>
    %233 = vector.extract_strided_slice %232 {offsets = [0, 0], sizes = [8, 96], strides = [1, 1]} : vector<8x128xf32> to vector<8x96xf32>
    %234 = arith.negf %233 : vector<8x96xf32>
    %235 = math.exp %234 : vector<8x96xf32>
    %cst_66 = arith.constant 1.000000e+00 : f32
    %236 = vector.broadcast %cst_66 : f32 to vector<8x96xf32>
    %237 = arith.addf %236, %235 : vector<8x96xf32>
    %238 = arith.divf %236, %237 : vector<8x96xf32>
    %239 = vector.extract_strided_slice %232 {offsets = [0, 96], sizes = [8, 32], strides = [1, 1]} : vector<8x128xf32> to vector<8x32xf32>
    %240 = math.tanh %239 : vector<8x32xf32>
    %241 = vector.extract_strided_slice %238 {offsets = [0, 0], sizes = [8, 32], strides = [1, 1]} : vector<8x96xf32> to vector<8x32xf32>
    %242 = vector.extract_strided_slice %238 {offsets = [0, 32], sizes = [8, 32], strides = [1, 1]} : vector<8x96xf32> to vector<8x32xf32>
    %243 = vector.extract_strided_slice %238 {offsets = [0, 64], sizes = [8, 32], strides = [1, 1]} : vector<8x96xf32> to vector<8x32xf32>
    %244 = arith.mulf %242, %225 : vector<8x32xf32>
    %245 = arith.mulf %241, %240 : vector<8x32xf32>
    %246 = arith.addf %244, %245 : vector<8x32xf32>
    %247 = math.tanh %246 : vector<8x32xf32>
    %248 = arith.mulf %243, %247 : vector<8x32xf32>
    %249 = arith.truncf %248 : vector<8x32xf32> to vector<8x32xbf16>
    %cst_67 = arith.constant dense<0.000000e+00> : vector<8x16xf32>
    %250 = tpu.matmul %249, %6, %cst_67 {dimension_numbers = #tpu.dot_dimension_numbers<[1], [0], [0], [1], [0, 0, 1, 1], [], []>} : vector<8x32xbf16>, vector<32x16xbf16>, vector<8x16xf32> -> vector<8x16xf32>
    %251 = arith.addi %8, %c5_i32 : i32
    %252 = vector.broadcast %251 : i32 to vector<8x1xi32>
    %253 = arith.cmpi slt, %252, %7 : vector<8x1xi32>
    %cst_68 = arith.constant 0.000000e+00 : f32
    %254 = vector.shape_cast %253 : vector<8x1xi1> to vector<8x1xi1>
    %255 = vector.broadcast %254 : vector<8x1xi1> to vector<8x16xi1>
    %256 = vector.broadcast %cst_68 : f32 to vector<8x16xf32>
    %257 = arith.select %255, %250, %256 : vector<8x16xi1>, vector<8x16xf32>
    %258 = arith.truncf %257 : vector<8x16xf32> to vector<8x16xbf16>
    %c0_69 = arith.constant 0 : index
    %259 = arith.index_cast %c5_i32 : i32 to index
    %c0_70 = arith.constant 0 : index
    %c0_71 = arith.constant 0 : index
    %260 = vector.load %arg7[%c0_69, %259, %c0_70, %c0_71] : memref<1x8x8x16xbf16, #tpu.memory_space<vmem>>, vector<1x1x8x16xbf16>
    %261 = vector.shape_cast %260 : vector<1x1x8x16xbf16> to vector<8x16xbf16>
    %262 = vector.shape_cast %258 : vector<8x16xbf16> to vector<1x1x8x16xbf16>
    tpu.vector_store %arg7[%c0_69, %259, %c0_70, %c0_71], %262 {strides = array<i32>} : memref<1x8x8x16xbf16, #tpu.memory_space<vmem>>, vector<1x1x8x16xbf16>,
    %263 = vector.shape_cast %253 : vector<8x1xi1> to vector<8x1xi1>
    %264 = vector.broadcast %263 : vector<8x1xi1> to vector<8x16xi1>
    %265 = arith.select %264, %250, %222 : vector<8x16xi1>, vector<8x16xf32>
    %266 = vector.shape_cast %253 : vector<8x1xi1> to vector<8x1xi1>
    %267 = vector.broadcast %266 : vector<8x1xi1> to vector<8x32xi1>
    %268 = arith.select %267, %246, %225 : vector<8x32xi1>, vector<8x32xf32>
    %c6_i32 = arith.constant 6 : i32
    %c0_72 = arith.constant 0 : index
    %269 = arith.index_cast %c6_i32 : i32 to index
    %c0_73 = arith.constant 0 : index
    %c0_74 = arith.constant 0 : index
    %270 = vector.load %arg3[%c0_72, %269, %c0_73, %c0_74] : memref<1x8x8x128xbf16, #tpu.memory_space<vmem>>, vector<1x1x8x128xbf16>
    %271 = vector.shape_cast %270 : vector<1x1x8x128xbf16> to vector<8x128xbf16>
    %272 = arith.extf %271 : vector<8x128xbf16> to vector<8x128xf32>
    %273 = arith.truncf %265 : vector<8x16xf32> to vector<8x16xbf16>
    %cst_75 = arith.constant dense<0.000000e+00> : vector<8x128xf32>
    %274 = tpu.matmul %273, %4, %cst_75 {dimension_numbers = #tpu.dot_dimension_numbers<[1], [0], [0], [1], [0, 0, 1, 1], [], []>} : vector<8x16xbf16>, vector<16x128xbf16>, vector<8x128xf32> -> vector<8x128xf32>
    %275 = arith.addf %272, %274 : vector<8x128xf32>
    %276 = vector.extract_strided_slice %275 {offsets = [0, 0], sizes = [8, 96], strides = [1, 1]} : vector<8x128xf32> to vector<8x96xf32>
    %277 = arith.negf %276 : vector<8x96xf32>
    %278 = math.exp %277 : vector<8x96xf32>
    %cst_76 = arith.constant 1.000000e+00 : f32
    %279 = vector.broadcast %cst_76 : f32 to vector<8x96xf32>
    %280 = arith.addf %279, %278 : vector<8x96xf32>
    %281 = arith.divf %279, %280 : vector<8x96xf32>
    %282 = vector.extract_strided_slice %275 {offsets = [0, 96], sizes = [8, 32], strides = [1, 1]} : vector<8x128xf32> to vector<8x32xf32>
    %283 = math.tanh %282 : vector<8x32xf32>
    %284 = vector.extract_strided_slice %281 {offsets = [0, 0], sizes = [8, 32], strides = [1, 1]} : vector<8x96xf32> to vector<8x32xf32>
    %285 = vector.extract_strided_slice %281 {offsets = [0, 32], sizes = [8, 32], strides = [1, 1]} : vector<8x96xf32> to vector<8x32xf32>
    %286 = vector.extract_strided_slice %281 {offsets = [0, 64], sizes = [8, 32], strides = [1, 1]} : vector<8x96xf32> to vector<8x32xf32>
    %287 = arith.mulf %285, %268 : vector<8x32xf32>
    %288 = arith.mulf %284, %283 : vector<8x32xf32>
    %289 = arith.addf %287, %288 : vector<8x32xf32>
    %290 = math.tanh %289 : vector<8x32xf32>
    %291 = arith.mulf %286, %290 : vector<8x32xf32>
    %292 = arith.truncf %291 : vector<8x32xf32> to vector<8x32xbf16>
    %cst_77 = arith.constant dense<0.000000e+00> : vector<8x16xf32>
    %293 = tpu.matmul %292, %6, %cst_77 {dimension_numbers = #tpu.dot_dimension_numbers<[1], [0], [0], [1], [0, 0, 1, 1], [], []>} : vector<8x32xbf16>, vector<32x16xbf16>, vector<8x16xf32> -> vector<8x16xf32>
    %294 = arith.addi %8, %c6_i32 : i32
    %295 = vector.broadcast %294 : i32 to vector<8x1xi32>
    %296 = arith.cmpi slt, %295, %7 : vector<8x1xi32>
    %cst_78 = arith.constant 0.000000e+00 : f32
    %297 = vector.shape_cast %296 : vector<8x1xi1> to vector<8x1xi1>
    %298 = vector.broadcast %297 : vector<8x1xi1> to vector<8x16xi1>
    %299 = vector.broadcast %cst_78 : f32 to vector<8x16xf32>
    %300 = arith.select %298, %293, %299 : vector<8x16xi1>, vector<8x16xf32>
    %301 = arith.truncf %300 : vector<8x16xf32> to vector<8x16xbf16>
    %c0_79 = arith.constant 0 : index
    %302 = arith.index_cast %c6_i32 : i32 to index
    %c0_80 = arith.constant 0 : index
    %c0_81 = arith.constant 0 : index
    %303 = vector.load %arg7[%c0_79, %302, %c0_80, %c0_81] : memref<1x8x8x16xbf16, #tpu.memory_space<vmem>>, vector<1x1x8x16xbf16>
    %304 = vector.shape_cast %303 : vector<1x1x8x16xbf16> to vector<8x16xbf16>
    %305 = vector.shape_cast %301 : vector<8x16xbf16> to vector<1x1x8x16xbf16>
    tpu.vector_store %arg7[%c0_79, %302, %c0_80, %c0_81], %305 {strides = array<i32>} : memref<1x8x8x16xbf16, #tpu.memory_space<vmem>>, vector<1x1x8x16xbf16>,
    %306 = vector.shape_cast %296 : vector<8x1xi1> to vector<8x1xi1>
    %307 = vector.broadcast %306 : vector<8x1xi1> to vector<8x16xi1>
    %308 = arith.select %307, %293, %265 : vector<8x16xi1>, vector<8x16xf32>
    %309 = vector.shape_cast %296 : vector<8x1xi1> to vector<8x1xi1>
    %310 = vector.broadcast %309 : vector<8x1xi1> to vector<8x32xi1>
    %311 = arith.select %310, %289, %268 : vector<8x32xi1>, vector<8x32xf32>
    %c7_i32 = arith.constant 7 : i32
    %c0_82 = arith.constant 0 : index
    %312 = arith.index_cast %c7_i32 : i32 to index
    %c0_83 = arith.constant 0 : index
    %c0_84 = arith.constant 0 : index
    %313 = vector.load %arg3[%c0_82, %312, %c0_83, %c0_84] : memref<1x8x8x128xbf16, #tpu.memory_space<vmem>>, vector<1x1x8x128xbf16>
    %314 = vector.shape_cast %313 : vector<1x1x8x128xbf16> to vector<8x128xbf16>
    %315 = arith.extf %314 : vector<8x128xbf16> to vector<8x128xf32>
    %316 = arith.truncf %308 : vector<8x16xf32> to vector<8x16xbf16>
    %cst_85 = arith.constant dense<0.000000e+00> : vector<8x128xf32>
    %317 = tpu.matmul %316, %4, %cst_85 {dimension_numbers = #tpu.dot_dimension_numbers<[1], [0], [0], [1], [0, 0, 1, 1], [], []>} : vector<8x16xbf16>, vector<16x128xbf16>, vector<8x128xf32> -> vector<8x128xf32>
    %318 = arith.addf %315, %317 : vector<8x128xf32>
    %319 = vector.extract_strided_slice %318 {offsets = [0, 0], sizes = [8, 96], strides = [1, 1]} : vector<8x128xf32> to vector<8x96xf32>
    %320 = arith.negf %319 : vector<8x96xf32>
    %321 = math.exp %320 : vector<8x96xf32>
    %cst_86 = arith.constant 1.000000e+00 : f32
    %322 = vector.broadcast %cst_86 : f32 to vector<8x96xf32>
    %323 = arith.addf %322, %321 : vector<8x96xf32>
    %324 = arith.divf %322, %323 : vector<8x96xf32>
    %325 = vector.extract_strided_slice %318 {offsets = [0, 96], sizes = [8, 32], strides = [1, 1]} : vector<8x128xf32> to vector<8x32xf32>
    %326 = math.tanh %325 : vector<8x32xf32>
    %327 = vector.extract_strided_slice %324 {offsets = [0, 0], sizes = [8, 32], strides = [1, 1]} : vector<8x96xf32> to vector<8x32xf32>
    %328 = vector.extract_strided_slice %324 {offsets = [0, 32], sizes = [8, 32], strides = [1, 1]} : vector<8x96xf32> to vector<8x32xf32>
    %329 = vector.extract_strided_slice %324 {offsets = [0, 64], sizes = [8, 32], strides = [1, 1]} : vector<8x96xf32> to vector<8x32xf32>
    %330 = arith.mulf %328, %311 : vector<8x32xf32>
    %331 = arith.mulf %327, %326 : vector<8x32xf32>
    %332 = arith.addf %330, %331 : vector<8x32xf32>
    %333 = math.tanh %332 : vector<8x32xf32>
    %334 = arith.mulf %329, %333 : vector<8x32xf32>
    %335 = arith.truncf %334 : vector<8x32xf32> to vector<8x32xbf16>
    %cst_87 = arith.constant dense<0.000000e+00> : vector<8x16xf32>
    %336 = tpu.matmul %335, %6, %cst_87 {dimension_numbers = #tpu.dot_dimension_numbers<[1], [0], [0], [1], [0, 0, 1, 1], [], []>} : vector<8x32xbf16>, vector<32x16xbf16>, vector<8x16xf32> -> vector<8x16xf32>
    %337 = arith.addi %8, %c7_i32 : i32
    %338 = vector.broadcast %337 : i32 to vector<8x1xi32>
    %339 = arith.cmpi slt, %338, %7 : vector<8x1xi32>
    %cst_88 = arith.constant 0.000000e+00 : f32
    %340 = vector.shape_cast %339 : vector<8x1xi1> to vector<8x1xi1>
    %341 = vector.broadcast %340 : vector<8x1xi1> to vector<8x16xi1>
    %342 = vector.broadcast %cst_88 : f32 to vector<8x16xf32>
    %343 = arith.select %341, %336, %342 : vector<8x16xi1>, vector<8x16xf32>
    %344 = arith.truncf %343 : vector<8x16xf32> to vector<8x16xbf16>
    %c0_89 = arith.constant 0 : index
    %345 = arith.index_cast %c7_i32 : i32 to index
    %c0_90 = arith.constant 0 : index
    %c0_91 = arith.constant 0 : index
    %346 = vector.load %arg7[%c0_89, %345, %c0_90, %c0_91] : memref<1x8x8x16xbf16, #tpu.memory_space<vmem>>, vector<1x1x8x16xbf16>
    %347 = vector.shape_cast %346 : vector<1x1x8x16xbf16> to vector<8x16xbf16>
    %348 = vector.shape_cast %344 : vector<8x16xbf16> to vector<1x1x8x16xbf16>
    tpu.vector_store %arg7[%c0_89, %345, %c0_90, %c0_91], %348 {strides = array<i32>} : memref<1x8x8x16xbf16, #tpu.memory_space<vmem>>, vector<1x1x8x16xbf16>,
    %349 = vector.shape_cast %339 : vector<8x1xi1> to vector<8x1xi1>
    %350 = vector.broadcast %349 : vector<8x1xi1> to vector<8x16xi1>
    %351 = arith.select %350, %336, %308 : vector<8x16xi1>, vector<8x16xf32>
    %352 = vector.shape_cast %339 : vector<8x1xi1> to vector<8x1xi1>
    %353 = vector.broadcast %352 : vector<8x1xi1> to vector<8x32xi1>
    %354 = arith.select %353, %332, %311 : vector<8x32xi1>, vector<8x32xf32>
    %c8_i32_92 = arith.constant 8 : i32
    %c0_93 = arith.constant 0 : index
    %c0_94 = arith.constant 0 : index
    %355 = vector.load %arg8[%c0_93, %c0_94] : memref<8x16xf32, #tpu.memory_space<vmem>>, vector<8x16xf32>
    tpu.vector_store %arg8[%c0_93, %c0_94], %351 {strides = array<i32>} : memref<8x16xf32, #tpu.memory_space<vmem>>, vector<8x16xf32>,
    %c0_95 = arith.constant 0 : index
    %c0_96 = arith.constant 0 : index
    %356 = vector.load %arg9[%c0_95, %c0_96] : memref<8x32xf32, #tpu.memory_space<vmem>>, vector<8x32xf32>
    tpu.vector_store %arg9[%c0_95, %c0_96], %354 {strides = array<i32>} : memref<8x32xf32, #tpu.memory_space<vmem>>, vector<8x32xf32>,
    return
  }
  func.func @transform_0(%arg0: i32, %arg1: i32, %arg2: i32) -> (i32, i32, i32, i32) {
    %c0_i32 = arith.constant 0 : i32
    %c0_i32_0 = arith.constant 0 : i32
    return %arg0, %arg2, %arg1, %c0_i32 : i32, i32, i32, i32
  }
  func.func @transform_1(%arg0: i32, %arg1: i32, %arg2: i32) -> (i32, i32) {
    %c0_i32 = arith.constant 0 : i32
    %c0_i32_0 = arith.constant 0 : i32
    return %arg1, %c0_i32 : i32, i32
  }
  func.func @transform_2(%arg0: i32, %arg1: i32, %arg2: i32) -> (i32, i32, i32) {
    %c0_i32 = arith.constant 0 : i32
    %c0_i32_0 = arith.constant 0 : i32
    %c0_i32_1 = arith.constant 0 : i32
    return %arg0, %c0_i32, %c0_i32_0 : i32, i32, i32
  }
  func.func @transform_3(%arg0: i32, %arg1: i32, %arg2: i32) -> (i32, i32, i32) {
    %c0_i32 = arith.constant 0 : i32
    %c0_i32_0 = arith.constant 0 : i32
    %c0_i32_1 = arith.constant 0 : i32
    return %arg0, %c0_i32, %c0_i32_0 : i32, i32, i32
  }
  func.func @transform_4(%arg0: i32, %arg1: i32, %arg2: i32) -> (i32, i32, i32, i32) {
    %c0_i32 = arith.constant 0 : i32
    %c0_i32_0 = arith.constant 0 : i32
    return %arg0, %arg2, %arg1, %c0_i32 : i32, i32, i32, i32
  }
}

module attributes {stable_mosaic.version = 11 : i64} {
  func.func @_lstmp_chunk_kernel(%arg0: i32, %arg1: i32, %arg2: i32, %arg3: memref<1x8x8x128xbf16, #tpu.memory_space<vmem>>, %arg4: memref<8x1xi32, #tpu.memory_space<vmem>>, %arg5: memref<1x16x128xbf16, #tpu.memory_space<vmem>>, %arg6: memref<1x32x16xbf16, #tpu.memory_space<vmem>>, %arg7: memref<1x8x8x16xf32, #tpu.memory_space<vmem>>, %arg8: memref<8x16xf32, #tpu.memory_space<vmem>>, %arg9: memref<8x32xf32, #tpu.memory_space<vmem>>) attributes {dimension_semantics = [#tpu.dimension_semantics<parallel>, #tpu.dimension_semantics<parallel>, #tpu.dimension_semantics<arbitrary>], iteration_bounds = array<i64: 2, 1, 1>, scalar_prefetch = 0 : i64, scratch_operands = 2 : i64, tpu.core_type = #tpu.core_type<tc>, window_params = [{transform_indices = @transform_0, window_bounds = array<i64: 1, 8, 8, 128>}, {transform_indices = @transform_1, window_bounds = array<i64: 8, 1>}, {transform_indices = @transform_2, window_bounds = array<i64: 1, 16, 128>}, {transform_indices = @transform_3, window_bounds = array<i64: 1, 32, 16>}, {transform_indices = @transform_4, window_bounds = array<i64: 1, 8, 8, 16>}]} {
    %c0_i32 = arith.constant 0 : i32
    %0 = arith.cmpi eq, %arg2, %c0_i32 : i32
    %1 = arith.extui %0 : i1 to i32
    %c0_i32_0 = arith.constant 0 : i32
    %2 = arith.cmpi ne, %1, %c0_i32_0 : i32
    scf.if %2 {
      %cst_97 = arith.constant 0.000000e+00 : f32
      %349 = vector.broadcast %cst_97 : f32 to vector<8x16xf32>
      %c0_98 = arith.constant 0 : index
      %c0_99 = arith.constant 0 : index
      %350 = vector.load %arg8[%c0_98, %c0_99] : memref<8x16xf32, #tpu.memory_space<vmem>>, vector<8x16xf32>
      tpu.vector_store %arg8[%c0_98, %c0_99], %349 {strides = array<i32>} : memref<8x16xf32, #tpu.memory_space<vmem>>, vector<8x16xf32>,
      %cst_100 = arith.constant 0.000000e+00 : f32
      %351 = vector.broadcast %cst_100 : f32 to vector<8x32xf32>
      %c0_101 = arith.constant 0 : index
      %c0_102 = arith.constant 0 : index
      %352 = vector.load %arg9[%c0_101, %c0_102] : memref<8x32xf32, #tpu.memory_space<vmem>>, vector<8x32xf32>
      tpu.vector_store %arg9[%c0_101, %c0_102], %351 {strides = array<i32>} : memref<8x32xf32, #tpu.memory_space<vmem>>, vector<8x32xf32>,
    } else {
    }
    %c0 = arith.constant 0 : index
    %c0_1 = arith.constant 0 : index
    %c0_2 = arith.constant 0 : index
    %3 = vector.load %arg5[%c0, %c0_1, %c0_2] : memref<1x16x128xbf16, #tpu.memory_space<vmem>>, vector<1x16x128xbf16>
    %4 = vector.shape_cast %3 : vector<1x16x128xbf16> to vector<16x128xbf16>
    %c0_3 = arith.constant 0 : index
    %c0_4 = arith.constant 0 : index
    %c0_5 = arith.constant 0 : index
    %5 = vector.load %arg6[%c0_3, %c0_4, %c0_5] : memref<1x32x16xbf16, #tpu.memory_space<vmem>>, vector<1x32x16xbf16>
    %6 = vector.shape_cast %5 : vector<1x32x16xbf16> to vector<32x16xbf16>
    %c0_6 = arith.constant 0 : index
    %c0_7 = arith.constant 0 : index
    %7 = vector.load %arg4[%c0_6, %c0_7] : memref<8x1xi32, #tpu.memory_space<vmem>>, vector<8x1xi32>
    %c8_i32 = arith.constant 8 : i32
    %8 = arith.muli %arg2, %c8_i32 : i32
    %c0_8 = arith.constant 0 : index
    %c0_9 = arith.constant 0 : index
    %9 = vector.load %arg8[%c0_8, %c0_9] : memref<8x16xf32, #tpu.memory_space<vmem>>, vector<8x16xf32>
    %c0_10 = arith.constant 0 : index
    %c0_11 = arith.constant 0 : index
    %10 = vector.load %arg9[%c0_10, %c0_11] : memref<8x32xf32, #tpu.memory_space<vmem>>, vector<8x32xf32>
    %c0_i32_12 = arith.constant 0 : i32
    %c0_13 = arith.constant 0 : index
    %11 = arith.index_cast %c0_i32_12 : i32 to index
    %c0_14 = arith.constant 0 : index
    %c0_15 = arith.constant 0 : index
    %12 = vector.load %arg3[%c0_13, %11, %c0_14, %c0_15] : memref<1x8x8x128xbf16, #tpu.memory_space<vmem>>, vector<1x1x8x128xbf16>
    %13 = vector.shape_cast %12 : vector<1x1x8x128xbf16> to vector<8x128xbf16>
    %14 = arith.extf %13 : vector<8x128xbf16> to vector<8x128xf32>
    %15 = arith.truncf %9 : vector<8x16xf32> to vector<8x16xbf16>
    %cst = arith.constant dense<0.000000e+00> : vector<8x128xf32>
    %16 = tpu.matmul %15, %4, %cst {dimension_numbers = #tpu.dot_dimension_numbers<[1], [0], [0], [1], [0, 0, 1, 1], [], []>} : vector<8x16xbf16>, vector<16x128xbf16>, vector<8x128xf32> -> vector<8x128xf32>
    %17 = arith.addf %14, %16 : vector<8x128xf32>
    %18 = vector.extract_strided_slice %17 {offsets = [0, 0], sizes = [8, 96], strides = [1, 1]} : vector<8x128xf32> to vector<8x96xf32>
    %19 = arith.negf %18 : vector<8x96xf32>
    %20 = math.exp %19 : vector<8x96xf32>
    %cst_16 = arith.constant 1.000000e+00 : f32
    %21 = vector.broadcast %cst_16 : f32 to vector<8x96xf32>
    %22 = arith.addf %21, %20 : vector<8x96xf32>
    %23 = arith.divf %21, %22 : vector<8x96xf32>
    %24 = vector.extract_strided_slice %17 {offsets = [0, 96], sizes = [8, 32], strides = [1, 1]} : vector<8x128xf32> to vector<8x32xf32>
    %25 = math.tanh %24 : vector<8x32xf32>
    %26 = vector.extract_strided_slice %23 {offsets = [0, 0], sizes = [8, 32], strides = [1, 1]} : vector<8x96xf32> to vector<8x32xf32>
    %27 = vector.extract_strided_slice %23 {offsets = [0, 32], sizes = [8, 32], strides = [1, 1]} : vector<8x96xf32> to vector<8x32xf32>
    %28 = vector.extract_strided_slice %23 {offsets = [0, 64], sizes = [8, 32], strides = [1, 1]} : vector<8x96xf32> to vector<8x32xf32>
    %29 = arith.mulf %27, %10 : vector<8x32xf32>
    %30 = arith.mulf %26, %25 : vector<8x32xf32>
    %31 = arith.addf %29, %30 : vector<8x32xf32>
    %32 = math.tanh %31 : vector<8x32xf32>
    %33 = arith.mulf %28, %32 : vector<8x32xf32>
    %34 = arith.truncf %33 : vector<8x32xf32> to vector<8x32xbf16>
    %cst_17 = arith.constant dense<0.000000e+00> : vector<8x16xf32>
    %35 = tpu.matmul %34, %6, %cst_17 {dimension_numbers = #tpu.dot_dimension_numbers<[1], [0], [0], [1], [0, 0, 1, 1], [], []>} : vector<8x32xbf16>, vector<32x16xbf16>, vector<8x16xf32> -> vector<8x16xf32>
    %36 = arith.addi %8, %c0_i32_12 : i32
    %37 = vector.broadcast %36 : i32 to vector<8x1xi32>
    %38 = arith.cmpi slt, %37, %7 : vector<8x1xi32>
    %cst_18 = arith.constant 0.000000e+00 : f32
    %39 = vector.shape_cast %38 : vector<8x1xi1> to vector<8x1xi1>
    %40 = vector.broadcast %39 : vector<8x1xi1> to vector<8x16xi1>
    %41 = vector.broadcast %cst_18 : f32 to vector<8x16xf32>
    %42 = arith.select %40, %35, %41 : vector<8x16xi1>, vector<8x16xf32>
    %c0_19 = arith.constant 0 : index
    %43 = arith.index_cast %c0_i32_12 : i32 to index
    %c0_20 = arith.constant 0 : index
    %c0_21 = arith.constant 0 : index
    %44 = vector.load %arg7[%c0_19, %43, %c0_20, %c0_21] : memref<1x8x8x16xf32, #tpu.memory_space<vmem>>, vector<1x1x8x16xf32>
    %45 = vector.shape_cast %44 : vector<1x1x8x16xf32> to vector<8x16xf32>
    %46 = vector.shape_cast %42 : vector<8x16xf32> to vector<1x1x8x16xf32>
    tpu.vector_store %arg7[%c0_19, %43, %c0_20, %c0_21], %46 {strides = array<i32>} : memref<1x8x8x16xf32, #tpu.memory_space<vmem>>, vector<1x1x8x16xf32>,
    %47 = vector.shape_cast %38 : vector<8x1xi1> to vector<8x1xi1>
    %48 = vector.broadcast %47 : vector<8x1xi1> to vector<8x16xi1>
    %49 = arith.select %48, %35, %9 : vector<8x16xi1>, vector<8x16xf32>
    %50 = vector.shape_cast %38 : vector<8x1xi1> to vector<8x1xi1>
    %51 = vector.broadcast %50 : vector<8x1xi1> to vector<8x32xi1>
    %52 = arith.select %51, %31, %10 : vector<8x32xi1>, vector<8x32xf32>
    %c1_i32 = arith.constant 1 : i32
    %c0_22 = arith.constant 0 : index
    %53 = arith.index_cast %c1_i32 : i32 to index
    %c0_23 = arith.constant 0 : index
    %c0_24 = arith.constant 0 : index
    %54 = vector.load %arg3[%c0_22, %53, %c0_23, %c0_24] : memref<1x8x8x128xbf16, #tpu.memory_space<vmem>>, vector<1x1x8x128xbf16>
    %55 = vector.shape_cast %54 : vector<1x1x8x128xbf16> to vector<8x128xbf16>
    %56 = arith.extf %55 : vector<8x128xbf16> to vector<8x128xf32>
    %57 = arith.truncf %49 : vector<8x16xf32> to vector<8x16xbf16>
    %cst_25 = arith.constant dense<0.000000e+00> : vector<8x128xf32>
    %58 = tpu.matmul %57, %4, %cst_25 {dimension_numbers = #tpu.dot_dimension_numbers<[1], [0], [0], [1], [0, 0, 1, 1], [], []>} : vector<8x16xbf16>, vector<16x128xbf16>, vector<8x128xf32> -> vector<8x128xf32>
    %59 = arith.addf %56, %58 : vector<8x128xf32>
    %60 = vector.extract_strided_slice %59 {offsets = [0, 0], sizes = [8, 96], strides = [1, 1]} : vector<8x128xf32> to vector<8x96xf32>
    %61 = arith.negf %60 : vector<8x96xf32>
    %62 = math.exp %61 : vector<8x96xf32>
    %cst_26 = arith.constant 1.000000e+00 : f32
    %63 = vector.broadcast %cst_26 : f32 to vector<8x96xf32>
    %64 = arith.addf %63, %62 : vector<8x96xf32>
    %65 = arith.divf %63, %64 : vector<8x96xf32>
    %66 = vector.extract_strided_slice %59 {offsets = [0, 96], sizes = [8, 32], strides = [1, 1]} : vector<8x128xf32> to vector<8x32xf32>
    %67 = math.tanh %66 : vector<8x32xf32>
    %68 = vector.extract_strided_slice %65 {offsets = [0, 0], sizes = [8, 32], strides = [1, 1]} : vector<8x96xf32> to vector<8x32xf32>
    %69 = vector.extract_strided_slice %65 {offsets = [0, 32], sizes = [8, 32], strides = [1, 1]} : vector<8x96xf32> to vector<8x32xf32>
    %70 = vector.extract_strided_slice %65 {offsets = [0, 64], sizes = [8, 32], strides = [1, 1]} : vector<8x96xf32> to vector<8x32xf32>
    %71 = arith.mulf %69, %52 : vector<8x32xf32>
    %72 = arith.mulf %68, %67 : vector<8x32xf32>
    %73 = arith.addf %71, %72 : vector<8x32xf32>
    %74 = math.tanh %73 : vector<8x32xf32>
    %75 = arith.mulf %70, %74 : vector<8x32xf32>
    %76 = arith.truncf %75 : vector<8x32xf32> to vector<8x32xbf16>
    %cst_27 = arith.constant dense<0.000000e+00> : vector<8x16xf32>
    %77 = tpu.matmul %76, %6, %cst_27 {dimension_numbers = #tpu.dot_dimension_numbers<[1], [0], [0], [1], [0, 0, 1, 1], [], []>} : vector<8x32xbf16>, vector<32x16xbf16>, vector<8x16xf32> -> vector<8x16xf32>
    %78 = arith.addi %8, %c1_i32 : i32
    %79 = vector.broadcast %78 : i32 to vector<8x1xi32>
    %80 = arith.cmpi slt, %79, %7 : vector<8x1xi32>
    %cst_28 = arith.constant 0.000000e+00 : f32
    %81 = vector.shape_cast %80 : vector<8x1xi1> to vector<8x1xi1>
    %82 = vector.broadcast %81 : vector<8x1xi1> to vector<8x16xi1>
    %83 = vector.broadcast %cst_28 : f32 to vector<8x16xf32>
    %84 = arith.select %82, %77, %83 : vector<8x16xi1>, vector<8x16xf32>
    %c0_29 = arith.constant 0 : index
    %85 = arith.index_cast %c1_i32 : i32 to index
    %c0_30 = arith.constant 0 : index
    %c0_31 = arith.constant 0 : index
    %86 = vector.load %arg7[%c0_29, %85, %c0_30, %c0_31] : memref<1x8x8x16xf32, #tpu.memory_space<vmem>>, vector<1x1x8x16xf32>
    %87 = vector.shape_cast %86 : vector<1x1x8x16xf32> to vector<8x16xf32>
    %88 = vector.shape_cast %84 : vector<8x16xf32> to vector<1x1x8x16xf32>
    tpu.vector_store %arg7[%c0_29, %85, %c0_30, %c0_31], %88 {strides = array<i32>} : memref<1x8x8x16xf32, #tpu.memory_space<vmem>>, vector<1x1x8x16xf32>,
    %89 = vector.shape_cast %80 : vector<8x1xi1> to vector<8x1xi1>
    %90 = vector.broadcast %89 : vector<8x1xi1> to vector<8x16xi1>
    %91 = arith.select %90, %77, %49 : vector<8x16xi1>, vector<8x16xf32>
    %92 = vector.shape_cast %80 : vector<8x1xi1> to vector<8x1xi1>
    %93 = vector.broadcast %92 : vector<8x1xi1> to vector<8x32xi1>
    %94 = arith.select %93, %73, %52 : vector<8x32xi1>, vector<8x32xf32>
    %c2_i32 = arith.constant 2 : i32
    %c0_32 = arith.constant 0 : index
    %95 = arith.index_cast %c2_i32 : i32 to index
    %c0_33 = arith.constant 0 : index
    %c0_34 = arith.constant 0 : index
    %96 = vector.load %arg3[%c0_32, %95, %c0_33, %c0_34] : memref<1x8x8x128xbf16, #tpu.memory_space<vmem>>, vector<1x1x8x128xbf16>
    %97 = vector.shape_cast %96 : vector<1x1x8x128xbf16> to vector<8x128xbf16>
    %98 = arith.extf %97 : vector<8x128xbf16> to vector<8x128xf32>
    %99 = arith.truncf %91 : vector<8x16xf32> to vector<8x16xbf16>
    %cst_35 = arith.constant dense<0.000000e+00> : vector<8x128xf32>
    %100 = tpu.matmul %99, %4, %cst_35 {dimension_numbers = #tpu.dot_dimension_numbers<[1], [0], [0], [1], [0, 0, 1, 1], [], []>} : vector<8x16xbf16>, vector<16x128xbf16>, vector<8x128xf32> -> vector<8x128xf32>
    %101 = arith.addf %98, %100 : vector<8x128xf32>
    %102 = vector.extract_strided_slice %101 {offsets = [0, 0], sizes = [8, 96], strides = [1, 1]} : vector<8x128xf32> to vector<8x96xf32>
    %103 = arith.negf %102 : vector<8x96xf32>
    %104 = math.exp %103 : vector<8x96xf32>
    %cst_36 = arith.constant 1.000000e+00 : f32
    %105 = vector.broadcast %cst_36 : f32 to vector<8x96xf32>
    %106 = arith.addf %105, %104 : vector<8x96xf32>
    %107 = arith.divf %105, %106 : vector<8x96xf32>
    %108 = vector.extract_strided_slice %101 {offsets = [0, 96], sizes = [8, 32], strides = [1, 1]} : vector<8x128xf32> to vector<8x32xf32>
    %109 = math.tanh %108 : vector<8x32xf32>
    %110 = vector.extract_strided_slice %107 {offsets = [0, 0], sizes = [8, 32], strides = [1, 1]} : vector<8x96xf32> to vector<8x32xf32>
    %111 = vector.extract_strided_slice %107 {offsets = [0, 32], sizes = [8, 32], strides = [1, 1]} : vector<8x96xf32> to vector<8x32xf32>
    %112 = vector.extract_strided_slice %107 {offsets = [0, 64], sizes = [8, 32], strides = [1, 1]} : vector<8x96xf32> to vector<8x32xf32>
    %113 = arith.mulf %111, %94 : vector<8x32xf32>
    %114 = arith.mulf %110, %109 : vector<8x32xf32>
    %115 = arith.addf %113, %114 : vector<8x32xf32>
    %116 = math.tanh %115 : vector<8x32xf32>
    %117 = arith.mulf %112, %116 : vector<8x32xf32>
    %118 = arith.truncf %117 : vector<8x32xf32> to vector<8x32xbf16>
    %cst_37 = arith.constant dense<0.000000e+00> : vector<8x16xf32>
    %119 = tpu.matmul %118, %6, %cst_37 {dimension_numbers = #tpu.dot_dimension_numbers<[1], [0], [0], [1], [0, 0, 1, 1], [], []>} : vector<8x32xbf16>, vector<32x16xbf16>, vector<8x16xf32> -> vector<8x16xf32>
    %120 = arith.addi %8, %c2_i32 : i32
    %121 = vector.broadcast %120 : i32 to vector<8x1xi32>
    %122 = arith.cmpi slt, %121, %7 : vector<8x1xi32>
    %cst_38 = arith.constant 0.000000e+00 : f32
    %123 = vector.shape_cast %122 : vector<8x1xi1> to vector<8x1xi1>
    %124 = vector.broadcast %123 : vector<8x1xi1> to vector<8x16xi1>
    %125 = vector.broadcast %cst_38 : f32 to vector<8x16xf32>
    %126 = arith.select %124, %119, %125 : vector<8x16xi1>, vector<8x16xf32>
    %c0_39 = arith.constant 0 : index
    %127 = arith.index_cast %c2_i32 : i32 to index
    %c0_40 = arith.constant 0 : index
    %c0_41 = arith.constant 0 : index
    %128 = vector.load %arg7[%c0_39, %127, %c0_40, %c0_41] : memref<1x8x8x16xf32, #tpu.memory_space<vmem>>, vector<1x1x8x16xf32>
    %129 = vector.shape_cast %128 : vector<1x1x8x16xf32> to vector<8x16xf32>
    %130 = vector.shape_cast %126 : vector<8x16xf32> to vector<1x1x8x16xf32>
    tpu.vector_store %arg7[%c0_39, %127, %c0_40, %c0_41], %130 {strides = array<i32>} : memref<1x8x8x16xf32, #tpu.memory_space<vmem>>, vector<1x1x8x16xf32>,
    %131 = vector.shape_cast %122 : vector<8x1xi1> to vector<8x1xi1>
    %132 = vector.broadcast %131 : vector<8x1xi1> to vector<8x16xi1>
    %133 = arith.select %132, %119, %91 : vector<8x16xi1>, vector<8x16xf32>
    %134 = vector.shape_cast %122 : vector<8x1xi1> to vector<8x1xi1>
    %135 = vector.broadcast %134 : vector<8x1xi1> to vector<8x32xi1>
    %136 = arith.select %135, %115, %94 : vector<8x32xi1>, vector<8x32xf32>
    %c3_i32 = arith.constant 3 : i32
    %c0_42 = arith.constant 0 : index
    %137 = arith.index_cast %c3_i32 : i32 to index
    %c0_43 = arith.constant 0 : index
    %c0_44 = arith.constant 0 : index
    %138 = vector.load %arg3[%c0_42, %137, %c0_43, %c0_44] : memref<1x8x8x128xbf16, #tpu.memory_space<vmem>>, vector<1x1x8x128xbf16>
    %139 = vector.shape_cast %138 : vector<1x1x8x128xbf16> to vector<8x128xbf16>
    %140 = arith.extf %139 : vector<8x128xbf16> to vector<8x128xf32>
    %141 = arith.truncf %133 : vector<8x16xf32> to vector<8x16xbf16>
    %cst_45 = arith.constant dense<0.000000e+00> : vector<8x128xf32>
    %142 = tpu.matmul %141, %4, %cst_45 {dimension_numbers = #tpu.dot_dimension_numbers<[1], [0], [0], [1], [0, 0, 1, 1], [], []>} : vector<8x16xbf16>, vector<16x128xbf16>, vector<8x128xf32> -> vector<8x128xf32>
    %143 = arith.addf %140, %142 : vector<8x128xf32>
    %144 = vector.extract_strided_slice %143 {offsets = [0, 0], sizes = [8, 96], strides = [1, 1]} : vector<8x128xf32> to vector<8x96xf32>
    %145 = arith.negf %144 : vector<8x96xf32>
    %146 = math.exp %145 : vector<8x96xf32>
    %cst_46 = arith.constant 1.000000e+00 : f32
    %147 = vector.broadcast %cst_46 : f32 to vector<8x96xf32>
    %148 = arith.addf %147, %146 : vector<8x96xf32>
    %149 = arith.divf %147, %148 : vector<8x96xf32>
    %150 = vector.extract_strided_slice %143 {offsets = [0, 96], sizes = [8, 32], strides = [1, 1]} : vector<8x128xf32> to vector<8x32xf32>
    %151 = math.tanh %150 : vector<8x32xf32>
    %152 = vector.extract_strided_slice %149 {offsets = [0, 0], sizes = [8, 32], strides = [1, 1]} : vector<8x96xf32> to vector<8x32xf32>
    %153 = vector.extract_strided_slice %149 {offsets = [0, 32], sizes = [8, 32], strides = [1, 1]} : vector<8x96xf32> to vector<8x32xf32>
    %154 = vector.extract_strided_slice %149 {offsets = [0, 64], sizes = [8, 32], strides = [1, 1]} : vector<8x96xf32> to vector<8x32xf32>
    %155 = arith.mulf %153, %136 : vector<8x32xf32>
    %156 = arith.mulf %152, %151 : vector<8x32xf32>
    %157 = arith.addf %155, %156 : vector<8x32xf32>
    %158 = math.tanh %157 : vector<8x32xf32>
    %159 = arith.mulf %154, %158 : vector<8x32xf32>
    %160 = arith.truncf %159 : vector<8x32xf32> to vector<8x32xbf16>
    %cst_47 = arith.constant dense<0.000000e+00> : vector<8x16xf32>
    %161 = tpu.matmul %160, %6, %cst_47 {dimension_numbers = #tpu.dot_dimension_numbers<[1], [0], [0], [1], [0, 0, 1, 1], [], []>} : vector<8x32xbf16>, vector<32x16xbf16>, vector<8x16xf32> -> vector<8x16xf32>
    %162 = arith.addi %8, %c3_i32 : i32
    %163 = vector.broadcast %162 : i32 to vector<8x1xi32>
    %164 = arith.cmpi slt, %163, %7 : vector<8x1xi32>
    %cst_48 = arith.constant 0.000000e+00 : f32
    %165 = vector.shape_cast %164 : vector<8x1xi1> to vector<8x1xi1>
    %166 = vector.broadcast %165 : vector<8x1xi1> to vector<8x16xi1>
    %167 = vector.broadcast %cst_48 : f32 to vector<8x16xf32>
    %168 = arith.select %166, %161, %167 : vector<8x16xi1>, vector<8x16xf32>
    %c0_49 = arith.constant 0 : index
    %169 = arith.index_cast %c3_i32 : i32 to index
    %c0_50 = arith.constant 0 : index
    %c0_51 = arith.constant 0 : index
    %170 = vector.load %arg7[%c0_49, %169, %c0_50, %c0_51] : memref<1x8x8x16xf32, #tpu.memory_space<vmem>>, vector<1x1x8x16xf32>
    %171 = vector.shape_cast %170 : vector<1x1x8x16xf32> to vector<8x16xf32>
    %172 = vector.shape_cast %168 : vector<8x16xf32> to vector<1x1x8x16xf32>
    tpu.vector_store %arg7[%c0_49, %169, %c0_50, %c0_51], %172 {strides = array<i32>} : memref<1x8x8x16xf32, #tpu.memory_space<vmem>>, vector<1x1x8x16xf32>,
    %173 = vector.shape_cast %164 : vector<8x1xi1> to vector<8x1xi1>
    %174 = vector.broadcast %173 : vector<8x1xi1> to vector<8x16xi1>
    %175 = arith.select %174, %161, %133 : vector<8x16xi1>, vector<8x16xf32>
    %176 = vector.shape_cast %164 : vector<8x1xi1> to vector<8x1xi1>
    %177 = vector.broadcast %176 : vector<8x1xi1> to vector<8x32xi1>
    %178 = arith.select %177, %157, %136 : vector<8x32xi1>, vector<8x32xf32>
    %c4_i32 = arith.constant 4 : i32
    %c0_52 = arith.constant 0 : index
    %179 = arith.index_cast %c4_i32 : i32 to index
    %c0_53 = arith.constant 0 : index
    %c0_54 = arith.constant 0 : index
    %180 = vector.load %arg3[%c0_52, %179, %c0_53, %c0_54] : memref<1x8x8x128xbf16, #tpu.memory_space<vmem>>, vector<1x1x8x128xbf16>
    %181 = vector.shape_cast %180 : vector<1x1x8x128xbf16> to vector<8x128xbf16>
    %182 = arith.extf %181 : vector<8x128xbf16> to vector<8x128xf32>
    %183 = arith.truncf %175 : vector<8x16xf32> to vector<8x16xbf16>
    %cst_55 = arith.constant dense<0.000000e+00> : vector<8x128xf32>
    %184 = tpu.matmul %183, %4, %cst_55 {dimension_numbers = #tpu.dot_dimension_numbers<[1], [0], [0], [1], [0, 0, 1, 1], [], []>} : vector<8x16xbf16>, vector<16x128xbf16>, vector<8x128xf32> -> vector<8x128xf32>
    %185 = arith.addf %182, %184 : vector<8x128xf32>
    %186 = vector.extract_strided_slice %185 {offsets = [0, 0], sizes = [8, 96], strides = [1, 1]} : vector<8x128xf32> to vector<8x96xf32>
    %187 = arith.negf %186 : vector<8x96xf32>
    %188 = math.exp %187 : vector<8x96xf32>
    %cst_56 = arith.constant 1.000000e+00 : f32
    %189 = vector.broadcast %cst_56 : f32 to vector<8x96xf32>
    %190 = arith.addf %189, %188 : vector<8x96xf32>
    %191 = arith.divf %189, %190 : vector<8x96xf32>
    %192 = vector.extract_strided_slice %185 {offsets = [0, 96], sizes = [8, 32], strides = [1, 1]} : vector<8x128xf32> to vector<8x32xf32>
    %193 = math.tanh %192 : vector<8x32xf32>
    %194 = vector.extract_strided_slice %191 {offsets = [0, 0], sizes = [8, 32], strides = [1, 1]} : vector<8x96xf32> to vector<8x32xf32>
    %195 = vector.extract_strided_slice %191 {offsets = [0, 32], sizes = [8, 32], strides = [1, 1]} : vector<8x96xf32> to vector<8x32xf32>
    %196 = vector.extract_strided_slice %191 {offsets = [0, 64], sizes = [8, 32], strides = [1, 1]} : vector<8x96xf32> to vector<8x32xf32>
    %197 = arith.mulf %195, %178 : vector<8x32xf32>
    %198 = arith.mulf %194, %193 : vector<8x32xf32>
    %199 = arith.addf %197, %198 : vector<8x32xf32>
    %200 = math.tanh %199 : vector<8x32xf32>
    %201 = arith.mulf %196, %200 : vector<8x32xf32>
    %202 = arith.truncf %201 : vector<8x32xf32> to vector<8x32xbf16>
    %cst_57 = arith.constant dense<0.000000e+00> : vector<8x16xf32>
    %203 = tpu.matmul %202, %6, %cst_57 {dimension_numbers = #tpu.dot_dimension_numbers<[1], [0], [0], [1], [0, 0, 1, 1], [], []>} : vector<8x32xbf16>, vector<32x16xbf16>, vector<8x16xf32> -> vector<8x16xf32>
    %204 = arith.addi %8, %c4_i32 : i32
    %205 = vector.broadcast %204 : i32 to vector<8x1xi32>
    %206 = arith.cmpi slt, %205, %7 : vector<8x1xi32>
    %cst_58 = arith.constant 0.000000e+00 : f32
    %207 = vector.shape_cast %206 : vector<8x1xi1> to vector<8x1xi1>
    %208 = vector.broadcast %207 : vector<8x1xi1> to vector<8x16xi1>
    %209 = vector.broadcast %cst_58 : f32 to vector<8x16xf32>
    %210 = arith.select %208, %203, %209 : vector<8x16xi1>, vector<8x16xf32>
    %c0_59 = arith.constant 0 : index
    %211 = arith.index_cast %c4_i32 : i32 to index
    %c0_60 = arith.constant 0 : index
    %c0_61 = arith.constant 0 : index
    %212 = vector.load %arg7[%c0_59, %211, %c0_60, %c0_61] : memref<1x8x8x16xf32, #tpu.memory_space<vmem>>, vector<1x1x8x16xf32>
    %213 = vector.shape_cast %212 : vector<1x1x8x16xf32> to vector<8x16xf32>
    %214 = vector.shape_cast %210 : vector<8x16xf32> to vector<1x1x8x16xf32>
    tpu.vector_store %arg7[%c0_59, %211, %c0_60, %c0_61], %214 {strides = array<i32>} : memref<1x8x8x16xf32, #tpu.memory_space<vmem>>, vector<1x1x8x16xf32>,
    %215 = vector.shape_cast %206 : vector<8x1xi1> to vector<8x1xi1>
    %216 = vector.broadcast %215 : vector<8x1xi1> to vector<8x16xi1>
    %217 = arith.select %216, %203, %175 : vector<8x16xi1>, vector<8x16xf32>
    %218 = vector.shape_cast %206 : vector<8x1xi1> to vector<8x1xi1>
    %219 = vector.broadcast %218 : vector<8x1xi1> to vector<8x32xi1>
    %220 = arith.select %219, %199, %178 : vector<8x32xi1>, vector<8x32xf32>
    %c5_i32 = arith.constant 5 : i32
    %c0_62 = arith.constant 0 : index
    %221 = arith.index_cast %c5_i32 : i32 to index
    %c0_63 = arith.constant 0 : index
    %c0_64 = arith.constant 0 : index
    %222 = vector.load %arg3[%c0_62, %221, %c0_63, %c0_64] : memref<1x8x8x128xbf16, #tpu.memory_space<vmem>>, vector<1x1x8x128xbf16>
    %223 = vector.shape_cast %222 : vector<1x1x8x128xbf16> to vector<8x128xbf16>
    %224 = arith.extf %223 : vector<8x128xbf16> to vector<8x128xf32>
    %225 = arith.truncf %217 : vector<8x16xf32> to vector<8x16xbf16>
    %cst_65 = arith.constant dense<0.000000e+00> : vector<8x128xf32>
    %226 = tpu.matmul %225, %4, %cst_65 {dimension_numbers = #tpu.dot_dimension_numbers<[1], [0], [0], [1], [0, 0, 1, 1], [], []>} : vector<8x16xbf16>, vector<16x128xbf16>, vector<8x128xf32> -> vector<8x128xf32>
    %227 = arith.addf %224, %226 : vector<8x128xf32>
    %228 = vector.extract_strided_slice %227 {offsets = [0, 0], sizes = [8, 96], strides = [1, 1]} : vector<8x128xf32> to vector<8x96xf32>
    %229 = arith.negf %228 : vector<8x96xf32>
    %230 = math.exp %229 : vector<8x96xf32>
    %cst_66 = arith.constant 1.000000e+00 : f32
    %231 = vector.broadcast %cst_66 : f32 to vector<8x96xf32>
    %232 = arith.addf %231, %230 : vector<8x96xf32>
    %233 = arith.divf %231, %232 : vector<8x96xf32>
    %234 = vector.extract_strided_slice %227 {offsets = [0, 96], sizes = [8, 32], strides = [1, 1]} : vector<8x128xf32> to vector<8x32xf32>
    %235 = math.tanh %234 : vector<8x32xf32>
    %236 = vector.extract_strided_slice %233 {offsets = [0, 0], sizes = [8, 32], strides = [1, 1]} : vector<8x96xf32> to vector<8x32xf32>
    %237 = vector.extract_strided_slice %233 {offsets = [0, 32], sizes = [8, 32], strides = [1, 1]} : vector<8x96xf32> to vector<8x32xf32>
    %238 = vector.extract_strided_slice %233 {offsets = [0, 64], sizes = [8, 32], strides = [1, 1]} : vector<8x96xf32> to vector<8x32xf32>
    %239 = arith.mulf %237, %220 : vector<8x32xf32>
    %240 = arith.mulf %236, %235 : vector<8x32xf32>
    %241 = arith.addf %239, %240 : vector<8x32xf32>
    %242 = math.tanh %241 : vector<8x32xf32>
    %243 = arith.mulf %238, %242 : vector<8x32xf32>
    %244 = arith.truncf %243 : vector<8x32xf32> to vector<8x32xbf16>
    %cst_67 = arith.constant dense<0.000000e+00> : vector<8x16xf32>
    %245 = tpu.matmul %244, %6, %cst_67 {dimension_numbers = #tpu.dot_dimension_numbers<[1], [0], [0], [1], [0, 0, 1, 1], [], []>} : vector<8x32xbf16>, vector<32x16xbf16>, vector<8x16xf32> -> vector<8x16xf32>
    %246 = arith.addi %8, %c5_i32 : i32
    %247 = vector.broadcast %246 : i32 to vector<8x1xi32>
    %248 = arith.cmpi slt, %247, %7 : vector<8x1xi32>
    %cst_68 = arith.constant 0.000000e+00 : f32
    %249 = vector.shape_cast %248 : vector<8x1xi1> to vector<8x1xi1>
    %250 = vector.broadcast %249 : vector<8x1xi1> to vector<8x16xi1>
    %251 = vector.broadcast %cst_68 : f32 to vector<8x16xf32>
    %252 = arith.select %250, %245, %251 : vector<8x16xi1>, vector<8x16xf32>
    %c0_69 = arith.constant 0 : index
    %253 = arith.index_cast %c5_i32 : i32 to index
    %c0_70 = arith.constant 0 : index
    %c0_71 = arith.constant 0 : index
    %254 = vector.load %arg7[%c0_69, %253, %c0_70, %c0_71] : memref<1x8x8x16xf32, #tpu.memory_space<vmem>>, vector<1x1x8x16xf32>
    %255 = vector.shape_cast %254 : vector<1x1x8x16xf32> to vector<8x16xf32>
    %256 = vector.shape_cast %252 : vector<8x16xf32> to vector<1x1x8x16xf32>
    tpu.vector_store %arg7[%c0_69, %253, %c0_70, %c0_71], %256 {strides = array<i32>} : memref<1x8x8x16xf32, #tpu.memory_space<vmem>>, vector<1x1x8x16xf32>,
    %257 = vector.shape_cast %248 : vector<8x1xi1> to vector<8x1xi1>
    %258 = vector.broadcast %257 : vector<8x1xi1> to vector<8x16xi1>
    %259 = arith.select %258, %245, %217 : vector<8x16xi1>, vector<8x16xf32>
    %260 = vector.shape_cast %248 : vector<8x1xi1> to vector<8x1xi1>
    %261 = vector.broadcast %260 : vector<8x1xi1> to vector<8x32xi1>
    %262 = arith.select %261, %241, %220 : vector<8x32xi1>, vector<8x32xf32>
    %c6_i32 = arith.constant 6 : i32
    %c0_72 = arith.constant 0 : index
    %263 = arith.index_cast %c6_i32 : i32 to index
    %c0_73 = arith.constant 0 : index
    %c0_74 = arith.constant 0 : index
    %264 = vector.load %arg3[%c0_72, %263, %c0_73, %c0_74] : memref<1x8x8x128xbf16, #tpu.memory_space<vmem>>, vector<1x1x8x128xbf16>
    %265 = vector.shape_cast %264 : vector<1x1x8x128xbf16> to vector<8x128xbf16>
    %266 = arith.extf %265 : vector<8x128xbf16> to vector<8x128xf32>
    %267 = arith.truncf %259 : vector<8x16xf32> to vector<8x16xbf16>
    %cst_75 = arith.constant dense<0.000000e+00> : vector<8x128xf32>
    %268 = tpu.matmul %267, %4, %cst_75 {dimension_numbers = #tpu.dot_dimension_numbers<[1], [0], [0], [1], [0, 0, 1, 1], [], []>} : vector<8x16xbf16>, vector<16x128xbf16>, vector<8x128xf32> -> vector<8x128xf32>
    %269 = arith.addf %266, %268 : vector<8x128xf32>
    %270 = vector.extract_strided_slice %269 {offsets = [0, 0], sizes = [8, 96], strides = [1, 1]} : vector<8x128xf32> to vector<8x96xf32>
    %271 = arith.negf %270 : vector<8x96xf32>
    %272 = math.exp %271 : vector<8x96xf32>
    %cst_76 = arith.constant 1.000000e+00 : f32
    %273 = vector.broadcast %cst_76 : f32 to vector<8x96xf32>
    %274 = arith.addf %273, %272 : vector<8x96xf32>
    %275 = arith.divf %273, %274 : vector<8x96xf32>
    %276 = vector.extract_strided_slice %269 {offsets = [0, 96], sizes = [8, 32], strides = [1, 1]} : vector<8x128xf32> to vector<8x32xf32>
    %277 = math.tanh %276 : vector<8x32xf32>
    %278 = vector.extract_strided_slice %275 {offsets = [0, 0], sizes = [8, 32], strides = [1, 1]} : vector<8x96xf32> to vector<8x32xf32>
    %279 = vector.extract_strided_slice %275 {offsets = [0, 32], sizes = [8, 32], strides = [1, 1]} : vector<8x96xf32> to vector<8x32xf32>
    %280 = vector.extract_strided_slice %275 {offsets = [0, 64], sizes = [8, 32], strides = [1, 1]} : vector<8x96xf32> to vector<8x32xf32>
    %281 = arith.mulf %279, %262 : vector<8x32xf32>
    %282 = arith.mulf %278, %277 : vector<8x32xf32>
    %283 = arith.addf %281, %282 : vector<8x32xf32>
    %284 = math.tanh %283 : vector<8x32xf32>
    %285 = arith.mulf %280, %284 : vector<8x32xf32>
    %286 = arith.truncf %285 : vector<8x32xf32> to vector<8x32xbf16>
    %cst_77 = arith.constant dense<0.000000e+00> : vector<8x16xf32>
    %287 = tpu.matmul %286, %6, %cst_77 {dimension_numbers = #tpu.dot_dimension_numbers<[1], [0], [0], [1], [0, 0, 1, 1], [], []>} : vector<8x32xbf16>, vector<32x16xbf16>, vector<8x16xf32> -> vector<8x16xf32>
    %288 = arith.addi %8, %c6_i32 : i32
    %289 = vector.broadcast %288 : i32 to vector<8x1xi32>
    %290 = arith.cmpi slt, %289, %7 : vector<8x1xi32>
    %cst_78 = arith.constant 0.000000e+00 : f32
    %291 = vector.shape_cast %290 : vector<8x1xi1> to vector<8x1xi1>
    %292 = vector.broadcast %291 : vector<8x1xi1> to vector<8x16xi1>
    %293 = vector.broadcast %cst_78 : f32 to vector<8x16xf32>
    %294 = arith.select %292, %287, %293 : vector<8x16xi1>, vector<8x16xf32>
    %c0_79 = arith.constant 0 : index
    %295 = arith.index_cast %c6_i32 : i32 to index
    %c0_80 = arith.constant 0 : index
    %c0_81 = arith.constant 0 : index
    %296 = vector.load %arg7[%c0_79, %295, %c0_80, %c0_81] : memref<1x8x8x16xf32, #tpu.memory_space<vmem>>, vector<1x1x8x16xf32>
    %297 = vector.shape_cast %296 : vector<1x1x8x16xf32> to vector<8x16xf32>
    %298 = vector.shape_cast %294 : vector<8x16xf32> to vector<1x1x8x16xf32>
    tpu.vector_store %arg7[%c0_79, %295, %c0_80, %c0_81], %298 {strides = array<i32>} : memref<1x8x8x16xf32, #tpu.memory_space<vmem>>, vector<1x1x8x16xf32>,
    %299 = vector.shape_cast %290 : vector<8x1xi1> to vector<8x1xi1>
    %300 = vector.broadcast %299 : vector<8x1xi1> to vector<8x16xi1>
    %301 = arith.select %300, %287, %259 : vector<8x16xi1>, vector<8x16xf32>
    %302 = vector.shape_cast %290 : vector<8x1xi1> to vector<8x1xi1>
    %303 = vector.broadcast %302 : vector<8x1xi1> to vector<8x32xi1>
    %304 = arith.select %303, %283, %262 : vector<8x32xi1>, vector<8x32xf32>
    %c7_i32 = arith.constant 7 : i32
    %c0_82 = arith.constant 0 : index
    %305 = arith.index_cast %c7_i32 : i32 to index
    %c0_83 = arith.constant 0 : index
    %c0_84 = arith.constant 0 : index
    %306 = vector.load %arg3[%c0_82, %305, %c0_83, %c0_84] : memref<1x8x8x128xbf16, #tpu.memory_space<vmem>>, vector<1x1x8x128xbf16>
    %307 = vector.shape_cast %306 : vector<1x1x8x128xbf16> to vector<8x128xbf16>
    %308 = arith.extf %307 : vector<8x128xbf16> to vector<8x128xf32>
    %309 = arith.truncf %301 : vector<8x16xf32> to vector<8x16xbf16>
    %cst_85 = arith.constant dense<0.000000e+00> : vector<8x128xf32>
    %310 = tpu.matmul %309, %4, %cst_85 {dimension_numbers = #tpu.dot_dimension_numbers<[1], [0], [0], [1], [0, 0, 1, 1], [], []>} : vector<8x16xbf16>, vector<16x128xbf16>, vector<8x128xf32> -> vector<8x128xf32>
    %311 = arith.addf %308, %310 : vector<8x128xf32>
    %312 = vector.extract_strided_slice %311 {offsets = [0, 0], sizes = [8, 96], strides = [1, 1]} : vector<8x128xf32> to vector<8x96xf32>
    %313 = arith.negf %312 : vector<8x96xf32>
    %314 = math.exp %313 : vector<8x96xf32>
    %cst_86 = arith.constant 1.000000e+00 : f32
    %315 = vector.broadcast %cst_86 : f32 to vector<8x96xf32>
    %316 = arith.addf %315, %314 : vector<8x96xf32>
    %317 = arith.divf %315, %316 : vector<8x96xf32>
    %318 = vector.extract_strided_slice %311 {offsets = [0, 96], sizes = [8, 32], strides = [1, 1]} : vector<8x128xf32> to vector<8x32xf32>
    %319 = math.tanh %318 : vector<8x32xf32>
    %320 = vector.extract_strided_slice %317 {offsets = [0, 0], sizes = [8, 32], strides = [1, 1]} : vector<8x96xf32> to vector<8x32xf32>
    %321 = vector.extract_strided_slice %317 {offsets = [0, 32], sizes = [8, 32], strides = [1, 1]} : vector<8x96xf32> to vector<8x32xf32>
    %322 = vector.extract_strided_slice %317 {offsets = [0, 64], sizes = [8, 32], strides = [1, 1]} : vector<8x96xf32> to vector<8x32xf32>
    %323 = arith.mulf %321, %304 : vector<8x32xf32>
    %324 = arith.mulf %320, %319 : vector<8x32xf32>
    %325 = arith.addf %323, %324 : vector<8x32xf32>
    %326 = math.tanh %325 : vector<8x32xf32>
    %327 = arith.mulf %322, %326 : vector<8x32xf32>
    %328 = arith.truncf %327 : vector<8x32xf32> to vector<8x32xbf16>
    %cst_87 = arith.constant dense<0.000000e+00> : vector<8x16xf32>
    %329 = tpu.matmul %328, %6, %cst_87 {dimension_numbers = #tpu.dot_dimension_numbers<[1], [0], [0], [1], [0, 0, 1, 1], [], []>} : vector<8x32xbf16>, vector<32x16xbf16>, vector<8x16xf32> -> vector<8x16xf32>
    %330 = arith.addi %8, %c7_i32 : i32
    %331 = vector.broadcast %330 : i32 to vector<8x1xi32>
    %332 = arith.cmpi slt, %331, %7 : vector<8x1xi32>
    %cst_88 = arith.constant 0.000000e+00 : f32
    %333 = vector.shape_cast %332 : vector<8x1xi1> to vector<8x1xi1>
    %334 = vector.broadcast %333 : vector<8x1xi1> to vector<8x16xi1>
    %335 = vector.broadcast %cst_88 : f32 to vector<8x16xf32>
    %336 = arith.select %334, %329, %335 : vector<8x16xi1>, vector<8x16xf32>
    %c0_89 = arith.constant 0 : index
    %337 = arith.index_cast %c7_i32 : i32 to index
    %c0_90 = arith.constant 0 : index
    %c0_91 = arith.constant 0 : index
    %338 = vector.load %arg7[%c0_89, %337, %c0_90, %c0_91] : memref<1x8x8x16xf32, #tpu.memory_space<vmem>>, vector<1x1x8x16xf32>
    %339 = vector.shape_cast %338 : vector<1x1x8x16xf32> to vector<8x16xf32>
    %340 = vector.shape_cast %336 : vector<8x16xf32> to vector<1x1x8x16xf32>
    tpu.vector_store %arg7[%c0_89, %337, %c0_90, %c0_91], %340 {strides = array<i32>} : memref<1x8x8x16xf32, #tpu.memory_space<vmem>>, vector<1x1x8x16xf32>,
    %341 = vector.shape_cast %332 : vector<8x1xi1> to vector<8x1xi1>
    %342 = vector.broadcast %341 : vector<8x1xi1> to vector<8x16xi1>
    %343 = arith.select %342, %329, %301 : vector<8x16xi1>, vector<8x16xf32>
    %344 = vector.shape_cast %332 : vector<8x1xi1> to vector<8x1xi1>
    %345 = vector.broadcast %344 : vector<8x1xi1> to vector<8x32xi1>
    %346 = arith.select %345, %325, %304 : vector<8x32xi1>, vector<8x32xf32>
    %c8_i32_92 = arith.constant 8 : i32
    %c0_93 = arith.constant 0 : index
    %c0_94 = arith.constant 0 : index
    %347 = vector.load %arg8[%c0_93, %c0_94] : memref<8x16xf32, #tpu.memory_space<vmem>>, vector<8x16xf32>
    tpu.vector_store %arg8[%c0_93, %c0_94], %343 {strides = array<i32>} : memref<8x16xf32, #tpu.memory_space<vmem>>, vector<8x16xf32>,
    %c0_95 = arith.constant 0 : index
    %c0_96 = arith.constant 0 : index
    %348 = vector.load %arg9[%c0_95, %c0_96] : memref<8x32xf32, #tpu.memory_space<vmem>>, vector<8x32xf32>
    tpu.vector_store %arg9[%c0_95, %c0_96], %346 {strides = array<i32>} : memref<8x32xf32, #tpu.memory_space<vmem>>, vector<8x32xf32>,
    return
  }
  func.func @transform_0(%arg0: i32, %arg1: i32, %arg2: i32) -> (i32, i32, i32, i32) {
    %c0_i32 = arith.constant 0 : i32
    %c0_i32_0 = arith.constant 0 : i32
    return %arg0, %arg2, %arg1, %c0_i32 : i32, i32, i32, i32
  }
  func.func @transform_1(%arg0: i32, %arg1: i32, %arg2: i32) -> (i32, i32) {
    %c0_i32 = arith.constant 0 : i32
    %c0_i32_0 = arith.constant 0 : i32
    return %arg1, %c0_i32 : i32, i32
  }
  func.func @transform_2(%arg0: i32, %arg1: i32, %arg2: i32) -> (i32, i32, i32) {
    %c0_i32 = arith.constant 0 : i32
    %c0_i32_0 = arith.constant 0 : i32
    %c0_i32_1 = arith.constant 0 : i32
    return %arg0, %c0_i32, %c0_i32_0 : i32, i32, i32
  }
  func.func @transform_3(%arg0: i32, %arg1: i32, %arg2: i32) -> (i32, i32, i32) {
    %c0_i32 = arith.constant 0 : i32
    %c0_i32_0 = arith.constant 0 : i32
    %c0_i32_1 = arith.constant 0 : i32
    return %arg0, %c0_i32, %c0_i32_0 : i32, i32, i32
  }
  func.func @transform_4(%arg0: i32, %arg1: i32, %arg2: i32) -> (i32, i32, i32, i32) {
    %c0_i32 = arith.constant 0 : i32
    %c0_i32_0 = arith.constant 0 : i32
    return %arg0, %arg2, %arg1, %c0_i32 : i32, i32, i32, i32
  }
}

</mosaic_0001>

<llo_original>
// kernel: rnn_model_p_forward.2
$region0: #{rnn_model_p_forward.2}
  #allocation0 [shape = 'u32[]', space=smem, size = 0x4, offset = 0x4, fixed_abs, tag = 'smem constant byte address 0x4 - core index']
  #allocation1 [shape = 'u32[144,128]{1,0:T(1,128)}', space=vmem, size = 0x12000, scoped, tag = 'internal scratch']
  #allocation2 [shape = 'f32[8,16]{1,0:T(8,128)}', space=vmem, size = 0x1000, scoped, tag = 'scratch operand']
  #allocation3 [shape = 'f32[8,32]{1,0:T(8,128)}', space=vmem, size = 0x1000, scoped, tag = 'scratch operand']
  %s0 = inlined_call_operand.vmem [shape: bf16[2,8,8,128], index: 0, kind: input, shape index: {}]
  %s1 = inlined_call_operand.vmem [shape: s32[8,1], index: 1, kind: input, shape index: {}]
  %s2 = inlined_call_operand.vmem [shape: bf16[2,16,128], index: 2, kind: input, shape index: {}]
  %s3 = inlined_call_operand.vmem [shape: bf16[2,32,16], index: 3, kind: input, shape index: {}]
  %s4 = inlined_call_operand.vmem [shape: bf16[2,8,8,16], index: 4, kind: output, shape index: {}]
  %s5 = sld [smem:[#allocation0]]
  $region53: #{rnn_model_p_forward.2} parent=0
    _
  %s7 = ssub.s32 1, %s5
  %s8 = scalar_select 0, %s7, %s5
  loop: start=0, step=1, limit=4
  $region2: #{rnn_model_p_forward.2} parent=0 // loop_pre_header
    _
  $region3: #{rnn_model_p_forward.2} parent=0 // loop_header
    %s10 = sphi 0, %s14
    %p11 = scmp.ge.s32.totalorder %s10, 4
    %s17 = sphi 0, %s36
    %s18 = sphi 0, %s32
    %s19 = sphi 0, %s28
    %s20 = sphi 0, %s17
    %s21 = sphi 0, %s18
    %s22 = sphi 0, %s19
    %s23 = sphi 0, %s20
    %s24 = sphi 0, %s21
    %s25 = sphi 0, %s22
    %s43 = sphi 0, %s45
    %s46 = sphi 0, %s43
    %s47 = sphi 0, %s46
    %s63 = sphi 0, %s47
    %s69 = sphi 0, %s71
    %s72 = sphi 0, %s69
    %s73 = sphi 0, %s72
    %s89 = sphi 0, %s73
    %s95 = sphi 0, %s97
    %s98 = sphi 0, %s95
    %s99 = sphi 0, %s98
    %s115 = sphi 0, %s99
    %s121 = sphi 0, %s123
    %s124 = sphi 0, %s121
    %s125 = sphi 0, %s124
    %s141 = sphi 0, %s125
    %s151 = sphi 0, %s153
    %s154 = sphi 0, %s151
    %s155 = sphi 0, %s154
    %s171 = sphi 0, %s155
  $region4: #{rnn_model_p_forward.2} parent=0 // loop_header_branch
    %13 = sbr.rel (%p11) target = $region8
  $region5: #{rnn_model_p_forward.2} parent=0 // loop_body
    %s15 = ssub.s32 %s10, 1
    %s16 = ssub.s32 %s10, 2
    %s26 = sadd.s32 1, %s19
    %p27 = scmp.ge.s32.totalorder %s26, 1
    %s28 = scalar_select %p27, 0, %s26
    %s29 = sadd.s32 1, %s18
    %s30 = scalar_select %p27, %s29, %s18
    %p31 = scmp.ge.s32.totalorder %s30, 1
    %s32 = scalar_select %p31, 0, %s30
    %s33 = sadd.s32 1, %s17
    %s34 = scalar_select %p31, %s33, %s17
    %p35 = scmp.ge.s32.totalorder %s34, 2
    %s36 = scalar_select %p35, 0, %s34
    %s37 = ssub.s32 %s17, %s36
    %s38 = ssub.s32 %s19, %s28
    %s39 = sor.u32 %s37, %s38
    %s40 = ssub.s32 %s18, %s32
    %s41 = sor.u32 %s39, %s40
    %p42 = scmp.eq.s32.totalorder %s41, 0
    %s44 = sadd.s32 %s43, 1
    %s45 = scalar_select %p42, %s43, %s44
    %p48 = pneg %p42
    %p49 = scmp.eq.s32.totalorder %s10, 1
    %p50 = por %p48, %p49
    %p51 = scmp.ne.s32.totalorder %s43, %s46
    %p52 = scmp.eq.s32.totalorder %s10, 0
    %p53 = por %p51, %p52
    %p54 = scmp.ne.s32.totalorder %s43, %s46
    %p55 = scmp.eq.s32.totalorder %s15, 1
    %p56 = por %p54, %p55
    %p57 = scmp.ne.s32.totalorder %s46, %s47
    %p58 = scmp.eq.s32.totalorder %s15, 0
    %p59 = por %p57, %p58
    %p60 = scmp.ne.s32.totalorder %s46, %s47
    %p61 = scmp.eq.s32.totalorder %s16, 1
    %p62 = por %p60, %p61
    %p64 = scmp.ne.s32.totalorder %s47, %s63
    %p65 = scmp.eq.s32.totalorder %s16, 0
    %p66 = por %p64, %p65
    %s67 = ssub.s32 %s18, %s32
    %p68 = scmp.eq.s32.totalorder %s67, 0
    %s70 = sadd.s32 %s69, 1
    %s71 = scalar_select %p68, %s69, %s70
    %p74 = pneg %p68
    %p75 = scmp.eq.s32.totalorder %s10, 1
    %p76 = por %p74, %p75
    %p77 = scmp.ne.s32.totalorder %s69, %s72
    %p78 = scmp.eq.s32.totalorder %s10, 0
    %p79 = por %p77, %p78
    %p80 = scmp.ne.s32.totalorder %s69, %s72
    %p81 = scmp.eq.s32.totalorder %s15, 1
    %p82 = por %p80, %p81
    %p83 = scmp.ne.s32.totalorder %s72, %s73
    %p84 = scmp.eq.s32.totalorder %s15, 0
    %p85 = por %p83, %p84
    %p86 = scmp.ne.s32.totalorder %s72, %s73
    %p87 = scmp.eq.s32.totalorder %s16, 1
    %p88 = por %p86, %p87
    %p90 = scmp.ne.s32.totalorder %s73, %s89
    %p91 = scmp.eq.s32.totalorder %s16, 0
    %p92 = por %p90, %p91
    %s93 = ssub.s32 %s17, %s36
    %p94 = scmp.eq.s32.totalorder %s93, 0
    %s96 = sadd.s32 %s95, 1
    %s97 = scalar_select %p94, %s95, %s96
    %p100 = pneg %p94
    %p101 = scmp.eq.s32.totalorder %s10, 1
    %p102 = por %p100, %p101
    %p103 = scmp.ne.s32.totalorder %s95, %s98
    %p104 = scmp.eq.s32.totalorder %s10, 0
    %p105 = por %p103, %p104
    %p106 = scmp.ne.s32.totalorder %s95, %s98
    %p107 = scmp.eq.s32.totalorder %s15, 1
    %p108 = por %p106, %p107
    %p109 = scmp.ne.s32.totalorder %s98, %s99
    %p110 = scmp.eq.s32.totalorder %s15, 0
    %p111 = por %p109, %p110
    %p112 = scmp.ne.s32.totalorder %s98, %s99
    %p113 = scmp.eq.s32.totalorder %s16, 1
    %p114 = por %p112, %p113
    %p116 = scmp.ne.s32.totalorder %s99, %s115
    %p117 = scmp.eq.s32.totalorder %s16, 0
    %p118 = por %p116, %p117
    %s119 = ssub.s32 %s17, %s36
    %p120 = scmp.eq.s32.totalorder %s119, 0
    %s122 = sadd.s32 %s121, 1
    %s123 = scalar_select %p120, %s121, %s122
    %p126 = pneg %p120
    %p127 = scmp.eq.s32.totalorder %s10, 1
    %p128 = por %p126, %p127
    %p129 = scmp.ne.s32.totalorder %s121, %s124
    %p130 = scmp.eq.s32.totalorder %s10, 0
    %p131 = por %p129, %p130
    %p132 = scmp.ne.s32.totalorder %s121, %s124
    %p133 = scmp.eq.s32.totalorder %s15, 1
    %p134 = por %p132, %p133
    %p135 = scmp.ne.s32.totalorder %s124, %s125
    %p136 = scmp.eq.s32.totalorder %s15, 0
    %p137 = por %p135, %p136
    %p138 = scmp.ne.s32.totalorder %s124, %s125
    %p139 = scmp.eq.s32.totalorder %s16, 1
    %p140 = por %p138, %p139
    %p142 = scmp.ne.s32.totalorder %s125, %s141
    %p143 = scmp.eq.s32.totalorder %s16, 0
    %p144 = por %p142, %p143
    %s145 = ssub.s32 %s17, %s36
    %s146 = ssub.s32 %s19, %s28
    %s147 = sor.u32 %s145, %s146
    %s148 = ssub.s32 %s18, %s32
    %s149 = sor.u32 %s147, %s148
    %p150 = scmp.eq.s32.totalorder %s149, 0
    %s152 = sadd.s32 %s151, 1
    %s153 = scalar_select %p150, %s151, %s152
    %p156 = pneg %p150
    %p157 = scmp.eq.s32.totalorder %s10, 1
    %p158 = por %p156, %p157
    %p159 = scmp.ne.s32.totalorder %s151, %s154
    %p160 = scmp.eq.s32.totalorder %s10, 0
    %p161 = por %p159, %p160
    %p162 = scmp.ne.s32.totalorder %s151, %s154
    %p163 = scmp.eq.s32.totalorder %s15, 1
    %p164 = por %p162, %p163
    %p165 = scmp.ne.s32.totalorder %s154, %s155
    %p166 = scmp.eq.s32.totalorder %s15, 0
    %p167 = por %p165, %p166
    %p168 = scmp.ne.s32.totalorder %s154, %s155
    %p169 = scmp.eq.s32.totalorder %s16, 1
    %p170 = por %p168, %p169
    %p172 = scmp.ne.s32.totalorder %s155, %s171
    %p173 = scmp.eq.s32.totalorder %s16, 0
    %p174 = por %p172, %p173
    %p175 = scmp.le.s32.totalorder 1, %s10
    %p176 = scmp.lt.s32.totalorder %s10, 3
    %p177 = pnand %p175, %p176
    %p178 = pneg %p177
    // Predicated region
    $region9: #{rnn_model_p_forward.2} parent=5 // pred_check
      _
    $region10: #{rnn_model_p_forward.2} parent=5 // pred_check_branch
      %180 = sbr.rel (%p177) target = $region12
    $region11: #{rnn_model_p_forward.2} parent=5 // pred_region
      %s181 = ssub.s32 %s10, 1
      // Predicated region
      $region13: #{rnn_model_p_forward.2} parent=11 // pred_check
        %p182 = pneg %p85
      $region14: #{rnn_model_p_forward.2} parent=11 // pred_check_branch
        %184 = sbr.rel (%p182) target = $region16
      $region15: #{rnn_model_p_forward.2} parent=11 // pred_region
        %p185 = scmp.lt.s32.totalorder %s21, 0
        %s186 = scalar_select %p185, %s21, 0
        %s187 = smul.addr %s186, 8
        %s188 = scalar_lea.vmem %s1, %s187
      $region16: #{rnn_model_p_forward.2} parent=11 // pred_fallthru
        _
    $region12: #{rnn_model_p_forward.2} parent=5 // pred_fallthru
      _
    %p189 = scmp.lt.s32.totalorder %s10, 2
    // Predicated region
    $region17: #{rnn_model_p_forward.2} parent=5 // pred_check
      %p190 = pneg %p189
    $region18: #{rnn_model_p_forward.2} parent=5 // pred_check_branch
      %192 = sbr.rel (%p190) target = $region20
    $region19: #{rnn_model_p_forward.2} parent=5 // pred_region
      // Predicated region
      $region21: #{rnn_model_p_forward.2} parent=19 // pred_check
        %p193 = pneg %p53
      $region22: #{rnn_model_p_forward.2} parent=19 // pred_check_branch
        %195 = sbr.rel (%p193) target = $region24
      $region23: #{rnn_model_p_forward.2} parent=19 // pred_region
        %s196 = smul.u32 8, %s19
        %p197 = scmp.lt.s32.totalorder %s17, 1
        %s198 = scalar_select %p197, %s17, 1
        %p199 = scmp.lt.s32.totalorder %s196, 7
        %s200 = scalar_select %p199, %s196, 7
        %p201 = scmp.lt.s32.totalorder %s18, 0
        %s202 = scalar_select %p201, %s18, 0
        %s203 = sadd.s32 %s202, %s200
        %s204 = smul.addr %s198, 8
        %s205 = sadd.s32 %s203, %s204
        %s206 = smul.addr %s205, 4
        %s207 = scalar_lea.vmem %s0, %s206
        %s208 = smul.u32 8, %s19
      $region24: #{rnn_model_p_forward.2} parent=19 // pred_fallthru
        _
      // Predicated region
      $region25: #{rnn_model_p_forward.2} parent=19 // pred_check
        %p209 = pneg %p105
      $region26: #{rnn_model_p_forward.2} parent=19 // pred_check_branch
        %211 = sbr.rel (%p209) target = $region28
      $region27: #{rnn_model_p_forward.2} parent=19 // pred_region
        %p212 = scmp.lt.s32.totalorder %s17, 1
        %s213 = scalar_select %p212, %s17, 1
        %s214 = smul.addr %s213, 2
        %s215 = smul.addr %s214, 4
        %s216 = scalar_lea.vmem %s2, %s215
      $region28: #{rnn_model_p_forward.2} parent=19 // pred_fallthru
        _
      // Predicated region
      $region29: #{rnn_model_p_forward.2} parent=19 // pred_check
        %p217 = pneg %p131
      $region30: #{rnn_model_p_forward.2} parent=19 // pred_check_branch
        %219 = sbr.rel (%p217) target = $region32
      $region31: #{rnn_model_p_forward.2} parent=19 // pred_region
        %p220 = scmp.lt.s32.totalorder %s17, 1
        %s221 = scalar_select %p220, %s17, 1
        %s222 = smul.addr %s221, 4
        %s223 = smul.addr %s222, 4
        %s224 = scalar_lea.vmem %s3, %s223
      $region32: #{rnn_model_p_forward.2} parent=19 // pred_fallthru
        _
    $region20: #{rnn_model_p_forward.2} parent=5 // pred_fallthru
      _
    %p225 = scmp.le.s32.totalorder 1, %s10
    %p226 = scmp.lt.s32.totalorder %s10, 3
    %p227 = pnand %p225, %p226
    %p228 = pneg %p227
    // Predicated region
    $region33: #{rnn_model_p_forward.2} parent=5 // pred_check
      _
    $region34: #{rnn_model_p_forward.2} parent=5 // pred_check_branch
      %230 = sbr.rel (%p227) target = $region36
    $region35: #{rnn_model_p_forward.2} parent=5 // pred_region
      %s231 = ssub.s32 %s10, 1
      %s232 = smul.u32 8, %s22
      %p233 = scmp.lt.s32.totalorder %s20, 1
      %s234 = scalar_select %p233, %s20, 1
      %p235 = scmp.lt.s32.totalorder %s232, 7
      %s236 = scalar_select %p235, %s232, 7
      %p237 = scmp.lt.s32.totalorder %s21, 0
      %s238 = scalar_select %p237, %s21, 0
      %s239 = sadd.s32 %s238, %s236
      %s240 = smul.addr %s234, 8
      %s241 = sadd.s32 %s239, %s240
      %s242 = smul.addr %s241, 4
      %s243 = scalar_lea.vmem %s0, %s242
      %p244 = pneg %p59
      %p245 = pneg %p56
      %p246 = scmp.lt.s32.totalorder %s21, 0
      %s247 = scalar_select %p246, %s21, 0
      %s248 = smul.addr %s247, 8
      %s249 = scalar_lea.vmem %s1, %s248
      %p250 = pneg %p85
      %p251 = pneg %p82
      %p252 = scmp.lt.s32.totalorder %s20, 1
      %s253 = scalar_select %p252, %s20, 1
      %s254 = smul.addr %s253, 2
      %s255 = smul.addr %s254, 4
      %s256 = scalar_lea.vmem %s2, %s255
      %p257 = pneg %p111
      %p258 = pneg %p108
      %p259 = scmp.lt.s32.totalorder %s20, 1
      %s260 = scalar_select %p259, %s20, 1
      %s261 = smul.addr %s260, 4
      %s262 = smul.addr %s261, 4
      %s263 = scalar_lea.vmem %s3, %s262
      %p264 = pneg %p137
      %p265 = pneg %p134
      %p266 = pneg %p167
      %p267 = pneg %p164
      %s268 = smul.u32 8, %s22
      %p269 = scmp.lt.s32.totalorder %s20, 1
      %s270 = scalar_select %p269, %s20, 1
      %p271 = scmp.lt.s32.totalorder %s268, 7
      %s272 = scalar_select %p271, %s268, 7
      %p273 = scmp.lt.s32.totalorder %s21, 0
      %s274 = scalar_select %p273, %s21, 0
      %s275 = sadd.s32 %s274, %s272
      %s276 = smul.addr %s270, 8
      %s277 = sadd.s32 %s275, %s276
      %s278 = smul.addr %s277, 4
      %s279 = scalar_lea.vmem %s4, %s278
      %s280 = smul.u32 8, %s22
      %p281 = scmp.lt.s32.totalorder %s20, 1
      %s282 = scalar_select %p281, %s20, 1
      %p283 = scmp.lt.s32.totalorder %s280, 7
      %s284 = scalar_select %p283, %s280, 7
      %p285 = scmp.lt.s32.totalorder %s21, 0
      %s286 = scalar_select %p285, %s21, 0
      %s287 = sadd.s32 %s286, %s284
      %s288 = smul.addr %s282, 8
      %s289 = sadd.s32 %s287, %s288
      %s290 = smul.addr %s289, 4
      %s291 = scalar_lea.vmem %s0, %s290
      %s292 = smul.u32 8, %s22
      %p293 = scmp.lt.s32.totalorder %s21, 0
      %s294 = scalar_select %p293, %s21, 0
      %s295 = smul.addr %s294, 8
      %s296 = scalar_lea.vmem %s1, %s295
      %p297 = scmp.lt.s32.totalorder %s20, 1
      %s298 = scalar_select %p297, %s20, 1
      %s299 = smul.addr %s298, 2
      %s300 = smul.addr %s299, 4
      %s301 = scalar_lea.vmem %s2, %s300
      %p302 = scmp.lt.s32.totalorder %s20, 1
      %s303 = scalar_select %p302, %s20, 1
      %s304 = smul.addr %s303, 4
      %s305 = smul.addr %s304, 4
      %s306 = scalar_lea.vmem %s3, %s305
      %s307 = smul.u32 8, %s22
      %p308 = scmp.lt.s32.totalorder %s20, 1
      %s309 = scalar_select %p308, %s20, 1
      %p310 = scmp.lt.s32.totalorder %s307, 7
      %s311 = scalar_select %p310, %s307, 7
      %p312 = scmp.lt.s32.totalorder %s21, 0
      %s313 = scalar_select %p312, %s21, 0
      %s314 = sadd.s32 %s313, %s311
      %s315 = smul.addr %s309, 8
      %s316 = sadd.s32 %s314, %s315
      %s317 = smul.addr %s316, 4
      %s318 = scalar_lea.vmem %s4, %s317
      %s319 = smul.u32 8, %s22
      %p321 = scmp.eq.s32.totalorder %s22, 0
      // Predicated region
      $region37: #{rnn_model_p_forward.2} parent=35 // pred_check
        %p322 = pneg %p321
      $region38: #{rnn_model_p_forward.2} parent=35 // pred_check_branch
        %324 = sbr.rel (%p322) target = $region40
      $region39: #{rnn_model_p_forward.2} parent=35 // pred_region
        %vm325 = vcmask 130048
        %326 = vst.msk [vmem:[#allocation2] sm:$0xff] %vm325, 0.0
        %vm327 = vcmask 261120
        %328 = vst.msk [vmem:[#allocation3] sm:$0xff] %vm327, 0.0
      $region40: #{rnn_model_p_forward.2} parent=35 // pred_fallthru
        _
      %v329 = vld [vmem:[%s301] sm:$0xf]
      %v330 = vld [vmem:[%s301 + $0x4] sm:$0xf]
      %v331 = vld [vmem:[%s306] sm:$0xf]
      %v332 = vld [vmem:[%s306 + $0x4] sm:$0xf]
      %v333 = vld [vmem:[%s306 + $0x8] sm:$0xf]
      %v334 = vld [vmem:[%s306 + $0xc] sm:$0xf]
      %v335 = vld [vmem:[%s296] sm:$0xff]
      %s336 = smul.u32 %s22, 8
      %v337 = vld [vmem:[#allocation2] sm:$0xff]
      %v338 = vld [vmem:[#allocation3] sm:$0xff]
      %v339 = vld [vmem:[%s291] sm:$0xf]
      %v340 = vunpack.c.l.bf16 %v339
      %v341 = vpack.c.bf16 %v337, %v337
      %v344 = vunpack.c.l.b16 %v329
      %v345 = vunpack.c.l.b16 %v330
      %v346 = vpack.c.b16 %v345, %v344
      %vm348 = vcmask 130048
      %v350 = vsel %vm348, %v341, 0
      %352 = vmatprep.subr.bf16.mxu0 0
      %353 = vmatpush1.bf16.msra.mxu0 %v346
      %354 = vmatprep.subr.bf16.mxu0 0
      %355 = vmatpush1.bf16.msra.mxu0 0
      %356 = vmatprep.subr.bf16.mxu0 0
      %357 = vmatpush1.bf16.msra.mxu0 0
      %358 = vmatprep.subr.bf16.mxu0 0
      %359 = vmatpush1.bf16.msra.mxu0 0
      %360 = vmatprep.subr.bf16.mxu0 0
      %361 = vmatpush1.bf16.msra.mxu0 0
      %362 = vmatprep.subr.bf16.mxu0 0
      %363 = vmatpush1.bf16.msra.mxu0 0
      %364 = vmatprep.subr.bf16.mxu0 0
      %365 = vmatpush1.bf16.msra.mxu0 0
      %366 = vmatprep.subr.bf16.mxu0 0
      %367 = vmatpush1.bf16.msra.mxu0 0
      %368 = vmatprep.subr.bf16.mxu0 0
      %369 = vmatpush1.bf16.msra.mxu0 0
      %370 = vmatprep.subr.bf16.mxu0 0
      %371 = vmatpush1.bf16.msra.mxu0 0
      %372 = vmatprep.subr.bf16.mxu0 0
      %373 = vmatpush1.bf16.msra.mxu0 0
      %374 = vmatprep.subr.bf16.mxu0 0
      %375 = vmatpush1.bf16.msra.mxu0 0
      %376 = vmatprep.subr.bf16.mxu0 0
      %377 = vmatpush1.bf16.msra.mxu0 0
      %378 = vmatprep.subr.bf16.mxu0 0
      %379 = vmatpush1.bf16.msra.mxu0 0
      %380 = vmatprep.subr.bf16.mxu0 0
      %381 = vmatpush1.bf16.msra.mxu0 0
      %382 = vmatprep.subr.bf16.mxu0 0
      %383 = vmatpush1.bf16.msra.mxu0 0
      %384 = vmatprep.mubr.bf16.mxu0 0
      %385 = vmatmul.mubr.bf16.gmra.mrb[0].mxu0 %v350
      %v386 = vpop.f32.mrb[0].mxu0
      %v387 = vadd.f32 0.0, %v386
      %v388 = vpop.f32.mrb[0].mxu0
      %v389 = vpop.f32.mrb[0].mxu0
      %v390 = vpop.f32.mrb[0].mxu0
      %391 = vdwg.mxu0
      %v392 = vadd.f32 %v340, %v387
      %v393 = vxor.u32 %v392, 2147483648
      %v394 = vmul.f32 %v393, 1.442695
      %v395 = vpow.pop %v394
      %v396 = vadd.f32 %v395, 1.0
      %v397 = vrcp.pop %v396
      %v398 = vmul.f32 1.0, %v397
      %v399 = vtanh.pop %v392
      %401 = vrot.lane.b32.xlu0 %v338, 32
      %v402 = vpop.permute.xlu0 %401
      %v404 = vmul.f32 %v398, %v402
      %406 = vrot.lane.b32.xlu0 %v399, 32
      %v407 = vpop.permute.xlu0 %406
      %v409 = vmul.f32 %v398, %v407
      %411 = vrot.lane.b32.xlu0 %v409, 32
      %v412 = vpop.permute.xlu0 %411
      %v414 = vadd.f32 %v404, %v412
      %v415 = vtanh.pop %v414
      %417 = vrot.lane.b32.xlu0 %v415, 32
      %v418 = vpop.permute.xlu0 %417
      %v420 = vmul.f32 %v398, %v418
      %v421 = vpack.c.bf16 %v420, %v420
      %423 = vrot.lane.b32.xlu0 %v421, 64
      %v424 = vpop.permute.xlu0 %423
      %v429 = vunpack.c.l.b16 %v331
      %v430 = vunpack.c.l.b16 %v332
      %v431 = vunpack.c.l.b16 %v333
      %v432 = vunpack.c.l.b16 %v334
      %v433 = vpack.c.b16 %v430, %v429
      %v434 = vpack.c.b16 %v432, %v431
      %vm437 = vcmask 261120
      %v439 = vsel %vm437, %v424, 0
      %441 = vmatprep.subr.bf16.mxu0 0
      %442 = vmatpush1.bf16.msra.mxu0 %v433
      %443 = vmatprep.subr.bf16.mxu0 0
      %444 = vmatpush1.bf16.msra.mxu0 %v434
      %445 = vmatprep.subr.bf16.mxu0 0
      %446 = vmatpush1.bf16.msra.mxu0 0
      %447 = vmatprep.subr.bf16.mxu0 0
      %448 = vmatpush1.bf16.msra.mxu0 0
      %449 = vmatprep.subr.bf16.mxu0 0
      %450 = vmatpush1.bf16.msra.mxu0 0
      %451 = vmatprep.subr.bf16.mxu0 0
      %452 = vmatpush1.bf16.msra.mxu0 0
      %453 = vmatprep.subr.bf16.mxu0 0
      %454 = vmatpush1.bf16.msra.mxu0 0
      %455 = vmatprep.subr.bf16.mxu0 0
      %456 = vmatpush1.bf16.msra.mxu0 0
      %457 = vmatprep.subr.bf16.mxu0 0
      %458 = vmatpush1.bf16.msra.mxu0 0
      %459 = vmatprep.subr.bf16.mxu0 0
      %460 = vmatpush1.bf16.msra.mxu0 0
      %461 = vmatprep.subr.bf16.mxu0 0
      %462 = vmatpush1.bf16.msra.mxu0 0
      %463 = vmatprep.subr.bf16.mxu0 0
      %464 = vmatpush1.bf16.msra.mxu0 0
      %465 = vmatprep.subr.bf16.mxu0 0
      %466 = vmatpush1.bf16.msra.mxu0 0
      %467 = vmatprep.subr.bf16.mxu0 0
      %468 = vmatpush1.bf16.msra.mxu0 0
      %469 = vmatprep.subr.bf16.mxu0 0
      %470 = vmatpush1.bf16.msra.mxu0 0
      %471 = vmatprep.subr.bf16.mxu0 0
      %472 = vmatpush1.bf16.msra.mxu0 0
      %473 = vmatprep.mubr.bf16.mxu0 0
      %474 = vmatmul.mubr.bf16.gmra.mrb[0].mxu0 %v439
      %v475 = vpop.f32.mrb[0].mxu0
      %v476 = vadd.f32 0.0, %v475
      %v477 = vpop.f32.mrb[0].mxu0
      %v478 = vpop.f32.mrb[0].mxu0
      %v479 = vpop.f32.mrb[0].mxu0
      %480 = vdwg.mxu0
      %v481 = vstv %s336
      %vm482 = vcmp.lt.s32.totalorder %v481, %v335
      %v483 = vsel %vm482, 1, 0
      %484 = vset.pattern.permute.xlu0 0
      %485 = vperm.xlu0 %484, %v483
      %v486 = vpop.permute.xlu0 %485
      %vm487 = vcmp.eq.s32.totalorder %v486, 1
      %v488 = vsel %vm487, %v476, 0.0
      %v489 = vpack.c.bf16 %v488, %v488
      %vm490 = vcmask 125952
      %491 = vst.msk [vmem:[%s318] sm:$0xf] %vm490, %v489
      %v492 = vsel %vm487, %v476, %v337
      %v493 = vsel %vm487, %v414, %v402
      %s494 = scalar_lea.vmem %s291, 4
      %v495 = vld [vmem:[%s494] sm:$0xf]
      %v496 = vunpack.c.l.bf16 %v495
      %v497 = vpack.c.bf16 %v492, %v492
      %v499 = vsel %vm348, %v497, 0
      %501 = vmatprep.subr.bf16.mxu0 0
      %502 = vmatpush1.bf16.msra.mxu0 %v346
      %503 = vmatprep.subr.bf16.mxu0 0
      %504 = vmatpush1.bf16.msra.mxu0 0
      %505 = vmatprep.subr.bf16.mxu0 0
      %506 = vmatpush1.bf16.msra.mxu0 0
      %507 = vmatprep.subr.bf16.mxu0 0
      %508 = vmatpush1.bf16.msra.mxu0 0
      %509 = vmatprep.subr.bf16.mxu0 0
      %510 = vmatpush1.bf16.msra.mxu0 0
      %511 = vmatprep.subr.bf16.mxu0 0
      %512 = vmatpush1.bf16.msra.mxu0 0
      %513 = vmatprep.subr.bf16.mxu0 0
      %514 = vmatpush1.bf16.msra.mxu0 0
      %515 = vmatprep.subr.bf16.mxu0 0
      %516 = vmatpush1.bf16.msra.mxu0 0
      %517 = vmatprep.subr.bf16.mxu0 0
      %518 = vmatpush1.bf16.msra.mxu0 0
      %519 = vmatprep.subr.bf16.mxu0 0
      %520 = vmatpush1.bf16.msra.mxu0 0
      %521 = vmatprep.subr.bf16.mxu0 0
      %522 = vmatpush1.bf16.msra.mxu0 0
      %523 = vmatprep.subr.bf16.mxu0 0
      %524 = vmatpush1.bf16.msra.mxu0 0
      %525 = vmatprep.subr.bf16.mxu0 0
      %526 = vmatpush1.bf16.msra.mxu0 0
      %527 = vmatprep.subr.bf16.mxu0 0
      %528 = vmatpush1.bf16.msra.mxu0 0
      %529 = vmatprep.subr.bf16.mxu0 0
      %530 = vmatpush1.bf16.msra.mxu0 0
      %531 = vmatprep.subr.bf16.mxu0 0
      %532 = vmatpush1.bf16.msra.mxu0 0
      %533 = vmatprep.mubr.bf16.mxu0 0
      %534 = vmatmul.mubr.bf16.gmra.mrb[0].mxu0 %v499
      %v535 = vpop.f32.mrb[0].mxu0
      %v536 = vadd.f32 0.0, %v535
      %v537 = vpop.f32.mrb[0].mxu0
      %v538 = vpop.f32.mrb[0].mxu0
      %v539 = vpop.f32.mrb[0].mxu0
      %540 = vdwg.mxu0
      %v541 = vadd.f32 %v496, %v536
      %v542 = vxor.u32 %v541, 2147483648
      %v543 = vmul.f32 %v542, 1.442695
      %v544 = vpow.pop %v543
      %v545 = vadd.f32 %v544, 1.0
      %v546 = vrcp.pop %v545
      %v547 = vmul.f32 1.0, %v546
      %v548 = vtanh.pop %v541
      %v549 = vmul.f32 %v547, %v493
      %551 = vrot.lane.b32.xlu0 %v548, 32
      %v552 = vpop.permute.xlu0 %551
      %v554 = vmul.f32 %v547, %v552
      %556 = vrot.lane.b32.xlu0 %v554, 32
      %v557 = vpop.permute.xlu0 %556
      %v559 = vadd.f32 %v549, %v557
      %v560 = vtanh.pop %v559
      %562 = vrot.lane.b32.xlu0 %v560, 32
      %v563 = vpop.permute.xlu0 %562
      %v565 = vmul.f32 %v547, %v563
      %v566 = vpack.c.bf16 %v565, %v565
      %568 = vrot.lane.b32.xlu0 %v566, 64
      %v569 = vpop.permute.xlu0 %568
      %v571 = vsel %vm437, %v569, 0
      %573 = vmatprep.subr.bf16.mxu0 0
      %574 = vmatpush1.bf16.msra.mxu0 %v433
      %575 = vmatprep.subr.bf16.mxu0 0
      %576 = vmatpush1.bf16.msra.mxu0 %v434
      %577 = vmatprep.subr.bf16.mxu0 0
      %578 = vmatpush1.bf16.msra.mxu0 0
      %579 = vmatprep.subr.bf16.mxu0 0
      %580 = vmatpush1.bf16.msra.mxu0 0
      %581 = vmatprep.subr.bf16.mxu0 0
      %582 = vmatpush1.bf16.msra.mxu0 0
      %583 = vmatprep.subr.bf16.mxu0 0
      %584 = vmatpush1.bf16.msra.mxu0 0
      %585 = vmatprep.subr.bf16.mxu0 0
      %586 = vmatpush1.bf16.msra.mxu0 0
      %587 = vmatprep.subr.bf16.mxu0 0
      %588 = vmatpush1.bf16.msra.mxu0 0
      %589 = vmatprep.subr.bf16.mxu0 0
      %590 = vmatpush1.bf16.msra.mxu0 0
      %591 = vmatprep.subr.bf16.mxu0 0
      %592 = vmatpush1.bf16.msra.mxu0 0
      %593 = vmatprep.subr.bf16.mxu0 0
      %594 = vmatpush1.bf16.msra.mxu0 0
      %595 = vmatprep.subr.bf16.mxu0 0
      %596 = vmatpush1.bf16.msra.mxu0 0
      %597 = vmatprep.subr.bf16.mxu0 0
      %598 = vmatpush1.bf16.msra.mxu0 0
      %599 = vmatprep.subr.bf16.mxu0 0
      %600 = vmatpush1.bf16.msra.mxu0 0
      %601 = vmatprep.subr.bf16.mxu0 0
      %602 = vmatpush1.bf16.msra.mxu0 0
      %603 = vmatprep.subr.bf16.mxu0 0
      %604 = vmatpush1.bf16.msra.mxu0 0
      %605 = vmatprep.mubr.bf16.mxu0 0
      %606 = vmatmul.mubr.bf16.gmra.mrb[0].mxu0 %v571
      %v607 = vpop.f32.mrb[0].mxu0
      %v608 = vadd.f32 0.0, %v607
      %v609 = vpop.f32.mrb[0].mxu0
      %v610 = vpop.f32.mrb[0].mxu0
      %v611 = vpop.f32.mrb[0].mxu0
      %612 = vdwg.mxu0
      %s613 = sadd.s32 %s336, 1
      %v614 = vstv %s613
      %vm615 = vcmp.lt.s32.totalorder %v614, %v335
      %v616 = vsel %vm615, 1, 0
      %617 = vset.pattern.permute.xlu0 0
      %618 = vperm.xlu0 %617, %v616
      %v619 = vpop.permute.xlu0 %618
      %vm620 = vcmp.eq.s32.totalorder %v619, 1
      %v621 = vsel %vm620, %v608, 0.0
      %v622 = vpack.c.bf16 %v621, %v621
      %s623 = scalar_lea.vmem %s318, 4
      %624 = vst.msk [vmem:[%s623] sm:$0xf] %vm490, %v622
      %v625 = vsel %vm620, %v608, %v492
      %v626 = vsel %vm620, %v559, %v493
      %s627 = scalar_lea.vmem %s291, 8
      %v628 = vld [vmem:[%s627] sm:$0xf]
      %v629 = vunpack.c.l.bf16 %v628
      %v630 = vpack.c.bf16 %v625, %v625
      %v632 = vsel %vm348, %v630, 0
      %634 = vmatprep.subr.bf16.mxu0 0
      %635 = vmatpush1.bf16.msra.mxu0 %v346
      %636 = vmatprep.subr.bf16.mxu0 0
      %637 = vmatpush1.bf16.msra.mxu0 0
      %638 = vmatprep.subr.bf16.mxu0 0
      %639 = vmatpush1.bf16.msra.mxu0 0
      %640 = vmatprep.subr.bf16.mxu0 0
      %641 = vmatpush1.bf16.msra.mxu0 0
      %642 = vmatprep.subr.bf16.mxu0 0
      %643 = vmatpush1.bf16.msra.mxu0 0
      %644 = vmatprep.subr.bf16.mxu0 0
      %645 = vmatpush1.bf16.msra.mxu0 0
      %646 = vmatprep.subr.bf16.mxu0 0
      %647 = vmatpush1.bf16.msra.mxu0 0
      %648 = vmatprep.subr.bf16.mxu0 0
      %649 = vmatpush1.bf16.msra.mxu0 0
      %650 = vmatprep.subr.bf16.mxu0 0
      %651 = vmatpush1.bf16.msra.mxu0 0
      %652 = vmatprep.subr.bf16.mxu0 0
      %653 = vmatpush1.bf16.msra.mxu0 0
      %654 = vmatprep.subr.bf16.mxu0 0
      %655 = vmatpush1.bf16.msra.mxu0 0
      %656 = vmatprep.subr.bf16.mxu0 0
      %657 = vmatpush1.bf16.msra.mxu0 0
      %658 = vmatprep.subr.bf16.mxu0 0
      %659 = vmatpush1.bf16.msra.mxu0 0
      %660 = vmatprep.subr.bf16.mxu0 0
      %661 = vmatpush1.bf16.msra.mxu0 0
      %662 = vmatprep.subr.bf16.mxu0 0
      %663 = vmatpush1.bf16.msra.mxu0 0
      %664 = vmatprep.subr.bf16.mxu0 0
      %665 = vmatpush1.bf16.msra.mxu0 0
      %666 = vmatprep.mubr.bf16.mxu0 0
      %667 = vmatmul.mubr.bf16.gmra.mrb[0].mxu0 %v632
      %v668 = vpop.f32.mrb[0].mxu0
      %v669 = vadd.f32 0.0, %v668
      %v670 = vpop.f32.mrb[0].mxu0
      %v671 = vpop.f32.mrb[0].mxu0
      %v672 = vpop.f32.mrb[0].mxu0
      %673 = vdwg.mxu0
      %v674 = vadd.f32 %v629, %v669
      %v675 = vxor.u32 %v674, 2147483648
      %v676 = vmul.f32 %v675, 1.442695
      %v677 = vpow.pop %v676
      %v678 = vadd.f32 %v677, 1.0
      %v679 = vrcp.pop %v678
      %v680 = vmul.f32 1.0, %v679
      %v681 = vtanh.pop %v674
      %v682 = vmul.f32 %v680, %v626
      %684 = vrot.lane.b32.xlu0 %v681, 32
      %v685 = vpop.permute.xlu0 %684
      %v687 = vmul.f32 %v680, %v685
      %689 = vrot.lane.b32.xlu0 %v687, 32
      %v690 = vpop.permute.xlu0 %689
      %v692 = vadd.f32 %v682, %v690
      %v693 = vtanh.pop %v692
      %695 = vrot.lane.b32.xlu0 %v693, 32
      %v696 = vpop.permute.xlu0 %695
      %v698 = vmul.f32 %v680, %v696
      %v699 = vpack.c.bf16 %v698, %v698
      %701 = vrot.lane.b32.xlu0 %v699, 64
      %v702 = vpop.permute.xlu0 %701
      %v704 = vsel %vm437, %v702, 0
      %706 = vmatprep.subr.bf16.mxu0 0
      %707 = vmatpush1.bf16.msra.mxu0 %v433
      %708 = vmatprep.subr.bf16.mxu0 0
      %709 = vmatpush1.bf16.msra.mxu0 %v434
      %710 = vmatprep.subr.bf16.mxu0 0
      %711 = vmatpush1.bf16.msra.mxu0 0
      %712 = vmatprep.subr.bf16.mxu0 0
      %713 = vmatpush1.bf16.msra.mxu0 0
      %714 = vmatprep.subr.bf16.mxu0 0
      %715 = vmatpush1.bf16.msra.mxu0 0
      %716 = vmatprep.subr.bf16.mxu0 0
      %717 = vmatpush1.bf16.msra.mxu0 0
      %718 = vmatprep.subr.bf16.mxu0 0
      %719 = vmatpush1.bf16.msra.mxu0 0
      %720 = vmatprep.subr.bf16.mxu0 0
      %721 = vmatpush1.bf16.msra.mxu0 0
      %722 = vmatprep.subr.bf16.mxu0 0
      %723 = vmatpush1.bf16.msra.mxu0 0
      %724 = vmatprep.subr.bf16.mxu0 0
      %725 = vmatpush1.bf16.msra.mxu0 0
      %726 = vmatprep.subr.bf16.mxu0 0
      %727 = vmatpush1.bf16.msra.mxu0 0
      %728 = vmatprep.subr.bf16.mxu0 0
      %729 = vmatpush1.bf16.msra.mxu0 0
      %730 = vmatprep.subr.bf16.mxu0 0
      %731 = vmatpush1.bf16.msra.mxu0 0
      %732 = vmatprep.subr.bf16.mxu0 0
      %733 = vmatpush1.bf16.msra.mxu0 0
      %734 = vmatprep.subr.bf16.mxu0 0
      %735 = vmatpush1.bf16.msra.mxu0 0
      %736 = vmatprep.subr.bf16.mxu0 0
      %737 = vmatpush1.bf16.msra.mxu0 0
      %738 = vmatprep.mubr.bf16.mxu0 0
      %739 = vmatmul.mubr.bf16.gmra.mrb[0].mxu0 %v704
      %v740 = vpop.f32.mrb[0].mxu0
      %v741 = vadd.f32 0.0, %v740
      %v742 = vpop.f32.mrb[0].mxu0
      %v743 = vpop.f32.mrb[0].mxu0
      %v744 = vpop.f32.mrb[0].mxu0
      %745 = vdwg.mxu0
      %s746 = sadd.s32 %s336, 2
      %v747 = vstv %s746
      %vm748 = vcmp.lt.s32.totalorder %v747, %v335
      %v749 = vsel %vm748, 1, 0
      %750 = vset.pattern.permute.xlu0 0
      %751 = vperm.xlu0 %750, %v749
      %v752 = vpop.permute.xlu0 %751
      %vm753 = vcmp.eq.s32.totalorder %v752, 1
      %v754 = vsel %vm753, %v741, 0.0
      %v755 = vpack.c.bf16 %v754, %v754
      %s756 = scalar_lea.vmem %s318, 8
      %757 = vst.msk [vmem:[%s756] sm:$0xf] %vm490, %v755
      %v758 = vsel %vm753, %v741, %v625
      %v759 = vsel %vm753, %v692, %v626
      %s760 = scalar_lea.vmem %s291, 12
      %v761 = vld [vmem:[%s760] sm:$0xf]
      %v762 = vunpack.c.l.bf16 %v761
      %v763 = vpack.c.bf16 %v758, %v758
      %v765 = vsel %vm348, %v763, 0
      %767 = vmatprep.subr.bf16.mxu0 0
      %768 = vmatpush1.bf16.msra.mxu0 %v346
      %769 = vmatprep.subr.bf16.mxu0 0
      %770 = vmatpush1.bf16.msra.mxu0 0
      %771 = vmatprep.subr.bf16.mxu0 0
      %772 = vmatpush1.bf16.msra.mxu0 0
      %773 = vmatprep.subr.bf16.mxu0 0
      %774 = vmatpush1.bf16.msra.mxu0 0
      %775 = vmatprep.subr.bf16.mxu0 0
      %776 = vmatpush1.bf16.msra.mxu0 0
      %777 = vmatprep.subr.bf16.mxu0 0
      %778 = vmatpush1.bf16.msra.mxu0 0
      %779 = vmatprep.subr.bf16.mxu0 0
      %780 = vmatpush1.bf16.msra.mxu0 0
      %781 = vmatprep.subr.bf16.mxu0 0
      %782 = vmatpush1.bf16.msra.mxu0 0
      %783 = vmatprep.subr.bf16.mxu0 0
      %784 = vmatpush1.bf16.msra.mxu0 0
      %785 = vmatprep.subr.bf16.mxu0 0
      %786 = vmatpush1.bf16.msra.mxu0 0
      %787 = vmatprep.subr.bf16.mxu0 0
      %788 = vmatpush1.bf16.msra.mxu0 0
      %789 = vmatprep.subr.bf16.mxu0 0
      %790 = vmatpush1.bf16.msra.mxu0 0
      %791 = vmatprep.subr.bf16.mxu0 0
      %792 = vmatpush1.bf16.msra.mxu0 0
      %793 = vmatprep.subr.bf16.mxu0 0
      %794 = vmatpush1.bf16.msra.mxu0 0
      %795 = vmatprep.subr.bf16.mxu0 0
      %796 = vmatpush1.bf16.msra.mxu0 0
      %797 = vmatprep.subr.bf16.mxu0 0
      %798 = vmatpush1.bf16.msra.mxu0 0
      %799 = vmatprep.mubr.bf16.mxu0 0
      %800 = vmatmul.mubr.bf16.gmra.mrb[0].mxu0 %v765
      %v801 = vpop.f32.mrb[0].mxu0
      %v802 = vadd.f32 0.0, %v801
      %v803 = vpop.f32.mrb[0].mxu0
      %v804 = vpop.f32.mrb[0].mxu0
      %v805 = vpop.f32.mrb[0].mxu0
      %806 = vdwg.mxu0
      %v807 = vadd.f32 %v762, %v802
      %v808 = vxor.u32 %v807, 2147483648
      %v809 = vmul.f32 %v808, 1.442695
      %v810 = vpow.pop %v809
      %v811 = vadd.f32 %v810, 1.0
      %v812 = vrcp.pop %v811
      %v813 = vmul.f32 1.0, %v812
      %v814 = vtanh.pop %v807
      %v815 = vmul.f32 %v813, %v759
      %817 = vrot.lane.b32.xlu0 %v814, 32
      %v818 = vpop.permute.xlu0 %817
      %v820 = vmul.f32 %v813, %v818
      %822 = vrot.lane.b32.xlu0 %v820, 32
      %v823 = vpop.permute.xlu0 %822
      %v825 = vadd.f32 %v815, %v823
      %v826 = vtanh.pop %v825
      %828 = vrot.lane.b32.xlu0 %v826, 32
      %v829 = vpop.permute.xlu0 %828
      %v831 = vmul.f32 %v813, %v829
      %v832 = vpack.c.bf16 %v831, %v831
      %834 = vrot.lane.b32.xlu0 %v832, 64
      %v835 = vpop.permute.xlu0 %834
      %v837 = vsel %vm437, %v835, 0
      %839 = vmatprep.subr.bf16.mxu0 0
      %840 = vmatpush1.bf16.msra.mxu0 %v433
      %841 = vmatprep.subr.bf16.mxu0 0
      %842 = vmatpush1.bf16.msra.mxu0 %v434
      %843 = vmatprep.subr.bf16.mxu0 0
      %844 = vmatpush1.bf16.msra.mxu0 0
      %845 = vmatprep.subr.bf16.mxu0 0
      %846 = vmatpush1.bf16.msra.mxu0 0
      %847 = vmatprep.subr.bf16.mxu0 0
      %848 = vmatpush1.bf16.msra.mxu0 0
      %849 = vmatprep.subr.bf16.mxu0 0
      %850 = vmatpush1.bf16.msra.mxu0 0
      %851 = vmatprep.subr.bf16.mxu0 0
      %852 = vmatpush1.bf16.msra.mxu0 0
      %853 = vmatprep.subr.bf16.mxu0 0
      %854 = vmatpush1.bf16.msra.mxu0 0
      %855 = vmatprep.subr.bf16.mxu0 0
      %856 = vmatpush1.bf16.msra.mxu0 0
      %857 = vmatprep.subr.bf16.mxu0 0
      %858 = vmatpush1.bf16.msra.mxu0 0
      %859 = vmatprep.subr.bf16.mxu0 0
      %860 = vmatpush1.bf16.msra.mxu0 0
      %861 = vmatprep.subr.bf16.mxu0 0
      %862 = vmatpush1.bf16.msra.mxu0 0
      %863 = vmatprep.subr.bf16.mxu0 0
      %864 = vmatpush1.bf16.msra.mxu0 0
      %865 = vmatprep.subr.bf16.mxu0 0
      %866 = vmatpush1.bf16.msra.mxu0 0
      %867 = vmatprep.subr.bf16.mxu0 0
      %868 = vmatpush1.bf16.msra.mxu0 0
      %869 = vmatprep.subr.bf16.mxu0 0
      %870 = vmatpush1.bf16.msra.mxu0 0
      %871 = vmatprep.mubr.bf16.mxu0 0
      %872 = vmatmul.mubr.bf16.gmra.mrb[0].mxu0 %v837
      %v873 = vpop.f32.mrb[0].mxu0
      %v874 = vadd.f32 0.0, %v873
      %v875 = vpop.f32.mrb[0].mxu0
      %v876 = vpop.f32.mrb[0].mxu0
      %v877 = vpop.f32.mrb[0].mxu0
      %878 = vdwg.mxu0
      %s879 = sadd.s32 %s336, 3
      %v880 = vstv %s879
      %vm881 = vcmp.lt.s32.totalorder %v880, %v335
      %v882 = vsel %vm881, 1, 0
      %883 = vset.pattern.permute.xlu0 0
      %884 = vperm.xlu0 %883, %v882
      %v885 = vpop.permute.xlu0 %884
      %vm886 = vcmp.eq.s32.totalorder %v885, 1
      %v887 = vsel %vm886, %v874, 0.0
      %v888 = vpack.c.bf16 %v887, %v887
      %s889 = scalar_lea.vmem %s318, 12
      %890 = vst.msk [vmem:[%s889] sm:$0xf] %vm490, %v888
      %v891 = vsel %vm886, %v874, %v758
      %v892 = vsel %vm886, %v825, %v759
      %s893 = scalar_lea.vmem %s291, 16
      %v894 = vld [vmem:[%s893] sm:$0xf]
      %v895 = vunpack.c.l.bf16 %v894
      %v896 = vpack.c.bf16 %v891, %v891
      %v898 = vsel %vm348, %v896, 0
      %900 = vmatprep.subr.bf16.mxu0 0
      %901 = vmatpush1.bf16.msra.mxu0 %v346
      %902 = vmatprep.subr.bf16.mxu0 0
      %903 = vmatpush1.bf16.msra.mxu0 0
      %904 = vmatprep.subr.bf16.mxu0 0
      %905 = vmatpush1.bf16.msra.mxu0 0
      %906 = vmatprep.subr.bf16.mxu0 0
      %907 = vmatpush1.bf16.msra.mxu0 0
      %908 = vmatprep.subr.bf16.mxu0 0
      %909 = vmatpush1.bf16.msra.mxu0 0
      %910 = vmatprep.subr.bf16.mxu0 0
      %911 = vmatpush1.bf16.msra.mxu0 0
      %912 = vmatprep.subr.bf16.mxu0 0
      %913 = vmatpush1.bf16.msra.mxu0 0
      %914 = vmatprep.subr.bf16.mxu0 0
      %915 = vmatpush1.bf16.msra.mxu0 0
      %916 = vmatprep.subr.bf16.mxu0 0
      %917 = vmatpush1.bf16.msra.mxu0 0
      %918 = vmatprep.subr.bf16.mxu0 0
      %919 = vmatpush1.bf16.msra.mxu0 0
      %920 = vmatprep.subr.bf16.mxu0 0
      %921 = vmatpush1.bf16.msra.mxu0 0
      %922 = vmatprep.subr.bf16.mxu0 0
      %923 = vmatpush1.bf16.msra.mxu0 0
      %924 = vmatprep.subr.bf16.mxu0 0
      %925 = vmatpush1.bf16.msra.mxu0 0
      %926 = vmatprep.subr.bf16.mxu0 0
      %927 = vmatpush1.bf16.msra.mxu0 0
      %928 = vmatprep.subr.bf16.mxu0 0
      %929 = vmatpush1.bf16.msra.mxu0 0
      %930 = vmatprep.subr.bf16.mxu0 0
      %931 = vmatpush1.bf16.msra.mxu0 0
      %932 = vmatprep.mubr.bf16.mxu0 0
      %933 = vmatmul.mubr.bf16.gmra.mrb[0].mxu0 %v898
      %v934 = vpop.f32.mrb[0].mxu0
      %v935 = vadd.f32 0.0, %v934
      %v936 = vpop.f32.mrb[0].mxu0
      %v937 = vpop.f32.mrb[0].mxu0
      %v938 = vpop.f32.mrb[0].mxu0
      %939 = vdwg.mxu0
      %v940 = vadd.f32 %v895, %v935
      %v941 = vxor.u32 %v940, 2147483648
      %v942 = vmul.f32 %v941, 1.442695
      %v943 = vpow.pop %v942
      %v944 = vadd.f32 %v943, 1.0
      %v945 = vrcp.pop %v944
      %v946 = vmul.f32 1.0, %v945
      %v947 = vtanh.pop %v940
      %v948 = vmul.f32 %v946, %v892
      %950 = vrot.lane.b32.xlu0 %v947, 32
      %v951 = vpop.permute.xlu0 %950
      %v953 = vmul.f32 %v946, %v951
      %955 = vrot.lane.b32.xlu0 %v953, 32
      %v956 = vpop.permute.xlu0 %955
      %v958 = vadd.f32 %v948, %v956
      %v959 = vtanh.pop %v958
      %961 = vrot.lane.b32.xlu0 %v959, 32
      %v962 = vpop.permute.xlu0 %961
      %v964 = vmul.f32 %v946, %v962
      %v965 = vpack.c.bf16 %v964, %v964
      %967 = vrot.lane.b32.xlu0 %v965, 64
      %v968 = vpop.permute.xlu0 %967
      %v970 = vsel %vm437, %v968, 0
      %972 = vmatprep.subr.bf16.mxu0 0
      %973 = vmatpush1.bf16.msra.mxu0 %v433
      %974 = vmatprep.subr.bf16.mxu0 0
      %975 = vmatpush1.bf16.msra.mxu0 %v434
      %976 = vmatprep.subr.bf16.mxu0 0
      %977 = vmatpush1.bf16.msra.mxu0 0
      %978 = vmatprep.subr.bf16.mxu0 0
      %979 = vmatpush1.bf16.msra.mxu0 0
      %980 = vmatprep.subr.bf16.mxu0 0
      %981 = vmatpush1.bf16.msra.mxu0 0
      %982 = vmatprep.subr.bf16.mxu0 0
      %983 = vmatpush1.bf16.msra.mxu0 0
      %984 = vmatprep.subr.bf16.mxu0 0
      %985 = vmatpush1.bf16.msra.mxu0 0
      %986 = vmatprep.subr.bf16.mxu0 0
      %987 = vmatpush1.bf16.msra.mxu0 0
      %988 = vmatprep.subr.bf16.mxu0 0
      %989 = vmatpush1.bf16.msra.mxu0 0
      %990 = vmatprep.subr.bf16.mxu0 0
      %991 = vmatpush1.bf16.msra.mxu0 0
      %992 = vmatprep.subr.bf16.mxu0 0
      %993 = vmatpush1.bf16.msra.mxu0 0
      %994 = vmatprep.subr.bf16.mxu0 0
      %995 = vmatpush1.bf16.msra.mxu0 0
      %996 = vmatprep.subr.bf16.mxu0 0
      %997 = vmatpush1.bf16.msra.mxu0 0
      %998 = vmatprep.subr.bf16.mxu0 0
      %999 = vmatpush1.bf16.msra.mxu0 0
      %1000 = vmatprep.subr.bf16.mxu0 0
      %1001 = vmatpush1.bf16.msra.mxu0 0
      %1002 = vmatprep.subr.bf16.mxu0 0
      %1003 = vmatpush1.bf16.msra.mxu0 0
      %1004 = vmatprep.mubr.bf16.mxu0 0
      %1005 = vmatmul.mubr.bf16.gmra.mrb[0].mxu0 %v970
      %v1006 = vpop.f32.mrb[0].mxu0
      %v1007 = vadd.f32 0.0, %v1006
      %v1008 = vpop.f32.mrb[0].mxu0
      %v1009 = vpop.f32.mrb[0].mxu0
      %v1010 = vpop.f32.mrb[0].mxu0
      %1011 = vdwg.mxu0
      %s1012 = sadd.s32 %s336, 4
      %v1013 = vstv %s1012
      %vm1014 = vcmp.lt.s32.totalorder %v1013, %v335
      %v1015 = vsel %vm1014, 1, 0
      %1016 = vset.pattern.permute.xlu0 0
      %1017 = vperm.xlu0 %1016, %v1015
      %v1018 = vpop.permute.xlu0 %1017
      %vm1019 = vcmp.eq.s32.totalorder %v1018, 1
      %v1020 = vsel %vm1019, %v1007, 0.0
      %v1021 = vpack.c.bf16 %v1020, %v1020
      %s1022 = scalar_lea.vmem %s318, 16
      %1023 = vst.msk [vmem:[%s1022] sm:$0xf] %vm490, %v1021
      %v1024 = vsel %vm1019, %v1007, %v891
      %v1025 = vsel %vm1019, %v958, %v892
      %s1026 = scalar_lea.vmem %s291, 20
      %v1027 = vld [vmem:[%s1026] sm:$0xf]
      %v1028 = vunpack.c.l.bf16 %v1027
      %v1029 = vpack.c.bf16 %v1024, %v1024
      %v1031 = vsel %vm348, %v1029, 0
      %1033 = vmatprep.subr.bf16.mxu0 0
      %1034 = vmatpush1.bf16.msra.mxu0 %v346
      %1035 = vmatprep.subr.bf16.mxu0 0
      %1036 = vmatpush1.bf16.msra.mxu0 0
      %1037 = vmatprep.subr.bf16.mxu0 0
      %1038 = vmatpush1.bf16.msra.mxu0 0
      %1039 = vmatprep.subr.bf16.mxu0 0
      %1040 = vmatpush1.bf16.msra.mxu0 0
      %1041 = vmatprep.subr.bf16.mxu0 0
      %1042 = vmatpush1.bf16.msra.mxu0 0
      %1043 = vmatprep.subr.bf16.mxu0 0
      %1044 = vmatpush1.bf16.msra.mxu0 0
      %1045 = vmatprep.subr.bf16.mxu0 0
      %1046 = vmatpush1.bf16.msra.mxu0 0
      %1047 = vmatprep.subr.bf16.mxu0 0
      %1048 = vmatpush1.bf16.msra.mxu0 0
      %1049 = vmatprep.subr.bf16.mxu0 0
      %1050 = vmatpush1.bf16.msra.mxu0 0
      %1051 = vmatprep.subr.bf16.mxu0 0
      %1052 = vmatpush1.bf16.msra.mxu0 0
      %1053 = vmatprep.subr.bf16.mxu0 0
      %1054 = vmatpush1.bf16.msra.mxu0 0
      %1055 = vmatprep.subr.bf16.mxu0 0
      %1056 = vmatpush1.bf16.msra.mxu0 0
      %1057 = vmatprep.subr.bf16.mxu0 0
      %1058 = vmatpush1.bf16.msra.mxu0 0
      %1059 = vmatprep.subr.bf16.mxu0 0
      %1060 = vmatpush1.bf16.msra.mxu0 0
      %1061 = vmatprep.subr.bf16.mxu0 0
      %1062 = vmatpush1.bf16.msra.mxu0 0
      %1063 = vmatprep.subr.bf16.mxu0 0
      %1064 = vmatpush1.bf16.msra.mxu0 0
      %1065 = vmatprep.mubr.bf16.mxu0 0
      %1066 = vmatmul.mubr.bf16.gmra.mrb[0].mxu0 %v1031
      %v1067 = vpop.f32.mrb[0].mxu0
      %v1068 = vadd.f32 0.0, %v1067
      %v1069 = vpop.f32.mrb[0].mxu0
      %v1070 = vpop.f32.mrb[0].mxu0
      %v1071 = vpop.f32.mrb[0].mxu0
      %1072 = vdwg.mxu0
      %v1073 = vadd.f32 %v1028, %v1068
      %v1074 = vxor.u32 %v1073, 2147483648
      %v1075 = vmul.f32 %v1074, 1.442695
      %v1076 = vpow.pop %v1075
      %v1077 = vadd.f32 %v1076, 1.0
      %v1078 = vrcp.pop %v1077
      %v1079 = vmul.f32 1.0, %v1078
      %v1080 = vtanh.pop %v1073
      %v1081 = vmul.f32 %v1079, %v1025
      %1083 = vrot.lane.b32.xlu0 %v1080, 32
      %v1084 = vpop.permute.xlu0 %1083
      %v1086 = vmul.f32 %v1079, %v1084
      %1088 = vrot.lane.b32.xlu0 %v1086, 32
      %v1089 = vpop.permute.xlu0 %1088
      %v1091 = vadd.f32 %v1081, %v1089
      %v1092 = vtanh.pop %v1091
      %1094 = vrot.lane.b32.xlu0 %v1092, 32
      %v1095 = vpop.permute.xlu0 %1094
      %v1097 = vmul.f32 %v1079, %v1095
      %v1098 = vpack.c.bf16 %v1097, %v1097
      %1100 = vrot.lane.b32.xlu0 %v1098, 64
      %v1101 = vpop.permute.xlu0 %1100
      %v1103 = vsel %vm437, %v1101, 0
      %1105 = vmatprep.subr.bf16.mxu0 0
      %1106 = vmatpush1.bf16.msra.mxu0 %v433
      %1107 = vmatprep.subr.bf16.mxu0 0
      %1108 = vmatpush1.bf16.msra.mxu0 %v434
      %1109 = vmatprep.subr.bf16.mxu0 0
      %1110 = vmatpush1.bf16.msra.mxu0 0
      %1111 = vmatprep.subr.bf16.mxu0 0
      %1112 = vmatpush1.bf16.msra.mxu0 0
      %1113 = vmatprep.subr.bf16.mxu0 0
      %1114 = vmatpush1.bf16.msra.mxu0 0
      %1115 = vmatprep.subr.bf16.mxu0 0
      %1116 = vmatpush1.bf16.msra.mxu0 0
      %1117 = vmatprep.subr.bf16.mxu0 0
      %1118 = vmatpush1.bf16.msra.mxu0 0
      %1119 = vmatprep.subr.bf16.mxu0 0
      %1120 = vmatpush1.bf16.msra.mxu0 0
      %1121 = vmatprep.subr.bf16.mxu0 0
      %1122 = vmatpush1.bf16.msra.mxu0 0
      %1123 = vmatprep.subr.bf16.mxu0 0
      %1124 = vmatpush1.bf16.msra.mxu0 0
      %1125 = vmatprep.subr.bf16.mxu0 0
      %1126 = vmatpush1.bf16.msra.mxu0 0
      %1127 = vmatprep.subr.bf16.mxu0 0
      %1128 = vmatpush1.bf16.msra.mxu0 0
      %1129 = vmatprep.subr.bf16.mxu0 0
      %1130 = vmatpush1.bf16.msra.mxu0 0
      %1131 = vmatprep.subr.bf16.mxu0 0
      %1132 = vmatpush1.bf16.msra.mxu0 0
      %1133 = vmatprep.subr.bf16.mxu0 0
      %1134 = vmatpush1.bf16.msra.mxu0 0
      %1135 = vmatprep.subr.bf16.mxu0 0
      %1136 = vmatpush1.bf16.msra.mxu0 0
      %1137 = vmatprep.mubr.bf16.mxu0 0
      %1138 = vmatmul.mubr.bf16.gmra.mrb[0].mxu0 %v1103
      %v1139 = vpop.f32.mrb[0].mxu0
      %v1140 = vadd.f32 0.0, %v1139
      %v1141 = vpop.f32.mrb[0].mxu0
      %v1142 = vpop.f32.mrb[0].mxu0
      %v1143 = vpop.f32.mrb[0].mxu0
      %1144 = vdwg.mxu0
      %s1145 = sadd.s32 %s336, 5
      %v1146 = vstv %s1145
      %vm1147 = vcmp.lt.s32.totalorder %v1146, %v335
      %v1148 = vsel %vm1147, 1, 0
      %1149 = vset.pattern.permute.xlu0 0
      %1150 = vperm.xlu0 %1149, %v1148
      %v1151 = vpop.permute.xlu0 %1150
      %vm1152 = vcmp.eq.s32.totalorder %v1151, 1
      %v1153 = vsel %vm1152, %v1140, 0.0
      %v1154 = vpack.c.bf16 %v1153, %v1153
      %s1155 = scalar_lea.vmem %s318, 20
      %1156 = vst.msk [vmem:[%s1155] sm:$0xf] %vm490, %v1154
      %v1157 = vsel %vm1152, %v1140, %v1024
      %v1158 = vsel %vm1152, %v1091, %v1025
      %s1159 = scalar_lea.vmem %s291, 24
      %v1160 = vld [vmem:[%s1159] sm:$0xf]
      %v1161 = vunpack.c.l.bf16 %v1160
      %v1162 = vpack.c.bf16 %v1157, %v1157
      %v1164 = vsel %vm348, %v1162, 0
      %1166 = vmatprep.subr.bf16.mxu0 0
      %1167 = vmatpush1.bf16.msra.mxu0 %v346
      %1168 = vmatprep.subr.bf16.mxu0 0
      %1169 = vmatpush1.bf16.msra.mxu0 0
      %1170 = vmatprep.subr.bf16.mxu0 0
      %1171 = vmatpush1.bf16.msra.mxu0 0
      %1172 = vmatprep.subr.bf16.mxu0 0
      %1173 = vmatpush1.bf16.msra.mxu0 0
      %1174 = vmatprep.subr.bf16.mxu0 0
      %1175 = vmatpush1.bf16.msra.mxu0 0
      %1176 = vmatprep.subr.bf16.mxu0 0
      %1177 = vmatpush1.bf16.msra.mxu0 0
      %1178 = vmatprep.subr.bf16.mxu0 0
      %1179 = vmatpush1.bf16.msra.mxu0 0
      %1180 = vmatprep.subr.bf16.mxu0 0
      %1181 = vmatpush1.bf16.msra.mxu0 0
      %1182 = vmatprep.subr.bf16.mxu0 0
      %1183 = vmatpush1.bf16.msra.mxu0 0
      %1184 = vmatprep.subr.bf16.mxu0 0
      %1185 = vmatpush1.bf16.msra.mxu0 0
      %1186 = vmatprep.subr.bf16.mxu0 0
      %1187 = vmatpush1.bf16.msra.mxu0 0
      %1188 = vmatprep.subr.bf16.mxu0 0
      %1189 = vmatpush1.bf16.msra.mxu0 0
      %1190 = vmatprep.subr.bf16.mxu0 0
      %1191 = vmatpush1.bf16.msra.mxu0 0
      %1192 = vmatprep.subr.bf16.mxu0 0
      %1193 = vmatpush1.bf16.msra.mxu0 0
      %1194 = vmatprep.subr.bf16.mxu0 0
      %1195 = vmatpush1.bf16.msra.mxu0 0
      %1196 = vmatprep.subr.bf16.mxu0 0
      %1197 = vmatpush1.bf16.msra.mxu0 0
      %1198 = vmatprep.mubr.bf16.mxu0 0
      %1199 = vmatmul.mubr.bf16.gmra.mrb[0].mxu0 %v1164
      %v1200 = vpop.f32.mrb[0].mxu0
      %v1201 = vadd.f32 0.0, %v1200
      %v1202 = vpop.f32.mrb[0].mxu0
      %v1203 = vpop.f32.mrb[0].mxu0
      %v1204 = vpop.f32.mrb[0].mxu0
      %1205 = vdwg.mxu0
      %v1206 = vadd.f32 %v1161, %v1201
      %v1207 = vxor.u32 %v1206, 2147483648
      %v1208 = vmul.f32 %v1207, 1.442695
      %v1209 = vpow.pop %v1208
      %v1210 = vadd.f32 %v1209, 1.0
      %v1211 = vrcp.pop %v1210
      %v1212 = vmul.f32 1.0, %v1211
      %v1213 = vtanh.pop %v1206
      %v1214 = vmul.f32 %v1212, %v1158
      %1216 = vrot.lane.b32.xlu0 %v1213, 32
      %v1217 = vpop.permute.xlu0 %1216
      %v1219 = vmul.f32 %v1212, %v1217
      %1221 = vrot.lane.b32.xlu0 %v1219, 32
      %v1222 = vpop.permute.xlu0 %1221
      %v1224 = vadd.f32 %v1214, %v1222
      %v1225 = vtanh.pop %v1224
      %1227 = vrot.lane.b32.xlu0 %v1225, 32
      %v1228 = vpop.permute.xlu0 %1227
      %v1230 = vmul.f32 %v1212, %v1228
      %v1231 = vpack.c.bf16 %v1230, %v1230
      %1233 = vrot.lane.b32.xlu0 %v1231, 64
      %v1234 = vpop.permute.xlu0 %1233
      %v1236 = vsel %vm437, %v1234, 0
      %1238 = vmatprep.subr.bf16.mxu0 0
      %1239 = vmatpush1.bf16.msra.mxu0 %v433
      %1240 = vmatprep.subr.bf16.mxu0 0
      %1241 = vmatpush1.bf16.msra.mxu0 %v434
      %1242 = vmatprep.subr.bf16.mxu0 0
      %1243 = vmatpush1.bf16.msra.mxu0 0
      %1244 = vmatprep.subr.bf16.mxu0 0
      %1245 = vmatpush1.bf16.msra.mxu0 0
      %1246 = vmatprep.subr.bf16.mxu0 0
      %1247 = vmatpush1.bf16.msra.mxu0 0
      %1248 = vmatprep.subr.bf16.mxu0 0
      %1249 = vmatpush1.bf16.msra.mxu0 0
      %1250 = vmatprep.subr.bf16.mxu0 0
      %1251 = vmatpush1.bf16.msra.mxu0 0
      %1252 = vmatprep.subr.bf16.mxu0 0
      %1253 = vmatpush1.bf16.msra.mxu0 0
      %1254 = vmatprep.subr.bf16.mxu0 0
      %1255 = vmatpush1.bf16.msra.mxu0 0
      %1256 = vmatprep.subr.bf16.mxu0 0
      %1257 = vmatpush1.bf16.msra.mxu0 0
      %1258 = vmatprep.subr.bf16.mxu0 0
      %1259 = vmatpush1.bf16.msra.mxu0 0
      %1260 = vmatprep.subr.bf16.mxu0 0
      %1261 = vmatpush1.bf16.msra.mxu0 0
      %1262 = vmatprep.subr.bf16.mxu0 0
      %1263 = vmatpush1.bf16.msra.mxu0 0
      %1264 = vmatprep.subr.bf16.mxu0 0
      %1265 = vmatpush1.bf16.msra.mxu0 0
      %1266 = vmatprep.subr.bf16.mxu0 0
      %1267 = vmatpush1.bf16.msra.mxu0 0
      %1268 = vmatprep.subr.bf16.mxu0 0
      %1269 = vmatpush1.bf16.msra.mxu0 0
      %1270 = vmatprep.mubr.bf16.mxu0 0
      %1271 = vmatmul.mubr.bf16.gmra.mrb[0].mxu0 %v1236
      %v1272 = vpop.f32.mrb[0].mxu0
      %v1273 = vadd.f32 0.0, %v1272
      %v1274 = vpop.f32.mrb[0].mxu0
      %v1275 = vpop.f32.mrb[0].mxu0
      %v1276 = vpop.f32.mrb[0].mxu0
      %1277 = vdwg.mxu0
      %s1278 = sadd.s32 %s336, 6
      %v1279 = vstv %s1278
      %vm1280 = vcmp.lt.s32.totalorder %v1279, %v335
      %v1281 = vsel %vm1280, 1, 0
      %1282 = vset.pattern.permute.xlu0 0
      %1283 = vperm.xlu0 %1282, %v1281
      %v1284 = vpop.permute.xlu0 %1283
      %vm1285 = vcmp.eq.s32.totalorder %v1284, 1
      %v1286 = vsel %vm1285, %v1273, 0.0
      %v1287 = vpack.c.bf16 %v1286, %v1286
      %s1288 = scalar_lea.vmem %s318, 24
      %1289 = vst.msk [vmem:[%s1288] sm:$0xf] %vm490, %v1287
      %v1290 = vsel %vm1285, %v1273, %v1157
      %v1291 = vsel %vm1285, %v1224, %v1158
      %s1292 = scalar_lea.vmem %s291, 28
      %v1293 = vld [vmem:[%s1292] sm:$0xf]
      %v1294 = vunpack.c.l.bf16 %v1293
      %v1295 = vpack.c.bf16 %v1290, %v1290
      %v1297 = vsel %vm348, %v1295, 0
      %1299 = vmatprep.subr.bf16.mxu0 0
      %1300 = vmatpush1.bf16.msra.mxu0 %v346
      %1301 = vmatprep.subr.bf16.mxu0 0
      %1302 = vmatpush1.bf16.msra.mxu0 0
      %1303 = vmatprep.subr.bf16.mxu0 0
      %1304 = vmatpush1.bf16.msra.mxu0 0
      %1305 = vmatprep.subr.bf16.mxu0 0
      %1306 = vmatpush1.bf16.msra.mxu0 0
      %1307 = vmatprep.subr.bf16.mxu0 0
      %1308 = vmatpush1.bf16.msra.mxu0 0
      %1309 = vmatprep.subr.bf16.mxu0 0
      %1310 = vmatpush1.bf16.msra.mxu0 0
      %1311 = vmatprep.subr.bf16.mxu0 0
      %1312 = vmatpush1.bf16.msra.mxu0 0
      %1313 = vmatprep.subr.bf16.mxu0 0
      %1314 = vmatpush1.bf16.msra.mxu0 0
      %1315 = vmatprep.subr.bf16.mxu0 0
      %1316 = vmatpush1.bf16.msra.mxu0 0
      %1317 = vmatprep.subr.bf16.mxu0 0
      %1318 = vmatpush1.bf16.msra.mxu0 0
      %1319 = vmatprep.subr.bf16.mxu0 0
      %1320 = vmatpush1.bf16.msra.mxu0 0
      %1321 = vmatprep.subr.bf16.mxu0 0
      %1322 = vmatpush1.bf16.msra.mxu0 0
      %1323 = vmatprep.subr.bf16.mxu0 0
      %1324 = vmatpush1.bf16.msra.mxu0 0
      %1325 = vmatprep.subr.bf16.mxu0 0
      %1326 = vmatpush1.bf16.msra.mxu0 0
      %1327 = vmatprep.subr.bf16.mxu0 0
      %1328 = vmatpush1.bf16.msra.mxu0 0
      %1329 = vmatprep.subr.bf16.mxu0 0
      %1330 = vmatpush1.bf16.msra.mxu0 0
      %1331 = vmatprep.mubr.bf16.mxu0 0
      %1332 = vmatmul.mubr.bf16.gmra.mrb[0].mxu0 %v1297
      %v1333 = vpop.f32.mrb[0].mxu0
      %v1334 = vadd.f32 0.0, %v1333
      %v1335 = vpop.f32.mrb[0].mxu0
      %v1336 = vpop.f32.mrb[0].mxu0
      %v1337 = vpop.f32.mrb[0].mxu0
      %1338 = vdwg.mxu0
      %v1339 = vadd.f32 %v1294, %v1334
      %v1340 = vxor.u32 %v1339, 2147483648
      %v1341 = vmul.f32 %v1340, 1.442695
      %v1342 = vpow.pop %v1341
      %v1343 = vadd.f32 %v1342, 1.0
      %v1344 = vrcp.pop %v1343
      %v1345 = vmul.f32 1.0, %v1344
      %v1346 = vtanh.pop %v1339
      %v1347 = vmul.f32 %v1345, %v1291
      %1349 = vrot.lane.b32.xlu0 %v1346, 32
      %v1350 = vpop.permute.xlu0 %1349
      %v1352 = vmul.f32 %v1345, %v1350
      %1354 = vrot.lane.b32.xlu0 %v1352, 32
      %v1355 = vpop.permute.xlu0 %1354
      %v1357 = vadd.f32 %v1347, %v1355
      %v1358 = vtanh.pop %v1357
      %1360 = vrot.lane.b32.xlu0 %v1358, 32
      %v1361 = vpop.permute.xlu0 %1360
      %v1363 = vmul.f32 %v1345, %v1361
      %v1364 = vpack.c.bf16 %v1363, %v1363
      %1366 = vrot.lane.b32.xlu0 %v1364, 64
      %v1367 = vpop.permute.xlu0 %1366
      %v1369 = vsel %vm437, %v1367, 0
      %1371 = vmatprep.subr.bf16.mxu0 0
      %1372 = vmatpush1.bf16.msra.mxu0 %v433
      %1373 = vmatprep.subr.bf16.mxu0 0
      %1374 = vmatpush1.bf16.msra.mxu0 %v434
      %1375 = vmatprep.subr.bf16.mxu0 0
      %1376 = vmatpush1.bf16.msra.mxu0 0
      %1377 = vmatprep.subr.bf16.mxu0 0
      %1378 = vmatpush1.bf16.msra.mxu0 0
      %1379 = vmatprep.subr.bf16.mxu0 0
      %1380 = vmatpush1.bf16.msra.mxu0 0
      %1381 = vmatprep.subr.bf16.mxu0 0
      %1382 = vmatpush1.bf16.msra.mxu0 0
      %1383 = vmatprep.subr.bf16.mxu0 0
      %1384 = vmatpush1.bf16.msra.mxu0 0
      %1385 = vmatprep.subr.bf16.mxu0 0
      %1386 = vmatpush1.bf16.msra.mxu0 0
      %1387 = vmatprep.subr.bf16.mxu0 0
      %1388 = vmatpush1.bf16.msra.mxu0 0
      %1389 = vmatprep.subr.bf16.mxu0 0
      %1390 = vmatpush1.bf16.msra.mxu0 0
      %1391 = vmatprep.subr.bf16.mxu0 0
      %1392 = vmatpush1.bf16.msra.mxu0 0
      %1393 = vmatprep.subr.bf16.mxu0 0
      %1394 = vmatpush1.bf16.msra.mxu0 0
      %1395 = vmatprep.subr.bf16.mxu0 0
      %1396 = vmatpush1.bf16.msra.mxu0 0
      %1397 = vmatprep.subr.bf16.mxu0 0
      %1398 = vmatpush1.bf16.msra.mxu0 0
      %1399 = vmatprep.subr.bf16.mxu0 0
      %1400 = vmatpush1.bf16.msra.mxu0 0
      %1401 = vmatprep.subr.bf16.mxu0 0
      %1402 = vmatpush1.bf16.msra.mxu0 0
      %1403 = vmatprep.mubr.bf16.mxu0 0
      %1404 = vmatmul.mubr.bf16.gmra.mrb[0].mxu0 %v1369
      %v1405 = vpop.f32.mrb[0].mxu0
      %v1406 = vadd.f32 0.0, %v1405
      %v1407 = vpop.f32.mrb[0].mxu0
      %v1408 = vpop.f32.mrb[0].mxu0
      %v1409 = vpop.f32.mrb[0].mxu0
      %1410 = vdwg.mxu0
      %s1411 = sadd.s32 %s336, 7
      %v1412 = vstv %s1411
      %vm1413 = vcmp.lt.s32.totalorder %v1412, %v335
      %v1414 = vsel %vm1413, 1, 0
      %1415 = vset.pattern.permute.xlu0 0
      %1416 = vperm.xlu0 %1415, %v1414
      %v1417 = vpop.permute.xlu0 %1416
      %vm1418 = vcmp.eq.s32.totalorder %v1417, 1
      %v1419 = vsel %vm1418, %v1406, 0.0
      %v1420 = vpack.c.bf16 %v1419, %v1419
      %s1421 = scalar_lea.vmem %s318, 28
      %1422 = vst.msk [vmem:[%s1421] sm:$0xf] %vm490, %v1420
      %v1423 = vsel %vm1418, %v1406, %v1290
      %v1424 = vsel %vm1418, %v1357, %v1291
      %1425 = vst.msk [vmem:[#allocation2] sm:$0xff] %vm348, %v1423
      %1427 = vrot.lane.b32.xlu0 %v1424, 96
      %v1428 = vpop.permute.xlu0 %1427
      %1430 = vst.msk [vmem:[#allocation3] sm:$0xff] %vm437, %v1428
      %s1431 = smul.u32 8, %s22
      %p1432 = scmp.lt.s32.totalorder %s20, 1
      %s1433 = scalar_select %p1432, %s20, 1
      %p1434 = scmp.lt.s32.totalorder %s1431, 7
      %s1435 = scalar_select %p1434, %s1431, 7
      %p1436 = scmp.lt.s32.totalorder %s21, 0
      %s1437 = scalar_select %p1436, %s21, 0
      %s1438 = sadd.s32 %s1437, %s1435
      %s1439 = smul.addr %s1433, 8
      %s1440 = sadd.s32 %s1438, %s1439
      %s1441 = smul.addr %s1440, 4
      %s1442 = scalar_lea.vmem %s4, %s1441
      // Predicated region
      $region41: #{rnn_model_p_forward.2} parent=35 // pred_check
        %p1443 = pneg %p164
      $region42: #{rnn_model_p_forward.2} parent=35 // pred_check_branch
        %1445 = sbr.rel (%p1443) target = $region44
      $region43: #{rnn_model_p_forward.2} parent=35 // pred_region
        %s1446 = smul.u32 8, %s22
      $region44: #{rnn_model_p_forward.2} parent=35 // pred_fallthru
        _
    $region36: #{rnn_model_p_forward.2} parent=5 // pred_fallthru
      _
    %p1447 = scmp.le.s32.totalorder 2, %s10
    // Predicated region
    $region45: #{rnn_model_p_forward.2} parent=5 // pred_check
      %p1448 = pneg %p1447
    $region46: #{rnn_model_p_forward.2} parent=5 // pred_check_branch
      %1450 = sbr.rel (%p1448) target = $region48
    $region47: #{rnn_model_p_forward.2} parent=5 // pred_region
      %s1451 = ssub.s32 %s10, 2
      // Predicated region
      $region49: #{rnn_model_p_forward.2} parent=47 // pred_check
        %p1452 = pneg %p170
      $region50: #{rnn_model_p_forward.2} parent=47 // pred_check_branch
        %1454 = sbr.rel (%p1452) target = $region52
      $region51: #{rnn_model_p_forward.2} parent=47 // pred_region
        %s1455 = smul.u32 8, %s25
        %p1456 = scmp.lt.s32.totalorder %s23, 1
        %s1457 = scalar_select %p1456, %s23, 1
        %p1458 = scmp.lt.s32.totalorder %s1455, 7
        %s1459 = scalar_select %p1458, %s1455, 7
        %p1460 = scmp.lt.s32.totalorder %s24, 0
        %s1461 = scalar_select %p1460, %s24, 0
        %s1462 = sadd.s32 %s1461, %s1459
        %s1463 = smul.addr %s1457, 8
        %s1464 = sadd.s32 %s1462, %s1463
        %s1465 = smul.addr %s1464, 4
        %s1466 = scalar_lea.vmem %s4, %s1465
      $region52: #{rnn_model_p_forward.2} parent=47 // pred_fallthru
        _
    $region48: #{rnn_model_p_forward.2} parent=5 // pred_fallthru
      _
  $region6: #{rnn_model_p_forward.2} parent=0 // loop_footer
    %s14 = sadd.s32 1, %s10
  $region7: #{rnn_model_p_forward.2} parent=0 // loop_footer_branch
    %9 = sbr.rel target = $region3
  $region8: #{rnn_model_p_forward.2} parent=0 // loop_exit
    _

// kernel: rnn_model_p_forward.3
$region0: #{rnn_model_p_forward.3}
  #allocation0 [shape = 'u32[]', space=smem, size = 0x4, offset = 0x4, fixed_abs, tag = 'smem constant byte address 0x4 - core index']
  #allocation1 [shape = 'u32[144,128]{1,0:T(1,128)}', space=vmem, size = 0x12000, scoped, tag = 'internal scratch']
  #allocation2 [shape = 'f32[8,16]{1,0:T(8,128)}', space=vmem, size = 0x1000, scoped, tag = 'scratch operand']
  #allocation3 [shape = 'f32[8,32]{1,0:T(8,128)}', space=vmem, size = 0x1000, scoped, tag = 'scratch operand']
  %s0 = inlined_call_operand.vmem [shape: bf16[2,8,8,128], index: 0, kind: input, shape index: {}]
  %s1 = inlined_call_operand.vmem [shape: s32[8,1], index: 1, kind: input, shape index: {}]
  %s2 = inlined_call_operand.vmem [shape: bf16[2,16,128], index: 2, kind: input, shape index: {}]
  %s3 = inlined_call_operand.vmem [shape: bf16[2,32,16], index: 3, kind: input, shape index: {}]
  %s4 = inlined_call_operand.vmem [shape: f32[2,8,8,16], index: 4, kind: output, shape index: {}]
  %s5 = sld [smem:[#allocation0]]
  $region53: #{rnn_model_p_forward.3} parent=0
    _
  %s7 = ssub.s32 1, %s5
  %s8 = scalar_select 0, %s7, %s5
  loop: start=0, step=1, limit=4
  $region2: #{rnn_model_p_forward.3} parent=0 // loop_pre_header
    _
  $region3: #{rnn_model_p_forward.3} parent=0 // loop_header
    %s10 = sphi 0, %s14
    %p11 = scmp.ge.s32.totalorder %s10, 4
    %s17 = sphi 0, %s36
    %s18 = sphi 0, %s32
    %s19 = sphi 0, %s28
    %s20 = sphi 0, %s17
    %s21 = sphi 0, %s18
    %s22 = sphi 0, %s19
    %s23 = sphi 0, %s20
    %s24 = sphi 0, %s21
    %s25 = sphi 0, %s22
    %s43 = sphi 0, %s45
    %s46 = sphi 0, %s43
    %s47 = sphi 0, %s46
    %s63 = sphi 0, %s47
    %s69 = sphi 0, %s71
    %s72 = sphi 0, %s69
    %s73 = sphi 0, %s72
    %s89 = sphi 0, %s73
    %s95 = sphi 0, %s97
    %s98 = sphi 0, %s95
    %s99 = sphi 0, %s98
    %s115 = sphi 0, %s99
    %s121 = sphi 0, %s123
    %s124 = sphi 0, %s121
    %s125 = sphi 0, %s124
    %s141 = sphi 0, %s125
    %s151 = sphi 0, %s153
    %s154 = sphi 0, %s151
    %s155 = sphi 0, %s154
    %s171 = sphi 0, %s155
  $region4: #{rnn_model_p_forward.3} parent=0 // loop_header_branch
    %13 = sbr.rel (%p11) target = $region8
  $region5: #{rnn_model_p_forward.3} parent=0 // loop_body
    %s15 = ssub.s32 %s10, 1
    %s16 = ssub.s32 %s10, 2
    %s26 = sadd.s32 1, %s19
    %p27 = scmp.ge.s32.totalorder %s26, 1
    %s28 = scalar_select %p27, 0, %s26
    %s29 = sadd.s32 1, %s18
    %s30 = scalar_select %p27, %s29, %s18
    %p31 = scmp.ge.s32.totalorder %s30, 1
    %s32 = scalar_select %p31, 0, %s30
    %s33 = sadd.s32 1, %s17
    %s34 = scalar_select %p31, %s33, %s17
    %p35 = scmp.ge.s32.totalorder %s34, 2
    %s36 = scalar_select %p35, 0, %s34
    %s37 = ssub.s32 %s17, %s36
    %s38 = ssub.s32 %s19, %s28
    %s39 = sor.u32 %s37, %s38
    %s40 = ssub.s32 %s18, %s32
    %s41 = sor.u32 %s39, %s40
    %p42 = scmp.eq.s32.totalorder %s41, 0
    %s44 = sadd.s32 %s43, 1
    %s45 = scalar_select %p42, %s43, %s44
    %p48 = pneg %p42
    %p49 = scmp.eq.s32.totalorder %s10, 1
    %p50 = por %p48, %p49
    %p51 = scmp.ne.s32.totalorder %s43, %s46
    %p52 = scmp.eq.s32.totalorder %s10, 0
    %p53 = por %p51, %p52
    %p54 = scmp.ne.s32.totalorder %s43, %s46
    %p55 = scmp.eq.s32.totalorder %s15, 1
    %p56 = por %p54, %p55
    %p57 = scmp.ne.s32.totalorder %s46, %s47
    %p58 = scmp.eq.s32.totalorder %s15, 0
    %p59 = por %p57, %p58
    %p60 = scmp.ne.s32.totalorder %s46, %s47
    %p61 = scmp.eq.s32.totalorder %s16, 1
    %p62 = por %p60, %p61
    %p64 = scmp.ne.s32.totalorder %s47, %s63
    %p65 = scmp.eq.s32.totalorder %s16, 0
    %p66 = por %p64, %p65
    %s67 = ssub.s32 %s18, %s32
    %p68 = scmp.eq.s32.totalorder %s67, 0
    %s70 = sadd.s32 %s69, 1
    %s71 = scalar_select %p68, %s69, %s70
    %p74 = pneg %p68
    %p75 = scmp.eq.s32.totalorder %s10, 1
    %p76 = por %p74, %p75
    %p77 = scmp.ne.s32.totalorder %s69, %s72
    %p78 = scmp.eq.s32.totalorder %s10, 0
    %p79 = por %p77, %p78
    %p80 = scmp.ne.s32.totalorder %s69, %s72
    %p81 = scmp.eq.s32.totalorder %s15, 1
    %p82 = por %p80, %p81
    %p83 = scmp.ne.s32.totalorder %s72, %s73
    %p84 = scmp.eq.s32.totalorder %s15, 0
    %p85 = por %p83, %p84
    %p86 = scmp.ne.s32.totalorder %s72, %s73
    %p87 = scmp.eq.s32.totalorder %s16, 1
    %p88 = por %p86, %p87
    %p90 = scmp.ne.s32.totalorder %s73, %s89
    %p91 = scmp.eq.s32.totalorder %s16, 0
    %p92 = por %p90, %p91
    %s93 = ssub.s32 %s17, %s36
    %p94 = scmp.eq.s32.totalorder %s93, 0
    %s96 = sadd.s32 %s95, 1
    %s97 = scalar_select %p94, %s95, %s96
    %p100 = pneg %p94
    %p101 = scmp.eq.s32.totalorder %s10, 1
    %p102 = por %p100, %p101
    %p103 = scmp.ne.s32.totalorder %s95, %s98
    %p104 = scmp.eq.s32.totalorder %s10, 0
    %p105 = por %p103, %p104
    %p106 = scmp.ne.s32.totalorder %s95, %s98
    %p107 = scmp.eq.s32.totalorder %s15, 1
    %p108 = por %p106, %p107
    %p109 = scmp.ne.s32.totalorder %s98, %s99
    %p110 = scmp.eq.s32.totalorder %s15, 0
    %p111 = por %p109, %p110
    %p112 = scmp.ne.s32.totalorder %s98, %s99
    %p113 = scmp.eq.s32.totalorder %s16, 1
    %p114 = por %p112, %p113
    %p116 = scmp.ne.s32.totalorder %s99, %s115
    %p117 = scmp.eq.s32.totalorder %s16, 0
    %p118 = por %p116, %p117
    %s119 = ssub.s32 %s17, %s36
    %p120 = scmp.eq.s32.totalorder %s119, 0
    %s122 = sadd.s32 %s121, 1
    %s123 = scalar_select %p120, %s121, %s122
    %p126 = pneg %p120
    %p127 = scmp.eq.s32.totalorder %s10, 1
    %p128 = por %p126, %p127
    %p129 = scmp.ne.s32.totalorder %s121, %s124
    %p130 = scmp.eq.s32.totalorder %s10, 0
    %p131 = por %p129, %p130
    %p132 = scmp.ne.s32.totalorder %s121, %s124
    %p133 = scmp.eq.s32.totalorder %s15, 1
    %p134 = por %p132, %p133
    %p135 = scmp.ne.s32.totalorder %s124, %s125
    %p136 = scmp.eq.s32.totalorder %s15, 0
    %p137 = por %p135, %p136
    %p138 = scmp.ne.s32.totalorder %s124, %s125
    %p139 = scmp.eq.s32.totalorder %s16, 1
    %p140 = por %p138, %p139
    %p142 = scmp.ne.s32.totalorder %s125, %s141
    %p143 = scmp.eq.s32.totalorder %s16, 0
    %p144 = por %p142, %p143
    %s145 = ssub.s32 %s17, %s36
    %s146 = ssub.s32 %s19, %s28
    %s147 = sor.u32 %s145, %s146
    %s148 = ssub.s32 %s18, %s32
    %s149 = sor.u32 %s147, %s148
    %p150 = scmp.eq.s32.totalorder %s149, 0
    %s152 = sadd.s32 %s151, 1
    %s153 = scalar_select %p150, %s151, %s152
    %p156 = pneg %p150
    %p157 = scmp.eq.s32.totalorder %s10, 1
    %p158 = por %p156, %p157
    %p159 = scmp.ne.s32.totalorder %s151, %s154
    %p160 = scmp.eq.s32.totalorder %s10, 0
    %p161 = por %p159, %p160
    %p162 = scmp.ne.s32.totalorder %s151, %s154
    %p163 = scmp.eq.s32.totalorder %s15, 1
    %p164 = por %p162, %p163
    %p165 = scmp.ne.s32.totalorder %s154, %s155
    %p166 = scmp.eq.s32.totalorder %s15, 0
    %p167 = por %p165, %p166
    %p168 = scmp.ne.s32.totalorder %s154, %s155
    %p169 = scmp.eq.s32.totalorder %s16, 1
    %p170 = por %p168, %p169
    %p172 = scmp.ne.s32.totalorder %s155, %s171
    %p173 = scmp.eq.s32.totalorder %s16, 0
    %p174 = por %p172, %p173
    %p175 = scmp.le.s32.totalorder 1, %s10
    %p176 = scmp.lt.s32.totalorder %s10, 3
    %p177 = pnand %p175, %p176
    %p178 = pneg %p177
    // Predicated region
    $region9: #{rnn_model_p_forward.3} parent=5 // pred_check
      _
    $region10: #{rnn_model_p_forward.3} parent=5 // pred_check_branch
      %180 = sbr.rel (%p177) target = $region12
    $region11: #{rnn_model_p_forward.3} parent=5 // pred_region
      %s181 = ssub.s32 %s10, 1
      // Predicated region
      $region13: #{rnn_model_p_forward.3} parent=11 // pred_check
        %p182 = pneg %p85
      $region14: #{rnn_model_p_forward.3} parent=11 // pred_check_branch
        %184 = sbr.rel (%p182) target = $region16
      $region15: #{rnn_model_p_forward.3} parent=11 // pred_region
        %p185 = scmp.lt.s32.totalorder %s21, 0
        %s186 = scalar_select %p185, %s21, 0
        %s187 = smul.addr %s186, 8
        %s188 = scalar_lea.vmem %s1, %s187
      $region16: #{rnn_model_p_forward.3} parent=11 // pred_fallthru
        _
    $region12: #{rnn_model_p_forward.3} parent=5 // pred_fallthru
      _
    %p189 = scmp.lt.s32.totalorder %s10, 2
    // Predicated region
    $region17: #{rnn_model_p_forward.3} parent=5 // pred_check
      %p190 = pneg %p189
    $region18: #{rnn_model_p_forward.3} parent=5 // pred_check_branch
      %192 = sbr.rel (%p190) target = $region20
    $region19: #{rnn_model_p_forward.3} parent=5 // pred_region
      // Predicated region
      $region21: #{rnn_model_p_forward.3} parent=19 // pred_check
        %p193 = pneg %p53
      $region22: #{rnn_model_p_forward.3} parent=19 // pred_check_branch
        %195 = sbr.rel (%p193) target = $region24
      $region23: #{rnn_model_p_forward.3} parent=19 // pred_region
        %s196 = smul.u32 8, %s19
        %p197 = scmp.lt.s32.totalorder %s17, 1
        %s198 = scalar_select %p197, %s17, 1
        %p199 = scmp.lt.s32.totalorder %s196, 7
        %s200 = scalar_select %p199, %s196, 7
        %p201 = scmp.lt.s32.totalorder %s18, 0
        %s202 = scalar_select %p201, %s18, 0
        %s203 = sadd.s32 %s202, %s200
        %s204 = smul.addr %s198, 8
        %s205 = sadd.s32 %s203, %s204
        %s206 = smul.addr %s205, 4
        %s207 = scalar_lea.vmem %s0, %s206
        %s208 = smul.u32 8, %s19
      $region24: #{rnn_model_p_forward.3} parent=19 // pred_fallthru
        _
      // Predicated region
      $region25: #{rnn_model_p_forward.3} parent=19 // pred_check
        %p209 = pneg %p105
      $region26: #{rnn_model_p_forward.3} parent=19 // pred_check_branch
        %211 = sbr.rel (%p209) target = $region28
      $region27: #{rnn_model_p_forward.3} parent=19 // pred_region
        %p212 = scmp.lt.s32.totalorder %s17, 1
        %s213 = scalar_select %p212, %s17, 1
        %s214 = smul.addr %s213, 2
        %s215 = smul.addr %s214, 4
        %s216 = scalar_lea.vmem %s2, %s215
      $region28: #{rnn_model_p_forward.3} parent=19 // pred_fallthru
        _
      // Predicated region
      $region29: #{rnn_model_p_forward.3} parent=19 // pred_check
        %p217 = pneg %p131
      $region30: #{rnn_model_p_forward.3} parent=19 // pred_check_branch
        %219 = sbr.rel (%p217) target = $region32
      $region31: #{rnn_model_p_forward.3} parent=19 // pred_region
        %p220 = scmp.lt.s32.totalorder %s17, 1
        %s221 = scalar_select %p220, %s17, 1
        %s222 = smul.addr %s221, 4
        %s223 = smul.addr %s222, 4
        %s224 = scalar_lea.vmem %s3, %s223
      $region32: #{rnn_model_p_forward.3} parent=19 // pred_fallthru
        _
    $region20: #{rnn_model_p_forward.3} parent=5 // pred_fallthru
      _
    %p225 = scmp.le.s32.totalorder 1, %s10
    %p226 = scmp.lt.s32.totalorder %s10, 3
    %p227 = pnand %p225, %p226
    %p228 = pneg %p227
    // Predicated region
    $region33: #{rnn_model_p_forward.3} parent=5 // pred_check
      _
    $region34: #{rnn_model_p_forward.3} parent=5 // pred_check_branch
      %230 = sbr.rel (%p227) target = $region36
    $region35: #{rnn_model_p_forward.3} parent=5 // pred_region
      %s231 = ssub.s32 %s10, 1
      %s232 = smul.u32 8, %s22
      %p233 = scmp.lt.s32.totalorder %s20, 1
      %s234 = scalar_select %p233, %s20, 1
      %p235 = scmp.lt.s32.totalorder %s232, 7
      %s236 = scalar_select %p235, %s232, 7
      %p237 = scmp.lt.s32.totalorder %s21, 0
      %s238 = scalar_select %p237, %s21, 0
      %s239 = sadd.s32 %s238, %s236
      %s240 = smul.addr %s234, 8
      %s241 = sadd.s32 %s239, %s240
      %s242 = smul.addr %s241, 4
      %s243 = scalar_lea.vmem %s0, %s242
      %p244 = pneg %p59
      %p245 = pneg %p56
      %p246 = scmp.lt.s32.totalorder %s21, 0
      %s247 = scalar_select %p246, %s21, 0
      %s248 = smul.addr %s247, 8
      %s249 = scalar_lea.vmem %s1, %s248
      %p250 = pneg %p85
      %p251 = pneg %p82
      %p252 = scmp.lt.s32.totalorder %s20, 1
      %s253 = scalar_select %p252, %s20, 1
      %s254 = smul.addr %s253, 2
      %s255 = smul.addr %s254, 4
      %s256 = scalar_lea.vmem %s2, %s255
      %p257 = pneg %p111
      %p258 = pneg %p108
      %p259 = scmp.lt.s32.totalorder %s20, 1
      %s260 = scalar_select %p259, %s20, 1
      %s261 = smul.addr %s260, 4
      %s262 = smul.addr %s261, 4
      %s263 = scalar_lea.vmem %s3, %s262
      %p264 = pneg %p137
      %p265 = pneg %p134
      %p266 = pneg %p167
      %p267 = pneg %p164
      %s268 = smul.u32 8, %s22
      %p269 = scmp.lt.s32.totalorder %s20, 1
      %s270 = scalar_select %p269, %s20, 1
      %p271 = scmp.lt.s32.totalorder %s268, 7
      %s272 = scalar_select %p271, %s268, 7
      %p273 = scmp.lt.s32.totalorder %s21, 0
      %s274 = scalar_select %p273, %s21, 0
      %s275 = sadd.s32 %s274, %s272
      %s276 = smul.addr %s270, 8
      %s277 = sadd.s32 %s275, %s276
      %s278 = smul.addr %s277, 8
      %s279 = scalar_lea.vmem %s4, %s278
      %s280 = smul.u32 8, %s22
      %p281 = scmp.lt.s32.totalorder %s20, 1
      %s282 = scalar_select %p281, %s20, 1
      %p283 = scmp.lt.s32.totalorder %s280, 7
      %s284 = scalar_select %p283, %s280, 7
      %p285 = scmp.lt.s32.totalorder %s21, 0
      %s286 = scalar_select %p285, %s21, 0
      %s287 = sadd.s32 %s286, %s284
      %s288 = smul.addr %s282, 8
      %s289 = sadd.s32 %s287, %s288
      %s290 = smul.addr %s289, 4
      %s291 = scalar_lea.vmem %s0, %s290
      %s292 = smul.u32 8, %s22
      %p293 = scmp.lt.s32.totalorder %s21, 0
      %s294 = scalar_select %p293, %s21, 0
      %s295 = smul.addr %s294, 8
      %s296 = scalar_lea.vmem %s1, %s295
      %p297 = scmp.lt.s32.totalorder %s20, 1
      %s298 = scalar_select %p297, %s20, 1
      %s299 = smul.addr %s298, 2
      %s300 = smul.addr %s299, 4
      %s301 = scalar_lea.vmem %s2, %s300
      %p302 = scmp.lt.s32.totalorder %s20, 1
      %s303 = scalar_select %p302, %s20, 1
      %s304 = smul.addr %s303, 4
      %s305 = smul.addr %s304, 4
      %s306 = scalar_lea.vmem %s3, %s305
      %s307 = smul.u32 8, %s22
      %p308 = scmp.lt.s32.totalorder %s20, 1
      %s309 = scalar_select %p308, %s20, 1
      %p310 = scmp.lt.s32.totalorder %s307, 7
      %s311 = scalar_select %p310, %s307, 7
      %p312 = scmp.lt.s32.totalorder %s21, 0
      %s313 = scalar_select %p312, %s21, 0
      %s314 = sadd.s32 %s313, %s311
      %s315 = smul.addr %s309, 8
      %s316 = sadd.s32 %s314, %s315
      %s317 = smul.addr %s316, 8
      %s318 = scalar_lea.vmem %s4, %s317
      %s319 = smul.u32 8, %s22
      %p321 = scmp.eq.s32.totalorder %s22, 0
      // Predicated region
      $region37: #{rnn_model_p_forward.3} parent=35 // pred_check
        %p322 = pneg %p321
      $region38: #{rnn_model_p_forward.3} parent=35 // pred_check_branch
        %324 = sbr.rel (%p322) target = $region40
      $region39: #{rnn_model_p_forward.3} parent=35 // pred_region
        %vm325 = vcmask 130048
        %326 = vst.msk [vmem:[#allocation2] sm:$0xff] %vm325, 0.0
        %vm327 = vcmask 261120
        %328 = vst.msk [vmem:[#allocation3] sm:$0xff] %vm327, 0.0
      $region40: #{rnn_model_p_forward.3} parent=35 // pred_fallthru
        _
      %v329 = vld [vmem:[%s301] sm:$0xf]
      %v330 = vld [vmem:[%s301 + $0x4] sm:$0xf]
      %v331 = vld [vmem:[%s306] sm:$0xf]
      %v332 = vld [vmem:[%s306 + $0x4] sm:$0xf]
      %v333 = vld [vmem:[%s306 + $0x8] sm:$0xf]
      %v334 = vld [vmem:[%s306 + $0xc] sm:$0xf]
      %v335 = vld [vmem:[%s296] sm:$0xff]
      %s336 = smul.u32 %s22, 8
      %v337 = vld [vmem:[#allocation2] sm:$0xff]
      %v338 = vld [vmem:[#allocation3] sm:$0xff]
      %v339 = vld [vmem:[%s291] sm:$0xf]
      %v340 = vunpack.c.l.bf16 %v339
      %v341 = vpack.c.bf16 %v337, %v337
      %v344 = vunpack.c.l.b16 %v329
      %v345 = vunpack.c.l.b16 %v330
      %v346 = vpack.c.b16 %v345, %v344
      %vm348 = vcmask 130048
      %v350 = vsel %vm348, %v341, 0
      %352 = vmatprep.subr.bf16.mxu0 0
      %353 = vmatpush1.bf16.msra.mxu0 %v346
      %354 = vmatprep.subr.bf16.mxu0 0
      %355 = vmatpush1.bf16.msra.mxu0 0
      %356 = vmatprep.subr.bf16.mxu0 0
      %357 = vmatpush1.bf16.msra.mxu0 0
      %358 = vmatprep.subr.bf16.mxu0 0
      %359 = vmatpush1.bf16.msra.mxu0 0
      %360 = vmatprep.subr.bf16.mxu0 0
      %361 = vmatpush1.bf16.msra.mxu0 0
      %362 = vmatprep.subr.bf16.mxu0 0
      %363 = vmatpush1.bf16.msra.mxu0 0
      %364 = vmatprep.subr.bf16.mxu0 0
      %365 = vmatpush1.bf16.msra.mxu0 0
      %366 = vmatprep.subr.bf16.mxu0 0
      %367 = vmatpush1.bf16.msra.mxu0 0
      %368 = vmatprep.subr.bf16.mxu0 0
      %369 = vmatpush1.bf16.msra.mxu0 0
      %370 = vmatprep.subr.bf16.mxu0 0
      %371 = vmatpush1.bf16.msra.mxu0 0
      %372 = vmatprep.subr.bf16.mxu0 0
      %373 = vmatpush1.bf16.msra.mxu0 0
      %374 = vmatprep.subr.bf16.mxu0 0
      %375 = vmatpush1.bf16.msra.mxu0 0
      %376 = vmatprep.subr.bf16.mxu0 0
      %377 = vmatpush1.bf16.msra.mxu0 0
      %378 = vmatprep.subr.bf16.mxu0 0
      %379 = vmatpush1.bf16.msra.mxu0 0
      %380 = vmatprep.subr.bf16.mxu0 0
      %381 = vmatpush1.bf16.msra.mxu0 0
      %382 = vmatprep.subr.bf16.mxu0 0
      %383 = vmatpush1.bf16.msra.mxu0 0
      %384 = vmatprep.mubr.bf16.mxu0 0
      %385 = vmatmul.mubr.bf16.gmra.mrb[0].mxu0 %v350
      %v386 = vpop.f32.mrb[0].mxu0
      %v387 = vadd.f32 0.0, %v386
      %v388 = vpop.f32.mrb[0].mxu0
      %v389 = vpop.f32.mrb[0].mxu0
      %v390 = vpop.f32.mrb[0].mxu0
      %391 = vdwg.mxu0
      %v392 = vadd.f32 %v340, %v387
      %v393 = vxor.u32 %v392, 2147483648
      %v394 = vmul.f32 %v393, 1.442695
      %v395 = vpow.pop %v394
      %v396 = vadd.f32 %v395, 1.0
      %v397 = vrcp.pop %v396
      %v398 = vmul.f32 1.0, %v397
      %v399 = vtanh.pop %v392
      %401 = vrot.lane.b32.xlu0 %v338, 32
      %v402 = vpop.permute.xlu0 %401
      %v404 = vmul.f32 %v398, %v402
      %406 = vrot.lane.b32.xlu0 %v399, 32
      %v407 = vpop.permute.xlu0 %406
      %v409 = vmul.f32 %v398, %v407
      %411 = vrot.lane.b32.xlu0 %v409, 32
      %v412 = vpop.permute.xlu0 %411
      %v414 = vadd.f32 %v404, %v412
      %v415 = vtanh.pop %v414
      %417 = vrot.lane.b32.xlu0 %v415, 32
      %v418 = vpop.permute.xlu0 %417
      %v420 = vmul.f32 %v398, %v418
      %v421 = vpack.c.bf16 %v420, %v420
      %423 = vrot.lane.b32.xlu0 %v421, 64
      %v424 = vpop.permute.xlu0 %423
      %v429 = vunpack.c.l.b16 %v331
      %v430 = vunpack.c.l.b16 %v332
      %v431 = vunpack.c.l.b16 %v333
      %v432 = vunpack.c.l.b16 %v334
      %v433 = vpack.c.b16 %v430, %v429
      %v434 = vpack.c.b16 %v432, %v431
      %vm437 = vcmask 261120
      %v439 = vsel %vm437, %v424, 0
      %441 = vmatprep.subr.bf16.mxu0 0
      %442 = vmatpush1.bf16.msra.mxu0 %v433
      %443 = vmatprep.subr.bf16.mxu0 0
      %444 = vmatpush1.bf16.msra.mxu0 %v434
      %445 = vmatprep.subr.bf16.mxu0 0
      %446 = vmatpush1.bf16.msra.mxu0 0
      %447 = vmatprep.subr.bf16.mxu0 0
      %448 = vmatpush1.bf16.msra.mxu0 0
      %449 = vmatprep.subr.bf16.mxu0 0
      %450 = vmatpush1.bf16.msra.mxu0 0
      %451 = vmatprep.subr.bf16.mxu0 0
      %452 = vmatpush1.bf16.msra.mxu0 0
      %453 = vmatprep.subr.bf16.mxu0 0
      %454 = vmatpush1.bf16.msra.mxu0 0
      %455 = vmatprep.subr.bf16.mxu0 0
      %456 = vmatpush1.bf16.msra.mxu0 0
      %457 = vmatprep.subr.bf16.mxu0 0
      %458 = vmatpush1.bf16.msra.mxu0 0
      %459 = vmatprep.subr.bf16.mxu0 0
      %460 = vmatpush1.bf16.msra.mxu0 0
      %461 = vmatprep.subr.bf16.mxu0 0
      %462 = vmatpush1.bf16.msra.mxu0 0
      %463 = vmatprep.subr.bf16.mxu0 0
      %464 = vmatpush1.bf16.msra.mxu0 0
      %465 = vmatprep.subr.bf16.mxu0 0
      %466 = vmatpush1.bf16.msra.mxu0 0
      %467 = vmatprep.subr.bf16.mxu0 0
      %468 = vmatpush1.bf16.msra.mxu0 0
      %469 = vmatprep.subr.bf16.mxu0 0
      %470 = vmatpush1.bf16.msra.mxu0 0
      %471 = vmatprep.subr.bf16.mxu0 0
      %472 = vmatpush1.bf16.msra.mxu0 0
      %473 = vmatprep.mubr.bf16.mxu0 0
      %474 = vmatmul.mubr.bf16.gmra.mrb[0].mxu0 %v439
      %v475 = vpop.f32.mrb[0].mxu0
      %v476 = vadd.f32 0.0, %v475
      %v477 = vpop.f32.mrb[0].mxu0
      %v478 = vpop.f32.mrb[0].mxu0
      %v479 = vpop.f32.mrb[0].mxu0
      %480 = vdwg.mxu0
      %v481 = vstv %s336
      %vm482 = vcmp.lt.s32.totalorder %v481, %v335
      %v483 = vsel %vm482, 1, 0
      %484 = vset.pattern.permute.xlu0 0
      %485 = vperm.xlu0 %484, %v483
      %v486 = vpop.permute.xlu0 %485
      %vm487 = vcmp.eq.s32.totalorder %v486, 1
      %v488 = vsel %vm487, %v476, 0.0
      %489 = vst.msk [vmem:[%s318] sm:$0xff] %vm348, %v488
      %v490 = vsel %vm487, %v476, %v337
      %v491 = vsel %vm487, %v414, %v402
      %s492 = scalar_lea.vmem %s291, 4
      %v493 = vld [vmem:[%s492] sm:$0xf]
      %v494 = vunpack.c.l.bf16 %v493
      %v495 = vpack.c.bf16 %v490, %v490
      %v497 = vsel %vm348, %v495, 0
      %499 = vmatprep.subr.bf16.mxu0 0
      %500 = vmatpush1.bf16.msra.mxu0 %v346
      %501 = vmatprep.subr.bf16.mxu0 0
      %502 = vmatpush1.bf16.msra.mxu0 0
      %503 = vmatprep.subr.bf16.mxu0 0
      %504 = vmatpush1.bf16.msra.mxu0 0
      %505 = vmatprep.subr.bf16.mxu0 0
      %506 = vmatpush1.bf16.msra.mxu0 0
      %507 = vmatprep.subr.bf16.mxu0 0
      %508 = vmatpush1.bf16.msra.mxu0 0
      %509 = vmatprep.subr.bf16.mxu0 0
      %510 = vmatpush1.bf16.msra.mxu0 0
      %511 = vmatprep.subr.bf16.mxu0 0
      %512 = vmatpush1.bf16.msra.mxu0 0
      %513 = vmatprep.subr.bf16.mxu0 0
      %514 = vmatpush1.bf16.msra.mxu0 0
      %515 = vmatprep.subr.bf16.mxu0 0
      %516 = vmatpush1.bf16.msra.mxu0 0
      %517 = vmatprep.subr.bf16.mxu0 0
      %518 = vmatpush1.bf16.msra.mxu0 0
      %519 = vmatprep.subr.bf16.mxu0 0
      %520 = vmatpush1.bf16.msra.mxu0 0
      %521 = vmatprep.subr.bf16.mxu0 0
      %522 = vmatpush1.bf16.msra.mxu0 0
      %523 = vmatprep.subr.bf16.mxu0 0
      %524 = vmatpush1.bf16.msra.mxu0 0
      %525 = vmatprep.subr.bf16.mxu0 0
      %526 = vmatpush1.bf16.msra.mxu0 0
      %527 = vmatprep.subr.bf16.mxu0 0
      %528 = vmatpush1.bf16.msra.mxu0 0
      %529 = vmatprep.subr.bf16.mxu0 0
      %530 = vmatpush1.bf16.msra.mxu0 0
      %531 = vmatprep.mubr.bf16.mxu0 0
      %532 = vmatmul.mubr.bf16.gmra.mrb[0].mxu0 %v497
      %v533 = vpop.f32.mrb[0].mxu0
      %v534 = vadd.f32 0.0, %v533
      %v535 = vpop.f32.mrb[0].mxu0
      %v536 = vpop.f32.mrb[0].mxu0
      %v537 = vpop.f32.mrb[0].mxu0
      %538 = vdwg.mxu0
      %v539 = vadd.f32 %v494, %v534
      %v540 = vxor.u32 %v539, 2147483648
      %v541 = vmul.f32 %v540, 1.442695
      %v542 = vpow.pop %v541
      %v543 = vadd.f32 %v542, 1.0
      %v544 = vrcp.pop %v543
      %v545 = vmul.f32 1.0, %v544
      %v546 = vtanh.pop %v539
      %v547 = vmul.f32 %v545, %v491
      %549 = vrot.lane.b32.xlu0 %v546, 32
      %v550 = vpop.permute.xlu0 %549
      %v552 = vmul.f32 %v545, %v550
      %554 = vrot.lane.b32.xlu0 %v552, 32
      %v555 = vpop.permute.xlu0 %554
      %v557 = vadd.f32 %v547, %v555
      %v558 = vtanh.pop %v557
      %560 = vrot.lane.b32.xlu0 %v558, 32
      %v561 = vpop.permute.xlu0 %560
      %v563 = vmul.f32 %v545, %v561
      %v564 = vpack.c.bf16 %v563, %v563
      %566 = vrot.lane.b32.xlu0 %v564, 64
      %v567 = vpop.permute.xlu0 %566
      %v569 = vsel %vm437, %v567, 0
      %571 = vmatprep.subr.bf16.mxu0 0
      %572 = vmatpush1.bf16.msra.mxu0 %v433
      %573 = vmatprep.subr.bf16.mxu0 0
      %574 = vmatpush1.bf16.msra.mxu0 %v434
      %575 = vmatprep.subr.bf16.mxu0 0
      %576 = vmatpush1.bf16.msra.mxu0 0
      %577 = vmatprep.subr.bf16.mxu0 0
      %578 = vmatpush1.bf16.msra.mxu0 0
      %579 = vmatprep.subr.bf16.mxu0 0
      %580 = vmatpush1.bf16.msra.mxu0 0
      %581 = vmatprep.subr.bf16.mxu0 0
      %582 = vmatpush1.bf16.msra.mxu0 0
      %583 = vmatprep.subr.bf16.mxu0 0
      %584 = vmatpush1.bf16.msra.mxu0 0
      %585 = vmatprep.subr.bf16.mxu0 0
      %586 = vmatpush1.bf16.msra.mxu0 0
      %587 = vmatprep.subr.bf16.mxu0 0
      %588 = vmatpush1.bf16.msra.mxu0 0
      %589 = vmatprep.subr.bf16.mxu0 0
      %590 = vmatpush1.bf16.msra.mxu0 0
      %591 = vmatprep.subr.bf16.mxu0 0
      %592 = vmatpush1.bf16.msra.mxu0 0
      %593 = vmatprep.subr.bf16.mxu0 0
      %594 = vmatpush1.bf16.msra.mxu0 0
      %595 = vmatprep.subr.bf16.mxu0 0
      %596 = vmatpush1.bf16.msra.mxu0 0
      %597 = vmatprep.subr.bf16.mxu0 0
      %598 = vmatpush1.bf16.msra.mxu0 0
      %599 = vmatprep.subr.bf16.mxu0 0
      %600 = vmatpush1.bf16.msra.mxu0 0
      %601 = vmatprep.subr.bf16.mxu0 0
      %602 = vmatpush1.bf16.msra.mxu0 0
      %603 = vmatprep.mubr.bf16.mxu0 0
      %604 = vmatmul.mubr.bf16.gmra.mrb[0].mxu0 %v569
      %v605 = vpop.f32.mrb[0].mxu0
      %v606 = vadd.f32 0.0, %v605
      %v607 = vpop.f32.mrb[0].mxu0
      %v608 = vpop.f32.mrb[0].mxu0
      %v609 = vpop.f32.mrb[0].mxu0
      %610 = vdwg.mxu0
      %s611 = sadd.s32 %s336, 1
      %v612 = vstv %s611
      %vm613 = vcmp.lt.s32.totalorder %v612, %v335
      %v614 = vsel %vm613, 1, 0
      %615 = vset.pattern.permute.xlu0 0
      %616 = vperm.xlu0 %615, %v614
      %v617 = vpop.permute.xlu0 %616
      %vm618 = vcmp.eq.s32.totalorder %v617, 1
      %v619 = vsel %vm618, %v606, 0.0
      %s620 = scalar_lea.vmem %s318, 8
      %621 = vst.msk [vmem:[%s620] sm:$0xff] %vm348, %v619
      %v622 = vsel %vm618, %v606, %v490
      %v623 = vsel %vm618, %v557, %v491
      %s624 = scalar_lea.vmem %s291, 8
      %v625 = vld [vmem:[%s624] sm:$0xf]
      %v626 = vunpack.c.l.bf16 %v625
      %v627 = vpack.c.bf16 %v622, %v622
      %v629 = vsel %vm348, %v627, 0
      %631 = vmatprep.subr.bf16.mxu0 0
      %632 = vmatpush1.bf16.msra.mxu0 %v346
      %633 = vmatprep.subr.bf16.mxu0 0
      %634 = vmatpush1.bf16.msra.mxu0 0
      %635 = vmatprep.subr.bf16.mxu0 0
      %636 = vmatpush1.bf16.msra.mxu0 0
      %637 = vmatprep.subr.bf16.mxu0 0
      %638 = vmatpush1.bf16.msra.mxu0 0
      %639 = vmatprep.subr.bf16.mxu0 0
      %640 = vmatpush1.bf16.msra.mxu0 0
      %641 = vmatprep.subr.bf16.mxu0 0
      %642 = vmatpush1.bf16.msra.mxu0 0
      %643 = vmatprep.subr.bf16.mxu0 0
      %644 = vmatpush1.bf16.msra.mxu0 0
      %645 = vmatprep.subr.bf16.mxu0 0
      %646 = vmatpush1.bf16.msra.mxu0 0
      %647 = vmatprep.subr.bf16.mxu0 0
      %648 = vmatpush1.bf16.msra.mxu0 0
      %649 = vmatprep.subr.bf16.mxu0 0
      %650 = vmatpush1.bf16.msra.mxu0 0
      %651 = vmatprep.subr.bf16.mxu0 0
      %652 = vmatpush1.bf16.msra.mxu0 0
      %653 = vmatprep.subr.bf16.mxu0 0
      %654 = vmatpush1.bf16.msra.mxu0 0
      %655 = vmatprep.subr.bf16.mxu0 0
      %656 = vmatpush1.bf16.msra.mxu0 0
      %657 = vmatprep.subr.bf16.mxu0 0
      %658 = vmatpush1.bf16.msra.mxu0 0
      %659 = vmatprep.subr.bf16.mxu0 0
      %660 = vmatpush1.bf16.msra.mxu0 0
      %661 = vmatprep.subr.bf16.mxu0 0
      %662 = vmatpush1.bf16.msra.mxu0 0
      %663 = vmatprep.mubr.bf16.mxu0 0
      %664 = vmatmul.mubr.bf16.gmra.mrb[0].mxu0 %v629
      %v665 = vpop.f32.mrb[0].mxu0
      %v666 = vadd.f32 0.0, %v665
      %v667 = vpop.f32.mrb[0].mxu0
      %v668 = vpop.f32.mrb[0].mxu0
      %v669 = vpop.f32.mrb[0].mxu0
      %670 = vdwg.mxu0
      %v671 = vadd.f32 %v626, %v666
      %v672 = vxor.u32 %v671, 2147483648
      %v673 = vmul.f32 %v672, 1.442695
      %v674 = vpow.pop %v673
      %v675 = vadd.f32 %v674, 1.0
      %v676 = vrcp.pop %v675
      %v677 = vmul.f32 1.0, %v676
      %v678 = vtanh.pop %v671
      %v679 = vmul.f32 %v677, %v623
      %681 = vrot.lane.b32.xlu0 %v678, 32
      %v682 = vpop.permute.xlu0 %681
      %v684 = vmul.f32 %v677, %v682
      %686 = vrot.lane.b32.xlu0 %v684, 32
      %v687 = vpop.permute.xlu0 %686
      %v689 = vadd.f32 %v679, %v687
      %v690 = vtanh.pop %v689
      %692 = vrot.lane.b32.xlu0 %v690, 32
      %v693 = vpop.permute.xlu0 %692
      %v695 = vmul.f32 %v677, %v693
      %v696 = vpack.c.bf16 %v695, %v695
      %698 = vrot.lane.b32.xlu0 %v696, 64
      %v699 = vpop.permute.xlu0 %698
      %v701 = vsel %vm437, %v699, 0
      %703 = vmatprep.subr.bf16.mxu0 0
      %704 = vmatpush1.bf16.msra.mxu0 %v433
      %705 = vmatprep.subr.bf16.mxu0 0
      %706 = vmatpush1.bf16.msra.mxu0 %v434
      %707 = vmatprep.subr.bf16.mxu0 0
      %708 = vmatpush1.bf16.msra.mxu0 0
      %709 = vmatprep.subr.bf16.mxu0 0
      %710 = vmatpush1.bf16.msra.mxu0 0
      %711 = vmatprep.subr.bf16.mxu0 0
      %712 = vmatpush1.bf16.msra.mxu0 0
      %713 = vmatprep.subr.bf16.mxu0 0
      %714 = vmatpush1.bf16.msra.mxu0 0
      %715 = vmatprep.subr.bf16.mxu0 0
      %716 = vmatpush1.bf16.msra.mxu0 0
      %717 = vmatprep.subr.bf16.mxu0 0
      %718 = vmatpush1.bf16.msra.mxu0 0
      %719 = vmatprep.subr.bf16.mxu0 0
      %720 = vmatpush1.bf16.msra.mxu0 0
      %721 = vmatprep.subr.bf16.mxu0 0
      %722 = vmatpush1.bf16.msra.mxu0 0
      %723 = vmatprep.subr.bf16.mxu0 0
      %724 = vmatpush1.bf16.msra.mxu0 0
      %725 = vmatprep.subr.bf16.mxu0 0
      %726 = vmatpush1.bf16.msra.mxu0 0
      %727 = vmatprep.subr.bf16.mxu0 0
      %728 = vmatpush1.bf16.msra.mxu0 0
      %729 = vmatprep.subr.bf16.mxu0 0
      %730 = vmatpush1.bf16.msra.mxu0 0
      %731 = vmatprep.subr.bf16.mxu0 0
      %732 = vmatpush1.bf16.msra.mxu0 0
      %733 = vmatprep.subr.bf16.mxu0 0
      %734 = vmatpush1.bf16.msra.mxu0 0
      %735 = vmatprep.mubr.bf16.mxu0 0
      %736 = vmatmul.mubr.bf16.gmra.mrb[0].mxu0 %v701
      %v737 = vpop.f32.mrb[0].mxu0
      %v738 = vadd.f32 0.0, %v737
      %v739 = vpop.f32.mrb[0].mxu0
      %v740 = vpop.f32.mrb[0].mxu0
      %v741 = vpop.f32.mrb[0].mxu0
      %742 = vdwg.mxu0
      %s743 = sadd.s32 %s336, 2
      %v744 = vstv %s743
      %vm745 = vcmp.lt.s32.totalorder %v744, %v335
      %v746 = vsel %vm745, 1, 0
      %747 = vset.pattern.permute.xlu0 0
      %748 = vperm.xlu0 %747, %v746
      %v749 = vpop.permute.xlu0 %748
      %vm750 = vcmp.eq.s32.totalorder %v749, 1
      %v751 = vsel %vm750, %v738, 0.0
      %s752 = scalar_lea.vmem %s318, 16
      %753 = vst.msk [vmem:[%s752] sm:$0xff] %vm348, %v751
      %v754 = vsel %vm750, %v738, %v622
      %v755 = vsel %vm750, %v689, %v623
      %s756 = scalar_lea.vmem %s291, 12
      %v757 = vld [vmem:[%s756] sm:$0xf]
      %v758 = vunpack.c.l.bf16 %v757
      %v759 = vpack.c.bf16 %v754, %v754
      %v761 = vsel %vm348, %v759, 0
      %763 = vmatprep.subr.bf16.mxu0 0
      %764 = vmatpush1.bf16.msra.mxu0 %v346
      %765 = vmatprep.subr.bf16.mxu0 0
      %766 = vmatpush1.bf16.msra.mxu0 0
      %767 = vmatprep.subr.bf16.mxu0 0
      %768 = vmatpush1.bf16.msra.mxu0 0
      %769 = vmatprep.subr.bf16.mxu0 0
      %770 = vmatpush1.bf16.msra.mxu0 0
      %771 = vmatprep.subr.bf16.mxu0 0
      %772 = vmatpush1.bf16.msra.mxu0 0
      %773 = vmatprep.subr.bf16.mxu0 0
      %774 = vmatpush1.bf16.msra.mxu0 0
      %775 = vmatprep.subr.bf16.mxu0 0
      %776 = vmatpush1.bf16.msra.mxu0 0
      %777 = vmatprep.subr.bf16.mxu0 0
      %778 = vmatpush1.bf16.msra.mxu0 0
      %779 = vmatprep.subr.bf16.mxu0 0
      %780 = vmatpush1.bf16.msra.mxu0 0
      %781 = vmatprep.subr.bf16.mxu0 0
      %782 = vmatpush1.bf16.msra.mxu0 0
      %783 = vmatprep.subr.bf16.mxu0 0
      %784 = vmatpush1.bf16.msra.mxu0 0
      %785 = vmatprep.subr.bf16.mxu0 0
      %786 = vmatpush1.bf16.msra.mxu0 0
      %787 = vmatprep.subr.bf16.mxu0 0
      %788 = vmatpush1.bf16.msra.mxu0 0
      %789 = vmatprep.subr.bf16.mxu0 0
      %790 = vmatpush1.bf16.msra.mxu0 0
      %791 = vmatprep.subr.bf16.mxu0 0
      %792 = vmatpush1.bf16.msra.mxu0 0
      %793 = vmatprep.subr.bf16.mxu0 0
      %794 = vmatpush1.bf16.msra.mxu0 0
      %795 = vmatprep.mubr.bf16.mxu0 0
      %796 = vmatmul.mubr.bf16.gmra.mrb[0].mxu0 %v761
      %v797 = vpop.f32.mrb[0].mxu0
      %v798 = vadd.f32 0.0, %v797
      %v799 = vpop.f32.mrb[0].mxu0
      %v800 = vpop.f32.mrb[0].mxu0
      %v801 = vpop.f32.mrb[0].mxu0
      %802 = vdwg.mxu0
      %v803 = vadd.f32 %v758, %v798
      %v804 = vxor.u32 %v803, 2147483648
      %v805 = vmul.f32 %v804, 1.442695
      %v806 = vpow.pop %v805
      %v807 = vadd.f32 %v806, 1.0
      %v808 = vrcp.pop %v807
      %v809 = vmul.f32 1.0, %v808
      %v810 = vtanh.pop %v803
      %v811 = vmul.f32 %v809, %v755
      %813 = vrot.lane.b32.xlu0 %v810, 32
      %v814 = vpop.permute.xlu0 %813
      %v816 = vmul.f32 %v809, %v814
      %818 = vrot.lane.b32.xlu0 %v816, 32
      %v819 = vpop.permute.xlu0 %818
      %v821 = vadd.f32 %v811, %v819
      %v822 = vtanh.pop %v821
      %824 = vrot.lane.b32.xlu0 %v822, 32
      %v825 = vpop.permute.xlu0 %824
      %v827 = vmul.f32 %v809, %v825
      %v828 = vpack.c.bf16 %v827, %v827
      %830 = vrot.lane.b32.xlu0 %v828, 64
      %v831 = vpop.permute.xlu0 %830
      %v833 = vsel %vm437, %v831, 0
      %835 = vmatprep.subr.bf16.mxu0 0
      %836 = vmatpush1.bf16.msra.mxu0 %v433
      %837 = vmatprep.subr.bf16.mxu0 0
      %838 = vmatpush1.bf16.msra.mxu0 %v434
      %839 = vmatprep.subr.bf16.mxu0 0
      %840 = vmatpush1.bf16.msra.mxu0 0
      %841 = vmatprep.subr.bf16.mxu0 0
      %842 = vmatpush1.bf16.msra.mxu0 0
      %843 = vmatprep.subr.bf16.mxu0 0
      %844 = vmatpush1.bf16.msra.mxu0 0
      %845 = vmatprep.subr.bf16.mxu0 0
      %846 = vmatpush1.bf16.msra.mxu0 0
      %847 = vmatprep.subr.bf16.mxu0 0
      %848 = vmatpush1.bf16.msra.mxu0 0
      %849 = vmatprep.subr.bf16.mxu0 0
      %850 = vmatpush1.bf16.msra.mxu0 0
      %851 = vmatprep.subr.bf16.mxu0 0
      %852 = vmatpush1.bf16.msra.mxu0 0
      %853 = vmatprep.subr.bf16.mxu0 0
      %854 = vmatpush1.bf16.msra.mxu0 0
      %855 = vmatprep.subr.bf16.mxu0 0
      %856 = vmatpush1.bf16.msra.mxu0 0
      %857 = vmatprep.subr.bf16.mxu0 0
      %858 = vmatpush1.bf16.msra.mxu0 0
      %859 = vmatprep.subr.bf16.mxu0 0
      %860 = vmatpush1.bf16.msra.mxu0 0
      %861 = vmatprep.subr.bf16.mxu0 0
      %862 = vmatpush1.bf16.msra.mxu0 0
      %863 = vmatprep.subr.bf16.mxu0 0
      %864 = vmatpush1.bf16.msra.mxu0 0
      %865 = vmatprep.subr.bf16.mxu0 0
      %866 = vmatpush1.bf16.msra.mxu0 0
      %867 = vmatprep.mubr.bf16.mxu0 0
      %868 = vmatmul.mubr.bf16.gmra.mrb[0].mxu0 %v833
      %v869 = vpop.f32.mrb[0].mxu0
      %v870 = vadd.f32 0.0, %v869
      %v871 = vpop.f32.mrb[0].mxu0
      %v872 = vpop.f32.mrb[0].mxu0
      %v873 = vpop.f32.mrb[0].mxu0
      %874 = vdwg.mxu0
      %s875 = sadd.s32 %s336, 3
      %v876 = vstv %s875
      %vm877 = vcmp.lt.s32.totalorder %v876, %v335
      %v878 = vsel %vm877, 1, 0
      %879 = vset.pattern.permute.xlu0 0
      %880 = vperm.xlu0 %879, %v878
      %v881 = vpop.permute.xlu0 %880
      %vm882 = vcmp.eq.s32.totalorder %v881, 1
      %v883 = vsel %vm882, %v870, 0.0
      %s884 = scalar_lea.vmem %s318, 24
      %885 = vst.msk [vmem:[%s884] sm:$0xff] %vm348, %v883
      %v886 = vsel %vm882, %v870, %v754
      %v887 = vsel %vm882, %v821, %v755
      %s888 = scalar_lea.vmem %s291, 16
      %v889 = vld [vmem:[%s888] sm:$0xf]
      %v890 = vunpack.c.l.bf16 %v889
      %v891 = vpack.c.bf16 %v886, %v886
      %v893 = vsel %vm348, %v891, 0
      %895 = vmatprep.subr.bf16.mxu0 0
      %896 = vmatpush1.bf16.msra.mxu0 %v346
      %897 = vmatprep.subr.bf16.mxu0 0
      %898 = vmatpush1.bf16.msra.mxu0 0
      %899 = vmatprep.subr.bf16.mxu0 0
      %900 = vmatpush1.bf16.msra.mxu0 0
      %901 = vmatprep.subr.bf16.mxu0 0
      %902 = vmatpush1.bf16.msra.mxu0 0
      %903 = vmatprep.subr.bf16.mxu0 0
      %904 = vmatpush1.bf16.msra.mxu0 0
      %905 = vmatprep.subr.bf16.mxu0 0
      %906 = vmatpush1.bf16.msra.mxu0 0
      %907 = vmatprep.subr.bf16.mxu0 0
      %908 = vmatpush1.bf16.msra.mxu0 0
      %909 = vmatprep.subr.bf16.mxu0 0
      %910 = vmatpush1.bf16.msra.mxu0 0
      %911 = vmatprep.subr.bf16.mxu0 0
      %912 = vmatpush1.bf16.msra.mxu0 0
      %913 = vmatprep.subr.bf16.mxu0 0
      %914 = vmatpush1.bf16.msra.mxu0 0
      %915 = vmatprep.subr.bf16.mxu0 0
      %916 = vmatpush1.bf16.msra.mxu0 0
      %917 = vmatprep.subr.bf16.mxu0 0
      %918 = vmatpush1.bf16.msra.mxu0 0
      %919 = vmatprep.subr.bf16.mxu0 0
      %920 = vmatpush1.bf16.msra.mxu0 0
      %921 = vmatprep.subr.bf16.mxu0 0
      %922 = vmatpush1.bf16.msra.mxu0 0
      %923 = vmatprep.subr.bf16.mxu0 0
      %924 = vmatpush1.bf16.msra.mxu0 0
      %925 = vmatprep.subr.bf16.mxu0 0
      %926 = vmatpush1.bf16.msra.mxu0 0
      %927 = vmatprep.mubr.bf16.mxu0 0
      %928 = vmatmul.mubr.bf16.gmra.mrb[0].mxu0 %v893
      %v929 = vpop.f32.mrb[0].mxu0
      %v930 = vadd.f32 0.0, %v929
      %v931 = vpop.f32.mrb[0].mxu0
      %v932 = vpop.f32.mrb[0].mxu0
      %v933 = vpop.f32.mrb[0].mxu0
      %934 = vdwg.mxu0
      %v935 = vadd.f32 %v890, %v930
      %v936 = vxor.u32 %v935, 2147483648
      %v937 = vmul.f32 %v936, 1.442695
      %v938 = vpow.pop %v937
      %v939 = vadd.f32 %v938, 1.0
      %v940 = vrcp.pop %v939
      %v941 = vmul.f32 1.0, %v940
      %v942 = vtanh.pop %v935
      %v943 = vmul.f32 %v941, %v887
      %945 = vrot.lane.b32.xlu0 %v942, 32
      %v946 = vpop.permute.xlu0 %945
      %v948 = vmul.f32 %v941, %v946
      %950 = vrot.lane.b32.xlu0 %v948, 32
      %v951 = vpop.permute.xlu0 %950
      %v953 = vadd.f32 %v943, %v951
      %v954 = vtanh.pop %v953
      %956 = vrot.lane.b32.xlu0 %v954, 32
      %v957 = vpop.permute.xlu0 %956
      %v959 = vmul.f32 %v941, %v957
      %v960 = vpack.c.bf16 %v959, %v959
      %962 = vrot.lane.b32.xlu0 %v960, 64
      %v963 = vpop.permute.xlu0 %962
      %v965 = vsel %vm437, %v963, 0
      %967 = vmatprep.subr.bf16.mxu0 0
      %968 = vmatpush1.bf16.msra.mxu0 %v433
      %969 = vmatprep.subr.bf16.mxu0 0
      %970 = vmatpush1.bf16.msra.mxu0 %v434
      %971 = vmatprep.subr.bf16.mxu0 0
      %972 = vmatpush1.bf16.msra.mxu0 0
      %973 = vmatprep.subr.bf16.mxu0 0
      %974 = vmatpush1.bf16.msra.mxu0 0
      %975 = vmatprep.subr.bf16.mxu0 0
      %976 = vmatpush1.bf16.msra.mxu0 0
      %977 = vmatprep.subr.bf16.mxu0 0
      %978 = vmatpush1.bf16.msra.mxu0 0
      %979 = vmatprep.subr.bf16.mxu0 0
      %980 = vmatpush1.bf16.msra.mxu0 0
      %981 = vmatprep.subr.bf16.mxu0 0
      %982 = vmatpush1.bf16.msra.mxu0 0
      %983 = vmatprep.subr.bf16.mxu0 0
      %984 = vmatpush1.bf16.msra.mxu0 0
      %985 = vmatprep.subr.bf16.mxu0 0
      %986 = vmatpush1.bf16.msra.mxu0 0
      %987 = vmatprep.subr.bf16.mxu0 0
      %988 = vmatpush1.bf16.msra.mxu0 0
      %989 = vmatprep.subr.bf16.mxu0 0
      %990 = vmatpush1.bf16.msra.mxu0 0
      %991 = vmatprep.subr.bf16.mxu0 0
      %992 = vmatpush1.bf16.msra.mxu0 0
      %993 = vmatprep.subr.bf16.mxu0 0
      %994 = vmatpush1.bf16.msra.mxu0 0
      %995 = vmatprep.subr.bf16.mxu0 0
      %996 = vmatpush1.bf16.msra.mxu0 0
      %997 = vmatprep.subr.bf16.mxu0 0
      %998 = vmatpush1.bf16.msra.mxu0 0
      %999 = vmatprep.mubr.bf16.mxu0 0
      %1000 = vmatmul.mubr.bf16.gmra.mrb[0].mxu0 %v965
      %v1001 = vpop.f32.mrb[0].mxu0
      %v1002 = vadd.f32 0.0, %v1001
      %v1003 = vpop.f32.mrb[0].mxu0
      %v1004 = vpop.f32.mrb[0].mxu0
      %v1005 = vpop.f32.mrb[0].mxu0
      %1006 = vdwg.mxu0
      %s1007 = sadd.s32 %s336, 4
      %v1008 = vstv %s1007
      %vm1009 = vcmp.lt.s32.totalorder %v1008, %v335
      %v1010 = vsel %vm1009, 1, 0
      %1011 = vset.pattern.permute.xlu0 0
      %1012 = vperm.xlu0 %1011, %v1010
      %v1013 = vpop.permute.xlu0 %1012
      %vm1014 = vcmp.eq.s32.totalorder %v1013, 1
      %v1015 = vsel %vm1014, %v1002, 0.0
      %s1016 = scalar_lea.vmem %s318, 32
      %1017 = vst.msk [vmem:[%s1016] sm:$0xff] %vm348, %v1015
      %v1018 = vsel %vm1014, %v1002, %v886
      %v1019 = vsel %vm1014, %v953, %v887
      %s1020 = scalar_lea.vmem %s291, 20
      %v1021 = vld [vmem:[%s1020] sm:$0xf]
      %v1022 = vunpack.c.l.bf16 %v1021
      %v1023 = vpack.c.bf16 %v1018, %v1018
      %v1025 = vsel %vm348, %v1023, 0
      %1027 = vmatprep.subr.bf16.mxu0 0
      %1028 = vmatpush1.bf16.msra.mxu0 %v346
      %1029 = vmatprep.subr.bf16.mxu0 0
      %1030 = vmatpush1.bf16.msra.mxu0 0
      %1031 = vmatprep.subr.bf16.mxu0 0
      %1032 = vmatpush1.bf16.msra.mxu0 0
      %1033 = vmatprep.subr.bf16.mxu0 0
      %1034 = vmatpush1.bf16.msra.mxu0 0
      %1035 = vmatprep.subr.bf16.mxu0 0
      %1036 = vmatpush1.bf16.msra.mxu0 0
      %1037 = vmatprep.subr.bf16.mxu0 0
      %1038 = vmatpush1.bf16.msra.mxu0 0
      %1039 = vmatprep.subr.bf16.mxu0 0
      %1040 = vmatpush1.bf16.msra.mxu0 0
      %1041 = vmatprep.subr.bf16.mxu0 0
      %1042 = vmatpush1.bf16.msra.mxu0 0
      %1043 = vmatprep.subr.bf16.mxu0 0
      %1044 = vmatpush1.bf16.msra.mxu0 0
      %1045 = vmatprep.subr.bf16.mxu0 0
      %1046 = vmatpush1.bf16.msra.mxu0 0
      %1047 = vmatprep.subr.bf16.mxu0 0
      %1048 = vmatpush1.bf16.msra.mxu0 0
      %1049 = vmatprep.subr.bf16.mxu0 0
      %1050 = vmatpush1.bf16.msra.mxu0 0
      %1051 = vmatprep.subr.bf16.mxu0 0
      %1052 = vmatpush1.bf16.msra.mxu0 0
      %1053 = vmatprep.subr.bf16.mxu0 0
      %1054 = vmatpush1.bf16.msra.mxu0 0
      %1055 = vmatprep.subr.bf16.mxu0 0
      %1056 = vmatpush1.bf16.msra.mxu0 0
      %1057 = vmatprep.subr.bf16.mxu0 0
      %1058 = vmatpush1.bf16.msra.mxu0 0
      %1059 = vmatprep.mubr.bf16.mxu0 0
      %1060 = vmatmul.mubr.bf16.gmra.mrb[0].mxu0 %v1025
      %v1061 = vpop.f32.mrb[0].mxu0
      %v1062 = vadd.f32 0.0, %v1061
      %v1063 = vpop.f32.mrb[0].mxu0
      %v1064 = vpop.f32.mrb[0].mxu0
      %v1065 = vpop.f32.mrb[0].mxu0
      %1066 = vdwg.mxu0
      %v1067 = vadd.f32 %v1022, %v1062
      %v1068 = vxor.u32 %v1067, 2147483648
      %v1069 = vmul.f32 %v1068, 1.442695
      %v1070 = vpow.pop %v1069
      %v1071 = vadd.f32 %v1070, 1.0
      %v1072 = vrcp.pop %v1071
      %v1073 = vmul.f32 1.0, %v1072
      %v1074 = vtanh.pop %v1067
      %v1075 = vmul.f32 %v1073, %v1019
      %1077 = vrot.lane.b32.xlu0 %v1074, 32
      %v1078 = vpop.permute.xlu0 %1077
      %v1080 = vmul.f32 %v1073, %v1078
      %1082 = vrot.lane.b32.xlu0 %v1080, 32
      %v1083 = vpop.permute.xlu0 %1082
      %v1085 = vadd.f32 %v1075, %v1083
      %v1086 = vtanh.pop %v1085
      %1088 = vrot.lane.b32.xlu0 %v1086, 32
      %v1089 = vpop.permute.xlu0 %1088
      %v1091 = vmul.f32 %v1073, %v1089
      %v1092 = vpack.c.bf16 %v1091, %v1091
      %1094 = vrot.lane.b32.xlu0 %v1092, 64
      %v1095 = vpop.permute.xlu0 %1094
      %v1097 = vsel %vm437, %v1095, 0
      %1099 = vmatprep.subr.bf16.mxu0 0
      %1100 = vmatpush1.bf16.msra.mxu0 %v433
      %1101 = vmatprep.subr.bf16.mxu0 0
      %1102 = vmatpush1.bf16.msra.mxu0 %v434
      %1103 = vmatprep.subr.bf16.mxu0 0
      %1104 = vmatpush1.bf16.msra.mxu0 0
      %1105 = vmatprep.subr.bf16.mxu0 0
      %1106 = vmatpush1.bf16.msra.mxu0 0
      %1107 = vmatprep.subr.bf16.mxu0 0
      %1108 = vmatpush1.bf16.msra.mxu0 0
      %1109 = vmatprep.subr.bf16.mxu0 0
      %1110 = vmatpush1.bf16.msra.mxu0 0
      %1111 = vmatprep.subr.bf16.mxu0 0
      %1112 = vmatpush1.bf16.msra.mxu0 0
      %1113 = vmatprep.subr.bf16.mxu0 0
      %1114 = vmatpush1.bf16.msra.mxu0 0
      %1115 = vmatprep.subr.bf16.mxu0 0
      %1116 = vmatpush1.bf16.msra.mxu0 0
      %1117 = vmatprep.subr.bf16.mxu0 0
      %1118 = vmatpush1.bf16.msra.mxu0 0
      %1119 = vmatprep.subr.bf16.mxu0 0
      %1120 = vmatpush1.bf16.msra.mxu0 0
      %1121 = vmatprep.subr.bf16.mxu0 0
      %1122 = vmatpush1.bf16.msra.mxu0 0
      %1123 = vmatprep.subr.bf16.mxu0 0
      %1124 = vmatpush1.bf16.msra.mxu0 0
      %1125 = vmatprep.subr.bf16.mxu0 0
      %1126 = vmatpush1.bf16.msra.mxu0 0
      %1127 = vmatprep.subr.bf16.mxu0 0
      %1128 = vmatpush1.bf16.msra.mxu0 0
      %1129 = vmatprep.subr.bf16.mxu0 0
      %1130 = vmatpush1.bf16.msra.mxu0 0
      %1131 = vmatprep.mubr.bf16.mxu0 0
      %1132 = vmatmul.mubr.bf16.gmra.mrb[0].mxu0 %v1097
      %v1133 = vpop.f32.mrb[0].mxu0
      %v1134 = vadd.f32 0.0, %v1133
      %v1135 = vpop.f32.mrb[0].mxu0
      %v1136 = vpop.f32.mrb[0].mxu0
      %v1137 = vpop.f32.mrb[0].mxu0
      %1138 = vdwg.mxu0
      %s1139 = sadd.s32 %s336, 5
      %v1140 = vstv %s1139
      %vm1141 = vcmp.lt.s32.totalorder %v1140, %v335
      %v1142 = vsel %vm1141, 1, 0
      %1143 = vset.pattern.permute.xlu0 0
      %1144 = vperm.xlu0 %1143, %v1142
      %v1145 = vpop.permute.xlu0 %1144
      %vm1146 = vcmp.eq.s32.totalorder %v1145, 1
      %v1147 = vsel %vm1146, %v1134, 0.0
      %s1148 = scalar_lea.vmem %s318, 40
      %1149 = vst.msk [vmem:[%s1148] sm:$0xff] %vm348, %v1147
      %v1150 = vsel %vm1146, %v1134, %v1018
      %v1151 = vsel %vm1146, %v1085, %v1019
      %s1152 = scalar_lea.vmem %s291, 24
      %v1153 = vld [vmem:[%s1152] sm:$0xf]
      %v1154 = vunpack.c.l.bf16 %v1153
      %v1155 = vpack.c.bf16 %v1150, %v1150
      %v1157 = vsel %vm348, %v1155, 0
      %1159 = vmatprep.subr.bf16.mxu0 0
      %1160 = vmatpush1.bf16.msra.mxu0 %v346
      %1161 = vmatprep.subr.bf16.mxu0 0
      %1162 = vmatpush1.bf16.msra.mxu0 0
      %1163 = vmatprep.subr.bf16.mxu0 0
      %1164 = vmatpush1.bf16.msra.mxu0 0
      %1165 = vmatprep.subr.bf16.mxu0 0
      %1166 = vmatpush1.bf16.msra.mxu0 0
      %1167 = vmatprep.subr.bf16.mxu0 0
      %1168 = vmatpush1.bf16.msra.mxu0 0
      %1169 = vmatprep.subr.bf16.mxu0 0
      %1170 = vmatpush1.bf16.msra.mxu0 0
      %1171 = vmatprep.subr.bf16.mxu0 0
      %1172 = vmatpush1.bf16.msra.mxu0 0
      %1173 = vmatprep.subr.bf16.mxu0 0
      %1174 = vmatpush1.bf16.msra.mxu0 0
      %1175 = vmatprep.subr.bf16.mxu0 0
      %1176 = vmatpush1.bf16.msra.mxu0 0
      %1177 = vmatprep.subr.bf16.mxu0 0
      %1178 = vmatpush1.bf16.msra.mxu0 0
      %1179 = vmatprep.subr.bf16.mxu0 0
      %1180 = vmatpush1.bf16.msra.mxu0 0
      %1181 = vmatprep.subr.bf16.mxu0 0
      %1182 = vmatpush1.bf16.msra.mxu0 0
      %1183 = vmatprep.subr.bf16.mxu0 0
      %1184 = vmatpush1.bf16.msra.mxu0 0
      %1185 = vmatprep.subr.bf16.mxu0 0
      %1186 = vmatpush1.bf16.msra.mxu0 0
      %1187 = vmatprep.subr.bf16.mxu0 0
      %1188 = vmatpush1.bf16.msra.mxu0 0
      %1189 = vmatprep.subr.bf16.mxu0 0
      %1190 = vmatpush1.bf16.msra.mxu0 0
      %1191 = vmatprep.mubr.bf16.mxu0 0
      %1192 = vmatmul.mubr.bf16.gmra.mrb[0].mxu0 %v1157
      %v1193 = vpop.f32.mrb[0].mxu0
      %v1194 = vadd.f32 0.0, %v1193
      %v1195 = vpop.f32.mrb[0].mxu0
      %v1196 = vpop.f32.mrb[0].mxu0
      %v1197 = vpop.f32.mrb[0].mxu0
      %1198 = vdwg.mxu0
      %v1199 = vadd.f32 %v1154, %v1194
      %v1200 = vxor.u32 %v1199, 2147483648
      %v1201 = vmul.f32 %v1200, 1.442695
      %v1202 = vpow.pop %v1201
      %v1203 = vadd.f32 %v1202, 1.0
      %v1204 = vrcp.pop %v1203
      %v1205 = vmul.f32 1.0, %v1204
      %v1206 = vtanh.pop %v1199
      %v1207 = vmul.f32 %v1205, %v1151
      %1209 = vrot.lane.b32.xlu0 %v1206, 32
      %v1210 = vpop.permute.xlu0 %1209
      %v1212 = vmul.f32 %v1205, %v1210
      %1214 = vrot.lane.b32.xlu0 %v1212, 32
      %v1215 = vpop.permute.xlu0 %1214
      %v1217 = vadd.f32 %v1207, %v1215
      %v1218 = vtanh.pop %v1217
      %1220 = vrot.lane.b32.xlu0 %v1218, 32
      %v1221 = vpop.permute.xlu0 %1220
      %v1223 = vmul.f32 %v1205, %v1221
      %v1224 = vpack.c.bf16 %v1223, %v1223
      %1226 = vrot.lane.b32.xlu0 %v1224, 64
      %v1227 = vpop.permute.xlu0 %1226
      %v1229 = vsel %vm437, %v1227, 0
      %1231 = vmatprep.subr.bf16.mxu0 0
      %1232 = vmatpush1.bf16.msra.mxu0 %v433
      %1233 = vmatprep.subr.bf16.mxu0 0
      %1234 = vmatpush1.bf16.msra.mxu0 %v434
      %1235 = vmatprep.subr.bf16.mxu0 0
      %1236 = vmatpush1.bf16.msra.mxu0 0
      %1237 = vmatprep.subr.bf16.mxu0 0
      %1238 = vmatpush1.bf16.msra.mxu0 0
      %1239 = vmatprep.subr.bf16.mxu0 0
      %1240 = vmatpush1.bf16.msra.mxu0 0
      %1241 = vmatprep.subr.bf16.mxu0 0
      %1242 = vmatpush1.bf16.msra.mxu0 0
      %1243 = vmatprep.subr.bf16.mxu0 0
      %1244 = vmatpush1.bf16.msra.mxu0 0
      %1245 = vmatprep.subr.bf16.mxu0 0
      %1246 = vmatpush1.bf16.msra.mxu0 0
      %1247 = vmatprep.subr.bf16.mxu0 0
      %1248 = vmatpush1.bf16.msra.mxu0 0
      %1249 = vmatprep.subr.bf16.mxu0 0
      %1250 = vmatpush1.bf16.msra.mxu0 0
      %1251 = vmatprep.subr.bf16.mxu0 0
      %1252 = vmatpush1.bf16.msra.mxu0 0
      %1253 = vmatprep.subr.bf16.mxu0 0
      %1254 = vmatpush1.bf16.msra.mxu0 0
      %1255 = vmatprep.subr.bf16.mxu0 0
      %1256 = vmatpush1.bf16.msra.mxu0 0
      %1257 = vmatprep.subr.bf16.mxu0 0
      %1258 = vmatpush1.bf16.msra.mxu0 0
      %1259 = vmatprep.subr.bf16.mxu0 0
      %1260 = vmatpush1.bf16.msra.mxu0 0
      %1261 = vmatprep.subr.bf16.mxu0 0
      %1262 = vmatpush1.bf16.msra.mxu0 0
      %1263 = vmatprep.mubr.bf16.mxu0 0
      %1264 = vmatmul.mubr.bf16.gmra.mrb[0].mxu0 %v1229
      %v1265 = vpop.f32.mrb[0].mxu0
      %v1266 = vadd.f32 0.0, %v1265
      %v1267 = vpop.f32.mrb[0].mxu0
      %v1268 = vpop.f32.mrb[0].mxu0
      %v1269 = vpop.f32.mrb[0].mxu0
      %1270 = vdwg.mxu0
      %s1271 = sadd.s32 %s336, 6
      %v1272 = vstv %s1271
      %vm1273 = vcmp.lt.s32.totalorder %v1272, %v335
      %v1274 = vsel %vm1273, 1, 0
      %1275 = vset.pattern.permute.xlu0 0
      %1276 = vperm.xlu0 %1275, %v1274
      %v1277 = vpop.permute.xlu0 %1276
      %vm1278 = vcmp.eq.s32.totalorder %v1277, 1
      %v1279 = vsel %vm1278, %v1266, 0.0
      %s1280 = scalar_lea.vmem %s318, 48
      %1281 = vst.msk [vmem:[%s1280] sm:$0xff] %vm348, %v1279
      %v1282 = vsel %vm1278, %v1266, %v1150
      %v1283 = vsel %vm1278, %v1217, %v1151
      %s1284 = scalar_lea.vmem %s291, 28
      %v1285 = vld [vmem:[%s1284] sm:$0xf]
      %v1286 = vunpack.c.l.bf16 %v1285
      %v1287 = vpack.c.bf16 %v1282, %v1282
      %v1289 = vsel %vm348, %v1287, 0
      %1291 = vmatprep.subr.bf16.mxu0 0
      %1292 = vmatpush1.bf16.msra.mxu0 %v346
      %1293 = vmatprep.subr.bf16.mxu0 0
      %1294 = vmatpush1.bf16.msra.mxu0 0
      %1295 = vmatprep.subr.bf16.mxu0 0
      %1296 = vmatpush1.bf16.msra.mxu0 0
      %1297 = vmatprep.subr.bf16.mxu0 0
      %1298 = vmatpush1.bf16.msra.mxu0 0
      %1299 = vmatprep.subr.bf16.mxu0 0
      %1300 = vmatpush1.bf16.msra.mxu0 0
      %1301 = vmatprep.subr.bf16.mxu0 0
      %1302 = vmatpush1.bf16.msra.mxu0 0
      %1303 = vmatprep.subr.bf16.mxu0 0
      %1304 = vmatpush1.bf16.msra.mxu0 0
      %1305 = vmatprep.subr.bf16.mxu0 0
      %1306 = vmatpush1.bf16.msra.mxu0 0
      %1307 = vmatprep.subr.bf16.mxu0 0
      %1308 = vmatpush1.bf16.msra.mxu0 0
      %1309 = vmatprep.subr.bf16.mxu0 0
      %1310 = vmatpush1.bf16.msra.mxu0 0
      %1311 = vmatprep.subr.bf16.mxu0 0
      %1312 = vmatpush1.bf16.msra.mxu0 0
      %1313 = vmatprep.subr.bf16.mxu0 0
      %1314 = vmatpush1.bf16.msra.mxu0 0
      %1315 = vmatprep.subr.bf16.mxu0 0
      %1316 = vmatpush1.bf16.msra.mxu0 0
      %1317 = vmatprep.subr.bf16.mxu0 0
      %1318 = vmatpush1.bf16.msra.mxu0 0
      %1319 = vmatprep.subr.bf16.mxu0 0
      %1320 = vmatpush1.bf16.msra.mxu0 0
      %1321 = vmatprep.subr.bf16.mxu0 0
      %1322 = vmatpush1.bf16.msra.mxu0 0
      %1323 = vmatprep.mubr.bf16.mxu0 0
      %1324 = vmatmul.mubr.bf16.gmra.mrb[0].mxu0 %v1289
      %v1325 = vpop.f32.mrb[0].mxu0
      %v1326 = vadd.f32 0.0, %v1325
      %v1327 = vpop.f32.mrb[0].mxu0
      %v1328 = vpop.f32.mrb[0].mxu0
      %v1329 = vpop.f32.mrb[0].mxu0
      %1330 = vdwg.mxu0
      %v1331 = vadd.f32 %v1286, %v1326
      %v1332 = vxor.u32 %v1331, 2147483648
      %v1333 = vmul.f32 %v1332, 1.442695
      %v1334 = vpow.pop %v1333
      %v1335 = vadd.f32 %v1334, 1.0
      %v1336 = vrcp.pop %v1335
      %v1337 = vmul.f32 1.0, %v1336
      %v1338 = vtanh.pop %v1331
      %v1339 = vmul.f32 %v1337, %v1283
      %1341 = vrot.lane.b32.xlu0 %v1338, 32
      %v1342 = vpop.permute.xlu0 %1341
      %v1344 = vmul.f32 %v1337, %v1342
      %1346 = vrot.lane.b32.xlu0 %v1344, 32
      %v1347 = vpop.permute.xlu0 %1346
      %v1349 = vadd.f32 %v1339, %v1347
      %v1350 = vtanh.pop %v1349
      %1352 = vrot.lane.b32.xlu0 %v1350, 32
      %v1353 = vpop.permute.xlu0 %1352
      %v1355 = vmul.f32 %v1337, %v1353
      %v1356 = vpack.c.bf16 %v1355, %v1355
      %1358 = vrot.lane.b32.xlu0 %v1356, 64
      %v1359 = vpop.permute.xlu0 %1358
      %v1361 = vsel %vm437, %v1359, 0
      %1363 = vmatprep.subr.bf16.mxu0 0
      %1364 = vmatpush1.bf16.msra.mxu0 %v433
      %1365 = vmatprep.subr.bf16.mxu0 0
      %1366 = vmatpush1.bf16.msra.mxu0 %v434
      %1367 = vmatprep.subr.bf16.mxu0 0
      %1368 = vmatpush1.bf16.msra.mxu0 0
      %1369 = vmatprep.subr.bf16.mxu0 0
      %1370 = vmatpush1.bf16.msra.mxu0 0
      %1371 = vmatprep.subr.bf16.mxu0 0
      %1372 = vmatpush1.bf16.msra.mxu0 0
      %1373 = vmatprep.subr.bf16.mxu0 0
      %1374 = vmatpush1.bf16.msra.mxu0 0
      %1375 = vmatprep.subr.bf16.mxu0 0
      %1376 = vmatpush1.bf16.msra.mxu0 0
      %1377 = vmatprep.subr.bf16.mxu0 0
      %1378 = vmatpush1.bf16.msra.mxu0 0
      %1379 = vmatprep.subr.bf16.mxu0 0
      %1380 = vmatpush1.bf16.msra.mxu0 0
      %1381 = vmatprep.subr.bf16.mxu0 0
      %1382 = vmatpush1.bf16.msra.mxu0 0
      %1383 = vmatprep.subr.bf16.mxu0 0
      %1384 = vmatpush1.bf16.msra.mxu0 0
      %1385 = vmatprep.subr.bf16.mxu0 0
      %1386 = vmatpush1.bf16.msra.mxu0 0
      %1387 = vmatprep.subr.bf16.mxu0 0
      %1388 = vmatpush1.bf16.msra.mxu0 0
      %1389 = vmatprep.subr.bf16.mxu0 0
      %1390 = vmatpush1.bf16.msra.mxu0 0
      %1391 = vmatprep.subr.bf16.mxu0 0
      %1392 = vmatpush1.bf16.msra.mxu0 0
      %1393 = vmatprep.subr.bf16.mxu0 0
      %1394 = vmatpush1.bf16.msra.mxu0 0
      %1395 = vmatprep.mubr.bf16.mxu0 0
      %1396 = vmatmul.mubr.bf16.gmra.mrb[0].mxu0 %v1361
      %v1397 = vpop.f32.mrb[0].mxu0
      %v1398 = vadd.f32 0.0, %v1397
      %v1399 = vpop.f32.mrb[0].mxu0
      %v1400 = vpop.f32.mrb[0].mxu0
      %v1401 = vpop.f32.mrb[0].mxu0
      %1402 = vdwg.mxu0
      %s1403 = sadd.s32 %s336, 7
      %v1404 = vstv %s1403
      %vm1405 = vcmp.lt.s32.totalorder %v1404, %v335
      %v1406 = vsel %vm1405, 1, 0
      %1407 = vset.pattern.permute.xlu0 0
      %1408 = vperm.xlu0 %1407, %v1406
      %v1409 = vpop.permute.xlu0 %1408
      %vm1410 = vcmp.eq.s32.totalorder %v1409, 1
      %v1411 = vsel %vm1410, %v1398, 0.0
      %s1412 = scalar_lea.vmem %s318, 56
      %1413 = vst.msk [vmem:[%s1412] sm:$0xff] %vm348, %v1411
      %v1414 = vsel %vm1410, %v1398, %v1282
      %v1415 = vsel %vm1410, %v1349, %v1283
      %1416 = vst.msk [vmem:[#allocation2] sm:$0xff] %vm348, %v1414
      %1418 = vrot.lane.b32.xlu0 %v1415, 96
      %v1419 = vpop.permute.xlu0 %1418
      %1421 = vst.msk [vmem:[#allocation3] sm:$0xff] %vm437, %v1419
      %s1422 = smul.u32 8, %s22
      %p1423 = scmp.lt.s32.totalorder %s20, 1
      %s1424 = scalar_select %p1423, %s20, 1
      %p1425 = scmp.lt.s32.totalorder %s1422, 7
      %s1426 = scalar_select %p1425, %s1422, 7
      %p1427 = scmp.lt.s32.totalorder %s21, 0
      %s1428 = scalar_select %p1427, %s21, 0
      %s1429 = sadd.s32 %s1428, %s1426
      %s1430 = smul.addr %s1424, 8
      %s1431 = sadd.s32 %s1429, %s1430
      %s1432 = smul.addr %s1431, 8
      %s1433 = scalar_lea.vmem %s4, %s1432
      // Predicated region
      $region41: #{rnn_model_p_forward.3} parent=35 // pred_check
        %p1434 = pneg %p164
      $region42: #{rnn_model_p_forward.3} parent=35 // pred_check_branch
        %1436 = sbr.rel (%p1434) target = $region44
      $region43: #{rnn_model_p_forward.3} parent=35 // pred_region
        %s1437 = smul.u32 8, %s22
      $region44: #{rnn_model_p_forward.3} parent=35 // pred_fallthru
        _
    $region36: #{rnn_model_p_forward.3} parent=5 // pred_fallthru
      _
    %p1438 = scmp.le.s32.totalorder 2, %s10
    // Predicated region
    $region45: #{rnn_model_p_forward.3} parent=5 // pred_check
      %p1439 = pneg %p1438
    $region46: #{rnn_model_p_forward.3} parent=5 // pred_check_branch
      %1441 = sbr.rel (%p1439) target = $region48
    $region47: #{rnn_model_p_forward.3} parent=5 // pred_region
      %s1442 = ssub.s32 %s10, 2
      // Predicated region
      $region49: #{rnn_model_p_forward.3} parent=47 // pred_check
        %p1443 = pneg %p170
      $region50: #{rnn_model_p_forward.3} parent=47 // pred_check_branch
        %1445 = sbr.rel (%p1443) target = $region52
      $region51: #{rnn_model_p_forward.3} parent=47 // pred_region
        %s1446 = smul.u32 8, %s25
        %p1447 = scmp.lt.s32.totalorder %s23, 1
        %s1448 = scalar_select %p1447, %s23, 1
        %p1449 = scmp.lt.s32.totalorder %s1446, 7
        %s1450 = scalar_select %p1449, %s1446, 7
        %p1451 = scmp.lt.s32.totalorder %s24, 0
        %s1452 = scalar_select %p1451, %s24, 0
        %s1453 = sadd.s32 %s1452, %s1450
        %s1454 = smul.addr %s1448, 8
        %s1455 = sadd.s32 %s1453, %s1454
        %s1456 = smul.addr %s1455, 8
        %s1457 = scalar_lea.vmem %s4, %s1456
      $region52: #{rnn_model_p_forward.3} parent=47 // pred_fallthru
        _
    $region48: #{rnn_model_p_forward.3} parent=5 // pred_fallthru
      _
  $region6: #{rnn_model_p_forward.3} parent=0 // loop_footer
    %s14 = sadd.s32 1, %s10
  $region7: #{rnn_model_p_forward.3} parent=0 // loop_footer_branch
    %9 = sbr.rel target = $region3
  $region8: #{rnn_model_p_forward.3} parent=0 // loop_exit
    _

</llo_original>
